<compile_context>
chip_gen: v6e
topology: v6e:2x2x1
jax: 0.10.0
libtpu: 0.0.40
codegen_flags: <defaults>
</compile_context>

<pallas_src>
import functools

import jax
import jax.numpy as jnp
from jax.experimental import pallas as pl
from jax.experimental.pallas import tpu as pltpu

LANE = 128                       # channel axes padded to the TPU lane width
MATMUL_DTYPE = jnp.bfloat16      # MXU operand dtype (accumulation stays f32)
ACT_DTYPE = jnp.bfloat16         # layer activations / residual sources in HBM
TAP_GROUP_LANES = 256            # target contraction depth per conv matmul
                                 # (fills v6e/v7x's 256-deep MXU; fine on v5e)


def _round_up(n, m):
    return (n + m - 1) // m * m


# ---------------------------------------------------------------------------
# Fused Jasper-layer kernel: one whole layer for the whole batch.
# ---------------------------------------------------------------------------
def _fused_block_kernel(*refs, n_sub, k0, k_rest, dilation, padding,
                        batch, t_in, t_out, cin0, cout_pad,
                        n_prev, has_res, pre_padded):
    """refs ordering (fixed by _call_fused_kernel):
         [masks], x, w0, [w_rest], scale, shift, prev_0..prev_{n_prev-1},
         [effw, res_shift], out, [xpad scratch], [act scratch]
    """
    it = iter(refs)
    masks_ref = None if pre_padded else next(it)
    x_ref = next(it)
    w0_ref = next(it)
    wrest_ref = next(it) if n_sub > 1 else None
    scale_ref = next(it)
    shift_ref = next(it)
    prev_refs = [next(it) for _ in range(n_prev)]
    effw_ref = next(it) if has_res else None
    rshift_ref = next(it) if has_res else None
    o_ref = next(it)
    xpad_ref = None if pre_padded else next(it)
    act_ref = next(it) if n_sub > 1 else None

    rows = batch * t_out            # batch folded into the matmul M dimension

    def conv(src, w, n_taps, cin):
        # Grouped im2col: accumulate over tap groups whose contraction depth
        # is ~TAP_GROUP_LANES, keeping MXU K-fill high without materializing
        # all n_taps shifted copies (matters for real Jasper K=11..29).
        taps_per_group = max(1, TAP_GROUP_LANES // cin)
        acc = None
        for g0 in range(0, n_taps, taps_per_group):
            gk = min(taps_per_group, n_taps - g0)
            cols = [jax.lax.slice(src, (0, (g0 + k) * dilation, 0),
                                  (batch, (g0 + k) * dilation + t_out, cin))
                    for k in range(gk)]
            blk = cols[0] if gk == 1 else jnp.concatenate(cols, axis=-1)
            blk = blk.reshape(rows, gk * cin).astype(MATMUL_DTYPE)
            wg = jax.lax.slice(w, (g0 * cin, 0), ((g0 + gk) * cin, cout_pad))
            part = jnp.dot(blk, wg, preferred_element_type=jnp.float32)
            acc = part if acc is None else acc + part
        return acc

    # ---- stage sub-block 0 input: MaskConv1d + 'same' zero halo in VMEM ----
    if not pre_padded:
        if padding > 0:                       # zero only the halo rows
            zin = jnp.zeros((batch, padding, cin0), jnp.float32)
            xpad_ref[:, :padding, :] = zin
            xpad_ref[:, padding + t_in:, :] = zin
        xpad_ref[:, padding:padding + t_in, :] = (
            x_ref[...].astype(jnp.float32) * masks_ref[0])       # MaskConv1d
        if n_sub > 1 and padding > 0:
            zout = jnp.zeros((batch, padding, cout_pad), jnp.float32)
            act_ref[:, :padding, :] = zout
            act_ref[:, padding + t_out:, :] = zout

    # ---- dense residual: ONE fat matmul over lane-concatenated sources -----
    def residual_value():
        parts = []
        for j in range(n_prev):
            cj = prev_refs[j].shape[-1]
            pj = prev_refs[j][...].astype(jnp.float32) * masks_ref[1 + j]
            parts.append(pj.reshape(rows, cj).astype(MATMUL_DTYPE))
        # The block's own masked input is the last residual source; re-read it
        # from VMEM scratch at the point of use instead of keeping it live
        # across the unrolled sub-block chain.
        xm = xpad_ref[:, padding:padding + t_in, :]
        parts.append(xm.reshape(rows, cin0).astype(MATMUL_DTYPE))
        rsrc = parts[0] if len(parts) == 1 else jnp.concatenate(parts, axis=-1)
        r = jnp.dot(rsrc, effw_ref[...], preferred_element_type=jnp.float32)
        return r + rshift_ref[...]

    for s in range(n_sub):                      # static unroll over sub-blocks
        if s == 0:
            src = x_ref[...] if pre_padded else xpad_ref[...]
            acc = conv(src, w0_ref[...], k0, cin0)
        else:
            acc = conv(act_ref[...], wrest_ref[s - 1], k_rest, cout_pad)
        y = acc * scale_ref[s] + shift_ref[s]   # BatchNorm1d (eval, folded)
        if s == n_sub - 1:
            if has_res:
                y = y + residual_value()        # residual before the last ReLU
            y = jnp.maximum(y, 0.0)             # ReLU; Dropout = identity
            o_ref[...] = y.reshape(batch, t_out, cout_pad).astype(o_ref.dtype)
        else:
            y = jnp.maximum(y, 0.0).reshape(batch, t_out, cout_pad)
            # re-mask = next sub-block's MaskConv1d; activation stays in VMEM
            act_ref[:, padding:padding + t_out, :] = y * masks_ref[0]


def _call_fused_kernel(masks, x, w0, w_rest, scale, shift, prev_list,
                       effw, res_shift, *, k0, k_rest, dilation, padding,
                       t_out, pre_padded):
    B, t_in, cin0 = x.shape
    n_sub = scale.shape[0]
    cout_pad = scale.shape[-1]
    has_res = res_shift is not None
    n_prev = len(prev_list)
    assert not (pre_padded and (has_res or n_sub > 1))

    inputs = []
    if not pre_padded:
        inputs.append(masks)
    inputs += [x, w0]
    if n_sub > 1:
        inputs.append(w_rest)
    inputs += [scale, shift]
    inputs += list(prev_list)
    if has_res:
        inputs += [effw, res_shift]

    scratch_shapes = []
    if not pre_padded:
        scratch_shapes.append(
            pltpu.VMEM((B, t_in + 2 * padding, cin0), jnp.float32))
    if n_sub > 1:
        scratch_shapes.append(
            pltpu.VMEM((B, t_out + 2 * padding, cout_pad), jnp.float32))

    kernel = functools.partial(
        _fused_block_kernel, n_sub=n_sub, k0=k0, k_rest=k_rest,
        dilation=dilation, padding=padding, batch=B, t_in=t_in, t_out=t_out,
        cin0=cin0, cout_pad=cout_pad, n_prev=n_prev, has_res=has_res,
        pre_padded=pre_padded)

    # Whole layer = one kernel invocation (no grid): batch/time are folded
    # into the matmul M dimension and everything lives whole in VMEM at these
    # shapes.  See header TODO for the production-T time-tiled variant.
    return pl.pallas_call(
        kernel,
        out_shape=jax.ShapeDtypeStruct((B, t_out, cout_pad), ACT_DTYPE),
        scratch_shapes=scratch_shapes,
        compiler_params=pltpu.CompilerParams(
            vmem_limit_bytes=48 * 1024 * 1024),   # <= v7x's 64 MiB physical
    )(*inputs)


# ---------------------------------------------------------------------------
# Layer wrappers (host-side glue around the single fused kernel).
# ---------------------------------------------------------------------------
def _time_mask(lengths, t):
    """(B, t, 1) float mask of valid frames (MaskConv1d semantics)."""
    idx = jnp.arange(t, dtype=jnp.int32)[None, :]
    return (idx < lengths[:, None]).astype(jnp.float32)[:, :, None]


def jasper_preprocess_layer(x, lengths, p):
    """Stride-s preprocess JasperSubBlock (MaskConv1d -> BN -> ReLU).

    Masking + padding are applied host-side on this tiny input, then time is
    folded by the stride into lanes so the kernel runs only stride-1 work."""
    B, T, cin_pad = x.shape
    K, s, d, pad = p["kernel_size"], p["stride"], p["dilation"], p["padding"]
    t_out = (T + 2 * pad - d * (K - 1) - 1) // s + 1
    kf = ((K - 1) * d) // s + 1
    xm = x * _time_mask(lengths, T)                              # MaskConv1d
    rows = _round_up(max(s * (t_out + kf - 1), T + pad), s)
    xp = jnp.pad(xm, ((0, 0), (pad, rows - pad - T), (0, 0)))
    xf = xp.reshape(B, rows // s, s * cin_pad)                   # fold stride->lanes
    out = _call_fused_kernel(
        None, xf, p["w0"], None, p["scale"], p["shift"], [], None, None,
        k0=kf, k_rest=kf, dilation=1, padding=0, t_out=t_out, pre_padded=True)
    out_lengths = (lengths + 2 * pad - d * (K - 1) - 1) // s + 1
    return out, out_lengths


def jasper_block_layer(x, lengths, p, prev_list, prev_lens, effw, res_shift):
    """A whole JasperBlock (all sub-blocks + dense residual) in one pallas_call."""
    B, T, _ = x.shape
    K, d, pad = p["kernel_size"], p["dilation"], p["padding"]
    n_sub = p["scale"].shape[0]
    # 'same' conv (odd K) so time length / scratch sizes are constant.
    assert 2 * pad == d * (K - 1), "fused JasperBlock assumes 'same' convolutions"
    # masks[0]: block input (also re-masks intermediate sub-block activations);
    # masks[1+j]: dense-residual source j.
    masks = jnp.stack([_time_mask(lengths, T)] +
                      [_time_mask(l, T) for l in prev_lens], axis=0)
    out = _call_fused_kernel(
        masks, x, p["w0"], p["w_rest"], p["scale"], p["shift"],
        prev_list, effw, res_shift,
        k0=K, k_rest=K, dilation=d, padding=pad, t_out=T, pre_padded=False)
    out_lengths = lengths
    for _ in range(n_sub):
        out_lengths = (out_lengths + 2 * pad - d * (K - 1) - 1) // 1 + 1
    return out, out_lengths


def _fold_dense_residual(res_mods):
    """Fold res = bn_j(res + conv1x1_j(prev_j)) (eval BN is affine) into one
    lane-stacked weight + shift so the kernel runs ONE fat residual matmul:
        res = concat_j(masked prev_j) @ concat_j(w_j * S_j) + shift,
    with S_j = prod_{m>=j} scale_m."""
    n = len(res_mods)
    shift = res_mods[0]["bn_shift"]
    for j in range(1, n):
        shift = res_mods[j]["bn_scale"] * shift + res_mods[j]["bn_shift"]
    suffixes = [None] * n
    suffix = jnp.ones_like(res_mods[0]["bn_scale"])
    for j in reversed(range(n)):
        suffix = suffix * res_mods[j]["bn_scale"]
        suffixes[j] = suffix
    effw = jnp.concatenate(
        [res_mods[j]["weight"] * suffixes[j] for j in range(n)],
        axis=0).astype(MATMUL_DTYPE)
    return effw, shift


def jasper_encoder(inputs_nct, input_lengths, params):
    """Forward pass mirroring JasperEncoder.forward (eval mode)."""
    cfg = params["config"]
    cin = cfg["preprocess_block"]["in_channels"]
    cout_last = cfg["block"]["out_channels"][-1]
    # NCT -> NTC; lane-pad channels to 128 so every store is unmasked.
    x = jnp.transpose(inputs_nct, (0, 2, 1)).astype(jnp.float32)
    x = jnp.pad(x, ((0, 0), (0, 0), (0, _round_up(cin, LANE) - cin)))
    lengths = input_lengths.astype(jnp.int32)

    x, lengths = jasper_preprocess_layer(x, lengths, params["preprocess"])

    prev = [(x, lengths)]
    for i in range(len(params["blocks"])):
        effw, res_shift = _fold_dense_residual(params["residual"][i])
        prev_list = [prev[j][0] for j in range(i)]   # sources 0..i-1 (src i is x)
        prev_lens = [prev[j][1] for j in range(i)]
        x, lengths = jasper_block_layer(prev[-1][0], prev[-1][1],
                                        params["blocks"][i],
                                        prev_list, prev_lens, effw, res_shift)
        prev.append((x, lengths))
    # frames beyond output_lengths are NOT re-zeroed (same as PyTorch)
    out = jnp.transpose(x[:, :, :cout_last].astype(jnp.float32), (0, 2, 1))
    return out, lengths


# ---------------------------------------------------------------------------
# Parameter construction (deterministic, synthetic, eval-mode BN folded).
# ---------------------------------------------------------------------------
def _bn_fold(key, c, c_pad, eps=1e-3):
    kg, kb = jax.random.split(key)
    gamma = 1.0 + 0.1 * jax.random.normal(kg, (c,), jnp.float32)
    beta = 0.1 * jax.random.normal(kb, (c,), jnp.float32)
    running_mean = jnp.zeros((c,), jnp.float32)
    running_var = jnp.ones((c,), jnp.float32)
    scale = gamma / jnp.sqrt(running_var + eps)
    shift = beta - running_mean * scale
    scale = jnp.pad(scale, (0, c_pad - c))[None, :]   # padded channels stay 0
    shift = jnp.pad(shift, (0, c_pad - c))[None, :]
    return scale, shift


def _conv_weight(key, k, c_in, c_out, c_in_pad, c_out_pad):
    # torch Conv1d weight is (C_out, C_in, K); stored as (K, C_in_pad, C_out_pad)
    w = 0.05 * jax.random.normal(key, (k, c_in, c_out), jnp.float32)
    return jnp.pad(w, ((0, 0), (0, c_in_pad - c_in), (0, c_out_pad - c_out)))


def _fold_strided_weight(w, stride, dilation):
    """Stride-s conv == stride-1 conv on the time-folded input: folded tap m,
    sub-position q  <-  original tap k with k*dilation = m*stride + q."""
    k, c_in_pad, c_out_pad = w.shape
    kf = ((k - 1) * dilation) // stride + 1
    wf = jnp.zeros((kf, stride, c_in_pad, c_out_pad), jnp.float32)
    for tap in range(k):
        m, q = divmod(tap * dilation, stride)
        wf = wf.at[m, q].set(w[tap])
    return wf.reshape(kf * stride * c_in_pad, c_out_pad)


def init_jasper_params(key, cfg):
    params = {"config": cfg}

    pre = cfg["preprocess_block"]
    cin, cout = pre["in_channels"], pre["out_channels"]
    cin_pad, cout_pad = _round_up(cin, LANE), _round_up(cout, LANE)
    K = pre["kernel_size"]
    key, k1, k2 = jax.random.split(key, 3)
    w = _conv_weight(k1, K, cin, cout, cin_pad, cout_pad)
    scale, shift = _bn_fold(k2, cout, cout_pad)
    params["preprocess"] = dict(
        w0=_fold_strided_weight(w, pre["stride"], pre["dilation"]).astype(MATMUL_DTYPE),
        scale=scale[None], shift=shift[None],                 # (1, 1, cout_pad)
        kernel_size=K, stride=pre["stride"], dilation=pre["dilation"],
        padding=K // 2)

    blk = cfg["block"]
    blocks = []
    for i in range(cfg["num_blocks"]):
        K, d = blk["kernel_size"][i], blk["dilation"][i]
        cout = blk["out_channels"][i]
        cout_pad = _round_up(cout, LANE)
        n_sub = cfg["num_sub_blocks"]
        w0, w_rest, scales, shifts = None, [], [], []
        for s in range(n_sub):
            c_in = blk["in_channels"][i] if s == 0 else cout
            c_in_pad = _round_up(c_in, LANE)
            key, k1, k2 = jax.random.split(key, 3)
            w = _conv_weight(k1, K, c_in, cout, c_in_pad, cout_pad)
            w2d = w.reshape(K * c_in_pad, cout_pad).astype(MATMUL_DTYPE)
            if s == 0:
                w0 = w2d
            else:
                w_rest.append(w2d)
            sc, sh = _bn_fold(k2, cout, cout_pad)
            scales.append(sc)
            shifts.append(sh)
        blocks.append(dict(
            w0=w0,
            w_rest=jnp.stack(w_rest, axis=0) if w_rest else None,
            scale=jnp.stack(scales, axis=0),                  # (n_sub, 1, cout_pad)
            shift=jnp.stack(shifts, axis=0),
            kernel_size=K, dilation=d, padding=K // 2))
    params["blocks"] = blocks

    residual = []
    for i in range(cfg["num_blocks"]):
        cout = blk["out_channels"][i]
        cout_pad = _round_up(cout, LANE)
        mods = []
        for j in range(i + 1):
            c_in = blk["in_channels"][j]
            c_in_pad = _round_up(c_in, LANE)
            key, k1, k2 = jax.random.split(key, 3)
            w = _conv_weight(k1, 1, c_in, cout, c_in_pad, cout_pad)[0]  # (cin_pad, cout_pad)
            sc, sh = _bn_fold(k2, cout, cout_pad)
            mods.append(dict(weight=w, bn_scale=sc, bn_shift=sh))
        residual.append(mods)
    params["residual"] = residual
    return params


# ---------------------------------------------------------------------------
if __name__ == "__main__":
    config = dict(
        num_blocks=3,
        num_sub_blocks=2,
        preprocess_block=dict(in_channels=16, out_channels=32, kernel_size=5,
                              stride=2, dilation=1, dropout_p=0.2),
        block=dict(in_channels=[32, 32, 48],
                   out_channels=[32, 48, 64],
                   kernel_size=[3, 5, 3],
                   dilation=[1, 1, 1],
                   dropout_p=[0.2, 0.2, 0.2]),
    )

    key = jax.random.PRNGKey(0)
    kx, kp = jax.random.split(key)

    B, D, T = 2, 16, 16
    inputs = jax.random.normal(kx, (B, D, T), jnp.float32)      # (batch, dim, time)
    input_lengths = jnp.array([16, 11], jnp.int32)

    params = init_jasper_params(kp, config)

    fwd = jax.jit(lambda x, lens: jasper_encoder(x, lens, params))
    output, output_lengths = fwd(inputs, input_lengths)
    jax.block_until_ready((output, output_lengths))

    assert output.shape == (B, config["block"]["out_channels"][-1], 8)
    assert output_lengths.shape == (B,)
    print("KERNEL_OK")
</pallas_src>

<mosaic_0001>
module attributes {stable_mosaic.version = 11 : i64} {
  func.func @_fused_block_kernel(%arg0: memref<2x10x256xf32, #tpu.memory_space<vmem>>, %arg1: memref<768x128xbf16, #tpu.memory_space<vmem>>, %arg2: memref<1x1x128xf32, #tpu.memory_space<vmem>>, %arg3: memref<1x1x128xf32, #tpu.memory_space<vmem>>, %arg4: memref<2x8x128xbf16, #tpu.memory_space<vmem>>) attributes {dimension_semantics = [], scalar_prefetch = 0 : i64, scratch_operands = 0 : i64, tpu.core_type = #tpu.core_type<tc>} {
    %c0 = arith.constant 0 : index
    %c0_0 = arith.constant 0 : index
    %c0_1 = arith.constant 0 : index
    %0 = vector.load %arg0[%c0, %c0_0, %c0_1] : memref<2x10x256xf32, #tpu.memory_space<vmem>>, vector<2x10x256xf32>
    %c0_2 = arith.constant 0 : index
    %c0_3 = arith.constant 0 : index
    %1 = vector.load %arg1[%c0_2, %c0_3] : memref<768x128xbf16, #tpu.memory_space<vmem>>, vector<768x128xbf16>
    %2 = vector.extract_strided_slice %0 {offsets = [0, 0, 0], sizes = [2, 8, 256], strides = [1, 1, 1]} : vector<2x10x256xf32> to vector<2x8x256xf32>
    %3 = vector.shape_cast %2 : vector<2x8x256xf32> to vector<16x256xf32>
    %4 = arith.truncf %3 : vector<16x256xf32> to vector<16x256xbf16>
    %5 = vector.extract_strided_slice %1 {offsets = [0, 0], sizes = [256, 128], strides = [1, 1]} : vector<768x128xbf16> to vector<256x128xbf16>
    %cst = arith.constant dense<0.000000e+00> : vector<16x128xf32>
    %6 = tpu.matmul %4, %5, %cst {dimension_numbers = #tpu.dot_dimension_numbers<[1], [0], [0], [1], [0, 0, 1, 1], [], []>} : vector<16x256xbf16>, vector<256x128xbf16>, vector<16x128xf32> -> vector<16x128xf32>
    %7 = vector.extract_strided_slice %0 {offsets = [0, 1, 0], sizes = [2, 8, 256], strides = [1, 1, 1]} : vector<2x10x256xf32> to vector<2x8x256xf32>
    %8 = vector.shape_cast %7 : vector<2x8x256xf32> to vector<16x256xf32>
    %9 = arith.truncf %8 : vector<16x256xf32> to vector<16x256xbf16>
    %10 = vector.extract_strided_slice %1 {offsets = [256, 0], sizes = [256, 128], strides = [1, 1]} : vector<768x128xbf16> to vector<256x128xbf16>
    %cst_4 = arith.constant dense<0.000000e+00> : vector<16x128xf32>
    %11 = tpu.matmul %9, %10, %cst_4 {dimension_numbers = #tpu.dot_dimension_numbers<[1], [0], [0], [1], [0, 0, 1, 1], [], []>} : vector<16x256xbf16>, vector<256x128xbf16>, vector<16x128xf32> -> vector<16x128xf32>
    %12 = arith.addf %6, %11 : vector<16x128xf32>
    %13 = vector.extract_strided_slice %0 {offsets = [0, 2, 0], sizes = [2, 8, 256], strides = [1, 1, 1]} : vector<2x10x256xf32> to vector<2x8x256xf32>
    %14 = vector.shape_cast %13 : vector<2x8x256xf32> to vector<16x256xf32>
    %15 = arith.truncf %14 : vector<16x256xf32> to vector<16x256xbf16>
    %16 = vector.extract_strided_slice %1 {offsets = [512, 0], sizes = [256, 128], strides = [1, 1]} : vector<768x128xbf16> to vector<256x128xbf16>
    %cst_5 = arith.constant dense<0.000000e+00> : vector<16x128xf32>
    %17 = tpu.matmul %15, %16, %cst_5 {dimension_numbers = #tpu.dot_dimension_numbers<[1], [0], [0], [1], [0, 0, 1, 1], [], []>} : vector<16x256xbf16>, vector<256x128xbf16>, vector<16x128xf32> -> vector<16x128xf32>
    %18 = arith.addf %12, %17 : vector<16x128xf32>
    %c0_6 = arith.constant 0 : index
    %c0_7 = arith.constant 0 : index
    %c0_8 = arith.constant 0 : index
    %19 = vector.load %arg2[%c0_6, %c0_7, %c0_8] : memref<1x1x128xf32, #tpu.memory_space<vmem>>, vector<1x1x128xf32>
    %20 = vector.shape_cast %19 : vector<1x1x128xf32> to vector<1x128xf32>
    %21 = vector.broadcast %20 : vector<1x128xf32> to vector<16x128xf32>
    %22 = arith.mulf %18, %21 : vector<16x128xf32>
    %c0_9 = arith.constant 0 : index
    %c0_10 = arith.constant 0 : index
    %c0_11 = arith.constant 0 : index
    %23 = vector.load %arg3[%c0_9, %c0_10, %c0_11] : memref<1x1x128xf32, #tpu.memory_space<vmem>>, vector<1x1x128xf32>
    %24 = vector.shape_cast %23 : vector<1x1x128xf32> to vector<1x128xf32>
    %25 = vector.broadcast %24 : vector<1x128xf32> to vector<16x128xf32>
    %26 = arith.addf %22, %25 : vector<16x128xf32>
    %cst_12 = arith.constant 0.000000e+00 : f32
    %27 = vector.broadcast %cst_12 : f32 to vector<16x128xf32>
    %28 = arith.maximumf %26, %27 : vector<16x128xf32>
    %29 = vector.shape_cast %28 : vector<16x128xf32> to vector<2x8x128xf32>
    %30 = arith.truncf %29 : vector<2x8x128xf32> to vector<2x8x128xbf16>
    %c0_13 = arith.constant 0 : index
    %c0_14 = arith.constant 0 : index
    %c0_15 = arith.constant 0 : index
    %31 = vector.load %arg4[%c0_13, %c0_14, %c0_15] : memref<2x8x128xbf16, #tpu.memory_space<vmem>>, vector<2x8x128xbf16>
    tpu.vector_store %arg4[%c0_13, %c0_14, %c0_15], %30 {strides = array<i32>} : memref<2x8x128xbf16, #tpu.memory_space<vmem>>, vector<2x8x128xbf16>,
    return
  }
}

module attributes {stable_mosaic.version = 11 : i64} {
  func.func @_fused_block_kernel(%arg0: memref<2x2x8x1xf32, #tpu.memory_space<vmem>>, %arg1: memref<2x8x128xbf16, #tpu.memory_space<vmem>>, %arg2: memref<640x128xbf16, #tpu.memory_space<vmem>>, %arg3: memref<1x640x128xbf16, #tpu.memory_space<vmem>>, %arg4: memref<2x1x128xf32, #tpu.memory_space<vmem>>, %arg5: memref<2x1x128xf32, #tpu.memory_space<vmem>>, %arg6: memref<2x8x128xbf16, #tpu.memory_space<vmem>>, %arg7: memref<256x128xbf16, #tpu.memory_space<vmem>>, %arg8: memref<1x128xf32, #tpu.memory_space<vmem>>, %arg9: memref<2x8x128xbf16, #tpu.memory_space<vmem>>, %arg10: memref<2x12x128xf32, #tpu.memory_space<vmem>>, %arg11: memref<2x12x128xf32, #tpu.memory_space<vmem>>) attributes {dimension_semantics = [], scalar_prefetch = 0 : i64, scratch_operands = 2 : i64, tpu.core_type = #tpu.core_type<tc>} {
    %cst = arith.constant 0.000000e+00 : f32
    %0 = vector.broadcast %cst : f32 to vector<2x2x128xf32>
    %c0 = arith.constant 0 : index
    %c0_0 = arith.constant 0 : index
    %c0_1 = arith.constant 0 : index
    %1 = vector.load %arg10[%c0, %c0_0, %c0_1] : memref<2x12x128xf32, #tpu.memory_space<vmem>>, vector<2x2x128xf32>
    tpu.vector_store %arg10[%c0, %c0_0, %c0_1], %0 {strides = array<i32>} : memref<2x12x128xf32, #tpu.memory_space<vmem>>, vector<2x2x128xf32>,
    %c0_2 = arith.constant 0 : index
    %c10 = arith.constant 10 : index
    %c0_3 = arith.constant 0 : index
    %2 = vector.load %arg10[%c0_2, %c10, %c0_3] : memref<2x12x128xf32, #tpu.memory_space<vmem>>, vector<2x2x128xf32>
    tpu.vector_store %arg10[%c0_2, %c10, %c0_3], %0 {strides = array<i32>} : memref<2x12x128xf32, #tpu.memory_space<vmem>>, vector<2x2x128xf32>,
    %c0_4 = arith.constant 0 : index
    %c0_5 = arith.constant 0 : index
    %c0_6 = arith.constant 0 : index
    %3 = vector.load %arg1[%c0_4, %c0_5, %c0_6] : memref<2x8x128xbf16, #tpu.memory_space<vmem>>, vector<2x8x128xbf16>
    %4 = arith.extf %3 : vector<2x8x128xbf16> to vector<2x8x128xf32>
    %c0_7 = arith.constant 0 : index
    %c0_8 = arith.constant 0 : index
    %c0_9 = arith.constant 0 : index
    %c0_10 = arith.constant 0 : index
    %5 = vector.load %arg0[%c0_7, %c0_8, %c0_9, %c0_10] : memref<2x2x8x1xf32, #tpu.memory_space<vmem>>, vector<1x2x8x1xf32>
    %6 = vector.shape_cast %5 : vector<1x2x8x1xf32> to vector<2x8x1xf32>
    %7 = vector.broadcast %6 : vector<2x8x1xf32> to vector<2x8x128xf32>
    %8 = arith.mulf %4, %7 : vector<2x8x128xf32>
    %c0_11 = arith.constant 0 : index
    %c2 = arith.constant 2 : index
    %c0_12 = arith.constant 0 : index
    %9 = vector.load %arg10[%c0_11, %c2, %c0_12] : memref<2x12x128xf32, #tpu.memory_space<vmem>>, vector<2x8x128xf32>
    tpu.vector_store %arg10[%c0_11, %c2, %c0_12], %8 {strides = array<i32>} : memref<2x12x128xf32, #tpu.memory_space<vmem>>, vector<2x8x128xf32>,
    %cst_13 = arith.constant 0.000000e+00 : f32
    %10 = vector.broadcast %cst_13 : f32 to vector<2x2x128xf32>
    %c0_14 = arith.constant 0 : index
    %c0_15 = arith.constant 0 : index
    %c0_16 = arith.constant 0 : index
    %11 = vector.load %arg11[%c0_14, %c0_15, %c0_16] : memref<2x12x128xf32, #tpu.memory_space<vmem>>, vector<2x2x128xf32>
    tpu.vector_store %arg11[%c0_14, %c0_15, %c0_16], %10 {strides = array<i32>} : memref<2x12x128xf32, #tpu.memory_space<vmem>>, vector<2x2x128xf32>,
    %c0_17 = arith.constant 0 : index
    %c10_18 = arith.constant 10 : index
    %c0_19 = arith.constant 0 : index
    %12 = vector.load %arg11[%c0_17, %c10_18, %c0_19] : memref<2x12x128xf32, #tpu.memory_space<vmem>>, vector<2x2x128xf32>
    tpu.vector_store %arg11[%c0_17, %c10_18, %c0_19], %10 {strides = array<i32>} : memref<2x12x128xf32, #tpu.memory_space<vmem>>, vector<2x2x128xf32>,
    %c0_20 = arith.constant 0 : index
    %c0_21 = arith.constant 0 : index
    %c0_22 = arith.constant 0 : index
    %13 = vector.load %arg10[%c0_20, %c0_21, %c0_22] : memref<2x12x128xf32, #tpu.memory_space<vmem>>, vector<2x12x128xf32>
    %c0_23 = arith.constant 0 : index
    %c0_24 = arith.constant 0 : index
    %14 = vector.load %arg2[%c0_23, %c0_24] : memref<640x128xbf16, #tpu.memory_space<vmem>>, vector<640x128xbf16>
    %15 = vector.extract_strided_slice %13 {offsets = [0, 0, 0], sizes = [2, 8, 128], strides = [1, 1, 1]} : vector<2x12x128xf32> to vector<2x8x128xf32>
    %16 = vector.extract_strided_slice %13 {offsets = [0, 1, 0], sizes = [2, 8, 128], strides = [1, 1, 1]} : vector<2x12x128xf32> to vector<2x8x128xf32>
    %17 = tpu.concatenate %15, %16 in 2 : vector<2x8x128xf32>, vector<2x8x128xf32> -> vector<2x8x256xf32>
    %18 = vector.shape_cast %17 : vector<2x8x256xf32> to vector<16x256xf32>
    %19 = arith.truncf %18 : vector<16x256xf32> to vector<16x256xbf16>
    %20 = vector.extract_strided_slice %14 {offsets = [0, 0], sizes = [256, 128], strides = [1, 1]} : vector<640x128xbf16> to vector<256x128xbf16>
    %cst_25 = arith.constant dense<0.000000e+00> : vector<16x128xf32>
    %21 = tpu.matmul %19, %20, %cst_25 {dimension_numbers = #tpu.dot_dimension_numbers<[1], [0], [0], [1], [0, 0, 1, 1], [], []>} : vector<16x256xbf16>, vector<256x128xbf16>, vector<16x128xf32> -> vector<16x128xf32>
    %22 = vector.extract_strided_slice %13 {offsets = [0, 2, 0], sizes = [2, 8, 128], strides = [1, 1, 1]} : vector<2x12x128xf32> to vector<2x8x128xf32>
    %23 = vector.extract_strided_slice %13 {offsets = [0, 3, 0], sizes = [2, 8, 128], strides = [1, 1, 1]} : vector<2x12x128xf32> to vector<2x8x128xf32>
    %24 = tpu.concatenate %22, %23 in 2 : vector<2x8x128xf32>, vector<2x8x128xf32> -> vector<2x8x256xf32>
    %25 = vector.shape_cast %24 : vector<2x8x256xf32> to vector<16x256xf32>
    %26 = arith.truncf %25 : vector<16x256xf32> to vector<16x256xbf16>
    %27 = vector.extract_strided_slice %14 {offsets = [256, 0], sizes = [256, 128], strides = [1, 1]} : vector<640x128xbf16> to vector<256x128xbf16>
    %cst_26 = arith.constant dense<0.000000e+00> : vector<16x128xf32>
    %28 = tpu.matmul %26, %27, %cst_26 {dimension_numbers = #tpu.dot_dimension_numbers<[1], [0], [0], [1], [0, 0, 1, 1], [], []>} : vector<16x256xbf16>, vector<256x128xbf16>, vector<16x128xf32> -> vector<16x128xf32>
    %29 = arith.addf %21, %28 : vector<16x128xf32>
    %30 = vector.extract_strided_slice %13 {offsets = [0, 4, 0], sizes = [2, 8, 128], strides = [1, 1, 1]} : vector<2x12x128xf32> to vector<2x8x128xf32>
    %31 = vector.shape_cast %30 : vector<2x8x128xf32> to vector<16x128xf32>
    %32 = arith.truncf %31 : vector<16x128xf32> to vector<16x128xbf16>
    %33 = vector.extract_strided_slice %14 {offsets = [512, 0], sizes = [128, 128], strides = [1, 1]} : vector<640x128xbf16> to vector<128x128xbf16>
    %cst_27 = arith.constant dense<0.000000e+00> : vector<16x128xf32>
    %34 = tpu.matmul %32, %33, %cst_27 {dimension_numbers = #tpu.dot_dimension_numbers<[1], [0], [0], [1], [0, 0, 1, 1], [], []>} : vector<16x128xbf16>, vector<128x128xbf16>, vector<16x128xf32> -> vector<16x128xf32>
    %35 = arith.addf %29, %34 : vector<16x128xf32>
    %c0_28 = arith.constant 0 : index
    %c0_29 = arith.constant 0 : index
    %c0_30 = arith.constant 0 : index
    %36 = vector.load %arg4[%c0_28, %c0_29, %c0_30] : memref<2x1x128xf32, #tpu.memory_space<vmem>>, vector<1x1x128xf32>
    %37 = vector.shape_cast %36 : vector<1x1x128xf32> to vector<1x128xf32>
    %38 = vector.broadcast %37 : vector<1x128xf32> to vector<16x128xf32>
    %39 = arith.mulf %35, %38 : vector<16x128xf32>
    %c0_31 = arith.constant 0 : index
    %c0_32 = arith.constant 0 : index
    %c0_33 = arith.constant 0 : index
    %40 = vector.load %arg5[%c0_31, %c0_32, %c0_33] : memref<2x1x128xf32, #tpu.memory_space<vmem>>, vector<1x1x128xf32>
    %41 = vector.shape_cast %40 : vector<1x1x128xf32> to vector<1x128xf32>
    %42 = vector.broadcast %41 : vector<1x128xf32> to vector<16x128xf32>
    %43 = arith.addf %39, %42 : vector<16x128xf32>
    %cst_34 = arith.constant 0.000000e+00 : f32
    %44 = vector.broadcast %cst_34 : f32 to vector<16x128xf32>
    %45 = arith.maximumf %43, %44 : vector<16x128xf32>
    %46 = vector.shape_cast %45 : vector<16x128xf32> to vector<2x8x128xf32>
    %c0_35 = arith.constant 0 : index
    %c0_36 = arith.constant 0 : index
    %c0_37 = arith.constant 0 : index
    %c0_38 = arith.constant 0 : index
    %47 = vector.load %arg0[%c0_35, %c0_36, %c0_37, %c0_38] : memref<2x2x8x1xf32, #tpu.memory_space<vmem>>, vector<1x2x8x1xf32>
    %48 = vector.shape_cast %47 : vector<1x2x8x1xf32> to vector<2x8x1xf32>
    %49 = vector.broadcast %48 : vector<2x8x1xf32> to vector<2x8x128xf32>
    %50 = arith.mulf %46, %49 : vector<2x8x128xf32>
    %c0_39 = arith.constant 0 : index
    %c2_40 = arith.constant 2 : index
    %c0_41 = arith.constant 0 : index
    %51 = vector.load %arg11[%c0_39, %c2_40, %c0_41] : memref<2x12x128xf32, #tpu.memory_space<vmem>>, vector<2x8x128xf32>
    tpu.vector_store %arg11[%c0_39, %c2_40, %c0_41], %50 {strides = array<i32>} : memref<2x12x128xf32, #tpu.memory_space<vmem>>, vector<2x8x128xf32>,
    %c0_42 = arith.constant 0 : index
    %c0_43 = arith.constant 0 : index
    %c0_44 = arith.constant 0 : index
    %52 = vector.load %arg11[%c0_42, %c0_43, %c0_44] : memref<2x12x128xf32, #tpu.memory_space<vmem>>, vector<2x12x128xf32>
    %c0_45 = arith.constant 0 : index
    %c0_46 = arith.constant 0 : index
    %c0_47 = arith.constant 0 : index
    %53 = vector.load %arg3[%c0_45, %c0_46, %c0_47] : memref<1x640x128xbf16, #tpu.memory_space<vmem>>, vector<1x640x128xbf16>
    %54 = vector.shape_cast %53 : vector<1x640x128xbf16> to vector<640x128xbf16>
    %55 = vector.extract_strided_slice %52 {offsets = [0, 0, 0], sizes = [2, 8, 128], strides = [1, 1, 1]} : vector<2x12x128xf32> to vector<2x8x128xf32>
    %56 = vector.extract_strided_slice %52 {offsets = [0, 1, 0], sizes = [2, 8, 128], strides = [1, 1, 1]} : vector<2x12x128xf32> to vector<2x8x128xf32>
    %57 = tpu.concatenate %55, %56 in 2 : vector<2x8x128xf32>, vector<2x8x128xf32> -> vector<2x8x256xf32>
    %58 = vector.shape_cast %57 : vector<2x8x256xf32> to vector<16x256xf32>
    %59 = arith.truncf %58 : vector<16x256xf32> to vector<16x256xbf16>
    %60 = vector.extract_strided_slice %54 {offsets = [0, 0], sizes = [256, 128], strides = [1, 1]} : vector<640x128xbf16> to vector<256x128xbf16>
    %cst_48 = arith.constant dense<0.000000e+00> : vector<16x128xf32>
    %61 = tpu.matmul %59, %60, %cst_48 {dimension_numbers = #tpu.dot_dimension_numbers<[1], [0], [0], [1], [0, 0, 1, 1], [], []>} : vector<16x256xbf16>, vector<256x128xbf16>, vector<16x128xf32> -> vector<16x128xf32>
    %62 = vector.extract_strided_slice %52 {offsets = [0, 2, 0], sizes = [2, 8, 128], strides = [1, 1, 1]} : vector<2x12x128xf32> to vector<2x8x128xf32>
    %63 = vector.extract_strided_slice %52 {offsets = [0, 3, 0], sizes = [2, 8, 128], strides = [1, 1, 1]} : vector<2x12x128xf32> to vector<2x8x128xf32>
    %64 = tpu.concatenate %62, %63 in 2 : vector<2x8x128xf32>, vector<2x8x128xf32> -> vector<2x8x256xf32>
    %65 = vector.shape_cast %64 : vector<2x8x256xf32> to vector<16x256xf32>
    %66 = arith.truncf %65 : vector<16x256xf32> to vector<16x256xbf16>
    %67 = vector.extract_strided_slice %54 {offsets = [256, 0], sizes = [256, 128], strides = [1, 1]} : vector<640x128xbf16> to vector<256x128xbf16>
    %cst_49 = arith.constant dense<0.000000e+00> : vector<16x128xf32>
    %68 = tpu.matmul %66, %67, %cst_49 {dimension_numbers = #tpu.dot_dimension_numbers<[1], [0], [0], [1], [0, 0, 1, 1], [], []>} : vector<16x256xbf16>, vector<256x128xbf16>, vector<16x128xf32> -> vector<16x128xf32>
    %69 = arith.addf %61, %68 : vector<16x128xf32>
    %70 = vector.extract_strided_slice %52 {offsets = [0, 4, 0], sizes = [2, 8, 128], strides = [1, 1, 1]} : vector<2x12x128xf32> to vector<2x8x128xf32>
    %71 = vector.shape_cast %70 : vector<2x8x128xf32> to vector<16x128xf32>
    %72 = arith.truncf %71 : vector<16x128xf32> to vector<16x128xbf16>
    %73 = vector.extract_strided_slice %54 {offsets = [512, 0], sizes = [128, 128], strides = [1, 1]} : vector<640x128xbf16> to vector<128x128xbf16>
    %cst_50 = arith.constant dense<0.000000e+00> : vector<16x128xf32>
    %74 = tpu.matmul %72, %73, %cst_50 {dimension_numbers = #tpu.dot_dimension_numbers<[1], [0], [0], [1], [0, 0, 1, 1], [], []>} : vector<16x128xbf16>, vector<128x128xbf16>, vector<16x128xf32> -> vector<16x128xf32>
    %75 = arith.addf %69, %74 : vector<16x128xf32>
    %c1 = arith.constant 1 : index
    %c0_51 = arith.constant 0 : index
    %c0_52 = arith.constant 0 : index
    %76 = vector.load %arg4[%c1, %c0_51, %c0_52] : memref<2x1x128xf32, #tpu.memory_space<vmem>>, vector<1x1x128xf32>
    %77 = vector.shape_cast %76 : vector<1x1x128xf32> to vector<1x128xf32>
    %78 = vector.broadcast %77 : vector<1x128xf32> to vector<16x128xf32>
    %79 = arith.mulf %75, %78 : vector<16x128xf32>
    %c1_53 = arith.constant 1 : index
    %c0_54 = arith.constant 0 : index
    %c0_55 = arith.constant 0 : index
    %80 = vector.load %arg5[%c1_53, %c0_54, %c0_55] : memref<2x1x128xf32, #tpu.memory_space<vmem>>, vector<1x1x128xf32>
    %81 = vector.shape_cast %80 : vector<1x1x128xf32> to vector<1x128xf32>
    %82 = vector.broadcast %81 : vector<1x128xf32> to vector<16x128xf32>
    %83 = arith.addf %79, %82 : vector<16x128xf32>
    %c0_56 = arith.constant 0 : index
    %c0_57 = arith.constant 0 : index
    %c0_58 = arith.constant 0 : index
    %84 = vector.load %arg6[%c0_56, %c0_57, %c0_58] : memref<2x8x128xbf16, #tpu.memory_space<vmem>>, vector<2x8x128xbf16>
    %85 = arith.extf %84 : vector<2x8x128xbf16> to vector<2x8x128xf32>
    %c1_59 = arith.constant 1 : index
    %c0_60 = arith.constant 0 : index
    %c0_61 = arith.constant 0 : index
    %c0_62 = arith.constant 0 : index
    %86 = vector.load %arg0[%c1_59, %c0_60, %c0_61, %c0_62] : memref<2x2x8x1xf32, #tpu.memory_space<vmem>>, vector<1x2x8x1xf32>
    %87 = vector.shape_cast %86 : vector<1x2x8x1xf32> to vector<2x8x1xf32>
    %88 = vector.broadcast %87 : vector<2x8x1xf32> to vector<2x8x128xf32>
    %89 = arith.mulf %85, %88 : vector<2x8x128xf32>
    %90 = vector.shape_cast %89 : vector<2x8x128xf32> to vector<16x128xf32>
    %91 = arith.truncf %90 : vector<16x128xf32> to vector<16x128xbf16>
    %c0_63 = arith.constant 0 : index
    %c2_64 = arith.constant 2 : index
    %c0_65 = arith.constant 0 : index
    %92 = vector.load %arg10[%c0_63, %c2_64, %c0_65] : memref<2x12x128xf32, #tpu.memory_space<vmem>>, vector<2x8x128xf32>
    %93 = vector.shape_cast %92 : vector<2x8x128xf32> to vector<16x128xf32>
    %94 = arith.truncf %93 : vector<16x128xf32> to vector<16x128xbf16>
    %95 = tpu.concatenate %91, %94 in 1 : vector<16x128xbf16>, vector<16x128xbf16> -> vector<16x256xbf16>
    %c0_66 = arith.constant 0 : index
    %c0_67 = arith.constant 0 : index
    %96 = vector.load %arg7[%c0_66, %c0_67] : memref<256x128xbf16, #tpu.memory_space<vmem>>, vector<256x128xbf16>
    %cst_68 = arith.constant dense<0.000000e+00> : vector<16x128xf32>
    %97 = tpu.matmul %95, %96, %cst_68 {dimension_numbers = #tpu.dot_dimension_numbers<[1], [0], [0], [1], [0, 0, 1, 1], [], []>} : vector<16x256xbf16>, vector<256x128xbf16>, vector<16x128xf32> -> vector<16x128xf32>
    %c0_69 = arith.constant 0 : index
    %c0_70 = arith.constant 0 : index
    %98 = vector.load %arg8[%c0_69, %c0_70] : memref<1x128xf32, #tpu.memory_space<vmem>>, vector<1x128xf32>
    %99 = vector.broadcast %98 : vector<1x128xf32> to vector<16x128xf32>
    %100 = arith.addf %97, %99 : vector<16x128xf32>
    %101 = arith.addf %83, %100 : vector<16x128xf32>
    %cst_71 = arith.constant 0.000000e+00 : f32
    %102 = vector.broadcast %cst_71 : f32 to vector<16x128xf32>
    %103 = arith.maximumf %101, %102 : vector<16x128xf32>
    %104 = vector.shape_cast %103 : vector<16x128xf32> to vector<2x8x128xf32>
    %105 = arith.truncf %104 : vector<2x8x128xf32> to vector<2x8x128xbf16>
    %c0_72 = arith.constant 0 : index
    %c0_73 = arith.constant 0 : index
    %c0_74 = arith.constant 0 : index
    %106 = vector.load %arg9[%c0_72, %c0_73, %c0_74] : memref<2x8x128xbf16, #tpu.memory_space<vmem>>, vector<2x8x128xbf16>
    tpu.vector_store %arg9[%c0_72, %c0_73, %c0_74], %105 {strides = array<i32>} : memref<2x8x128xbf16, #tpu.memory_space<vmem>>, vector<2x8x128xbf16>,
    return
  }
}

module attributes {stable_mosaic.version = 11 : i64} {
  func.func @_fused_block_kernel(%arg0: memref<1x2x8x1xf32, #tpu.memory_space<vmem>>, %arg1: memref<2x8x128xbf16, #tpu.memory_space<vmem>>, %arg2: memref<384x128xbf16, #tpu.memory_space<vmem>>, %arg3: memref<1x384x128xbf16, #tpu.memory_space<vmem>>, %arg4: memref<2x1x128xf32, #tpu.memory_space<vmem>>, %arg5: memref<2x1x128xf32, #tpu.memory_space<vmem>>, %arg6: memref<128x128xbf16, #tpu.memory_space<vmem>>, %arg7: memref<1x128xf32, #tpu.memory_space<vmem>>, %arg8: memref<2x8x128xbf16, #tpu.memory_space<vmem>>, %arg9: memref<2x10x128xf32, #tpu.memory_space<vmem>>, %arg10: memref<2x10x128xf32, #tpu.memory_space<vmem>>) attributes {dimension_semantics = [], scalar_prefetch = 0 : i64, scratch_operands = 2 : i64, tpu.core_type = #tpu.core_type<tc>} {
    %cst = arith.constant 0.000000e+00 : f32
    %0 = vector.broadcast %cst : f32 to vector<2x1x128xf32>
    %c0 = arith.constant 0 : index
    %c0_0 = arith.constant 0 : index
    %c0_1 = arith.constant 0 : index
    %1 = vector.load %arg9[%c0, %c0_0, %c0_1] : memref<2x10x128xf32, #tpu.memory_space<vmem>>, vector<2x1x128xf32>
    tpu.vector_store %arg9[%c0, %c0_0, %c0_1], %0 {strides = array<i32>} : memref<2x10x128xf32, #tpu.memory_space<vmem>>, vector<2x1x128xf32>,
    %c0_2 = arith.constant 0 : index
    %c9 = arith.constant 9 : index
    %c0_3 = arith.constant 0 : index
    %2 = vector.load %arg9[%c0_2, %c9, %c0_3] : memref<2x10x128xf32, #tpu.memory_space<vmem>>, vector<2x1x128xf32>
    tpu.vector_store %arg9[%c0_2, %c9, %c0_3], %0 {strides = array<i32>} : memref<2x10x128xf32, #tpu.memory_space<vmem>>, vector<2x1x128xf32>,
    %c0_4 = arith.constant 0 : index
    %c0_5 = arith.constant 0 : index
    %c0_6 = arith.constant 0 : index
    %3 = vector.load %arg1[%c0_4, %c0_5, %c0_6] : memref<2x8x128xbf16, #tpu.memory_space<vmem>>, vector<2x8x128xbf16>
    %4 = arith.extf %3 : vector<2x8x128xbf16> to vector<2x8x128xf32>
    %c0_7 = arith.constant 0 : index
    %c0_8 = arith.constant 0 : index
    %c0_9 = arith.constant 0 : index
    %c0_10 = arith.constant 0 : index
    %5 = vector.load %arg0[%c0_7, %c0_8, %c0_9, %c0_10] : memref<1x2x8x1xf32, #tpu.memory_space<vmem>>, vector<1x2x8x1xf32>
    %6 = vector.shape_cast %5 : vector<1x2x8x1xf32> to vector<2x8x1xf32>
    %7 = vector.broadcast %6 : vector<2x8x1xf32> to vector<2x8x128xf32>
    %8 = arith.mulf %4, %7 : vector<2x8x128xf32>
    %c0_11 = arith.constant 0 : index
    %c1 = arith.constant 1 : index
    %c0_12 = arith.constant 0 : index
    %9 = vector.load %arg9[%c0_11, %c1, %c0_12] : memref<2x10x128xf32, #tpu.memory_space<vmem>>, vector<2x8x128xf32>
    tpu.vector_store %arg9[%c0_11, %c1, %c0_12], %8 {strides = array<i32>} : memref<2x10x128xf32, #tpu.memory_space<vmem>>, vector<2x8x128xf32>,
    %cst_13 = arith.constant 0.000000e+00 : f32
    %10 = vector.broadcast %cst_13 : f32 to vector<2x1x128xf32>
    %c0_14 = arith.constant 0 : index
    %c0_15 = arith.constant 0 : index
    %c0_16 = arith.constant 0 : index
    %11 = vector.load %arg10[%c0_14, %c0_15, %c0_16] : memref<2x10x128xf32, #tpu.memory_space<vmem>>, vector<2x1x128xf32>
    tpu.vector_store %arg10[%c0_14, %c0_15, %c0_16], %10 {strides = array<i32>} : memref<2x10x128xf32, #tpu.memory_space<vmem>>, vector<2x1x128xf32>,
    %c0_17 = arith.constant 0 : index
    %c9_18 = arith.constant 9 : index
    %c0_19 = arith.constant 0 : index
    %12 = vector.load %arg10[%c0_17, %c9_18, %c0_19] : memref<2x10x128xf32, #tpu.memory_space<vmem>>, vector<2x1x128xf32>
    tpu.vector_store %arg10[%c0_17, %c9_18, %c0_19], %10 {strides = array<i32>} : memref<2x10x128xf32, #tpu.memory_space<vmem>>, vector<2x1x128xf32>,
    %c0_20 = arith.constant 0 : index
    %c0_21 = arith.constant 0 : index
    %c0_22 = arith.constant 0 : index
    %13 = vector.load %arg9[%c0_20, %c0_21, %c0_22] : memref<2x10x128xf32, #tpu.memory_space<vmem>>, vector<2x10x128xf32>
    %c0_23 = arith.constant 0 : index
    %c0_24 = arith.constant 0 : index
    %14 = vector.load %arg2[%c0_23, %c0_24] : memref<384x128xbf16, #tpu.memory_space<vmem>>, vector<384x128xbf16>
    %15 = vector.extract_strided_slice %13 {offsets = [0, 0, 0], sizes = [2, 8, 128], strides = [1, 1, 1]} : vector<2x10x128xf32> to vector<2x8x128xf32>
    %16 = vector.extract_strided_slice %13 {offsets = [0, 1, 0], sizes = [2, 8, 128], strides = [1, 1, 1]} : vector<2x10x128xf32> to vector<2x8x128xf32>
    %17 = tpu.concatenate %15, %16 in 2 : vector<2x8x128xf32>, vector<2x8x128xf32> -> vector<2x8x256xf32>
    %18 = vector.shape_cast %17 : vector<2x8x256xf32> to vector<16x256xf32>
    %19 = arith.truncf %18 : vector<16x256xf32> to vector<16x256xbf16>
    %20 = vector.extract_strided_slice %14 {offsets = [0, 0], sizes = [256, 128], strides = [1, 1]} : vector<384x128xbf16> to vector<256x128xbf16>
    %cst_25 = arith.constant dense<0.000000e+00> : vector<16x128xf32>
    %21 = tpu.matmul %19, %20, %cst_25 {dimension_numbers = #tpu.dot_dimension_numbers<[1], [0], [0], [1], [0, 0, 1, 1], [], []>} : vector<16x256xbf16>, vector<256x128xbf16>, vector<16x128xf32> -> vector<16x128xf32>
    %22 = vector.extract_strided_slice %13 {offsets = [0, 2, 0], sizes = [2, 8, 128], strides = [1, 1, 1]} : vector<2x10x128xf32> to vector<2x8x128xf32>
    %23 = vector.shape_cast %22 : vector<2x8x128xf32> to vector<16x128xf32>
    %24 = arith.truncf %23 : vector<16x128xf32> to vector<16x128xbf16>
    %25 = vector.extract_strided_slice %14 {offsets = [256, 0], sizes = [128, 128], strides = [1, 1]} : vector<384x128xbf16> to vector<128x128xbf16>
    %cst_26 = arith.constant dense<0.000000e+00> : vector<16x128xf32>
    %26 = tpu.matmul %24, %25, %cst_26 {dimension_numbers = #tpu.dot_dimension_numbers<[1], [0], [0], [1], [0, 0, 1, 1], [], []>} : vector<16x128xbf16>, vector<128x128xbf16>, vector<16x128xf32> -> vector<16x128xf32>
    %27 = arith.addf %21, %26 : vector<16x128xf32>
    %c0_27 = arith.constant 0 : index
    %c0_28 = arith.constant 0 : index
    %c0_29 = arith.constant 0 : index
    %28 = vector.load %arg4[%c0_27, %c0_28, %c0_29] : memref<2x1x128xf32, #tpu.memory_space<vmem>>, vector<1x1x128xf32>
    %29 = vector.shape_cast %28 : vector<1x1x128xf32> to vector<1x128xf32>
    %30 = vector.broadcast %29 : vector<1x128xf32> to vector<16x128xf32>
    %31 = arith.mulf %27, %30 : vector<16x128xf32>
    %c0_30 = arith.constant 0 : index
    %c0_31 = arith.constant 0 : index
    %c0_32 = arith.constant 0 : index
    %32 = vector.load %arg5[%c0_30, %c0_31, %c0_32] : memref<2x1x128xf32, #tpu.memory_space<vmem>>, vector<1x1x128xf32>
    %33 = vector.shape_cast %32 : vector<1x1x128xf32> to vector<1x128xf32>
    %34 = vector.broadcast %33 : vector<1x128xf32> to vector<16x128xf32>
    %35 = arith.addf %31, %34 : vector<16x128xf32>
    %cst_33 = arith.constant 0.000000e+00 : f32
    %36 = vector.broadcast %cst_33 : f32 to vector<16x128xf32>
    %37 = arith.maximumf %35, %36 : vector<16x128xf32>
    %38 = vector.shape_cast %37 : vector<16x128xf32> to vector<2x8x128xf32>
    %c0_34 = arith.constant 0 : index
    %c0_35 = arith.constant 0 : index
    %c0_36 = arith.constant 0 : index
    %c0_37 = arith.constant 0 : index
    %39 = vector.load %arg0[%c0_34, %c0_35, %c0_36, %c0_37] : memref<1x2x8x1xf32, #tpu.memory_space<vmem>>, vector<1x2x8x1xf32>
    %40 = vector.shape_cast %39 : vector<1x2x8x1xf32> to vector<2x8x1xf32>
    %41 = vector.broadcast %40 : vector<2x8x1xf32> to vector<2x8x128xf32>
    %42 = arith.mulf %38, %41 : vector<2x8x128xf32>
    %c0_38 = arith.constant 0 : index
    %c1_39 = arith.constant 1 : index
    %c0_40 = arith.constant 0 : index
    %43 = vector.load %arg10[%c0_38, %c1_39, %c0_40] : memref<2x10x128xf32, #tpu.memory_space<vmem>>, vector<2x8x128xf32>
    tpu.vector_store %arg10[%c0_38, %c1_39, %c0_40], %42 {strides = array<i32>} : memref<2x10x128xf32, #tpu.memory_space<vmem>>, vector<2x8x128xf32>,
    %c0_41 = arith.constant 0 : index
    %c0_42 = arith.constant 0 : index
    %c0_43 = arith.constant 0 : index
    %44 = vector.load %arg10[%c0_41, %c0_42, %c0_43] : memref<2x10x128xf32, #tpu.memory_space<vmem>>, vector<2x10x128xf32>
    %c0_44 = arith.constant 0 : index
    %c0_45 = arith.constant 0 : index
    %c0_46 = arith.constant 0 : index
    %45 = vector.load %arg3[%c0_44, %c0_45, %c0_46] : memref<1x384x128xbf16, #tpu.memory_space<vmem>>, vector<1x384x128xbf16>
    %46 = vector.shape_cast %45 : vector<1x384x128xbf16> to vector<384x128xbf16>
    %47 = vector.extract_strided_slice %44 {offsets = [0, 0, 0], sizes = [2, 8, 128], strides = [1, 1, 1]} : vector<2x10x128xf32> to vector<2x8x128xf32>
    %48 = vector.extract_strided_slice %44 {offsets = [0, 1, 0], sizes = [2, 8, 128], strides = [1, 1, 1]} : vector<2x10x128xf32> to vector<2x8x128xf32>
    %49 = tpu.concatenate %47, %48 in 2 : vector<2x8x128xf32>, vector<2x8x128xf32> -> vector<2x8x256xf32>
    %50 = vector.shape_cast %49 : vector<2x8x256xf32> to vector<16x256xf32>
    %51 = arith.truncf %50 : vector<16x256xf32> to vector<16x256xbf16>
    %52 = vector.extract_strided_slice %46 {offsets = [0, 0], sizes = [256, 128], strides = [1, 1]} : vector<384x128xbf16> to vector<256x128xbf16>
    %cst_47 = arith.constant dense<0.000000e+00> : vector<16x128xf32>
    %53 = tpu.matmul %51, %52, %cst_47 {dimension_numbers = #tpu.dot_dimension_numbers<[1], [0], [0], [1], [0, 0, 1, 1], [], []>} : vector<16x256xbf16>, vector<256x128xbf16>, vector<16x128xf32> -> vector<16x128xf32>
    %54 = vector.extract_strided_slice %44 {offsets = [0, 2, 0], sizes = [2, 8, 128], strides = [1, 1, 1]} : vector<2x10x128xf32> to vector<2x8x128xf32>
    %55 = vector.shape_cast %54 : vector<2x8x128xf32> to vector<16x128xf32>
    %56 = arith.truncf %55 : vector<16x128xf32> to vector<16x128xbf16>
    %57 = vector.extract_strided_slice %46 {offsets = [256, 0], sizes = [128, 128], strides = [1, 1]} : vector<384x128xbf16> to vector<128x128xbf16>
    %cst_48 = arith.constant dense<0.000000e+00> : vector<16x128xf32>
    %58 = tpu.matmul %56, %57, %cst_48 {dimension_numbers = #tpu.dot_dimension_numbers<[1], [0], [0], [1], [0, 0, 1, 1], [], []>} : vector<16x128xbf16>, vector<128x128xbf16>, vector<16x128xf32> -> vector<16x128xf32>
    %59 = arith.addf %53, %58 : vector<16x128xf32>
    %c1_49 = arith.constant 1 : index
    %c0_50 = arith.constant 0 : index
    %c0_51 = arith.constant 0 : index
    %60 = vector.load %arg4[%c1_49, %c0_50, %c0_51] : memref<2x1x128xf32, #tpu.memory_space<vmem>>, vector<1x1x128xf32>
    %61 = vector.shape_cast %60 : vector<1x1x128xf32> to vector<1x128xf32>
    %62 = vector.broadcast %61 : vector<1x128xf32> to vector<16x128xf32>
    %63 = arith.mulf %59, %62 : vector<16x128xf32>
    %c1_52 = arith.constant 1 : index
    %c0_53 = arith.constant 0 : index
    %c0_54 = arith.constant 0 : index
    %64 = vector.load %arg5[%c1_52, %c0_53, %c0_54] : memref<2x1x128xf32, #tpu.memory_space<vmem>>, vector<1x1x128xf32>
    %65 = vector.shape_cast %64 : vector<1x1x128xf32> to vector<1x128xf32>
    %66 = vector.broadcast %65 : vector<1x128xf32> to vector<16x128xf32>
    %67 = arith.addf %63, %66 : vector<16x128xf32>
    %c0_55 = arith.constant 0 : index
    %c1_56 = arith.constant 1 : index
    %c0_57 = arith.constant 0 : index
    %68 = vector.load %arg9[%c0_55, %c1_56, %c0_57] : memref<2x10x128xf32, #tpu.memory_space<vmem>>, vector<2x8x128xf32>
    %69 = vector.shape_cast %68 : vector<2x8x128xf32> to vector<16x128xf32>
    %70 = arith.truncf %69 : vector<16x128xf32> to vector<16x128xbf16>
    %c0_58 = arith.constant 0 : index
    %c0_59 = arith.constant 0 : index
    %71 = vector.load %arg6[%c0_58, %c0_59] : memref<128x128xbf16, #tpu.memory_space<vmem>>, vector<128x128xbf16>
    %cst_60 = arith.constant dense<0.000000e+00> : vector<16x128xf32>
    %72 = tpu.matmul %70, %71, %cst_60 {dimension_numbers = #tpu.dot_dimension_numbers<[1], [0], [0], [1], [0, 0, 1, 1], [], []>} : vector<16x128xbf16>, vector<128x128xbf16>, vector<16x128xf32> -> vector<16x128xf32>
    %c0_61 = arith.constant 0 : index
    %c0_62 = arith.constant 0 : index
    %73 = vector.load %arg7[%c0_61, %c0_62] : memref<1x128xf32, #tpu.memory_space<vmem>>, vector<1x128xf32>
    %74 = vector.broadcast %73 : vector<1x128xf32> to vector<16x128xf32>
    %75 = arith.addf %72, %74 : vector<16x128xf32>
    %76 = arith.addf %67, %75 : vector<16x128xf32>
    %cst_63 = arith.constant 0.000000e+00 : f32
    %77 = vector.broadcast %cst_63 : f32 to vector<16x128xf32>
    %78 = arith.maximumf %76, %77 : vector<16x128xf32>
    %79 = vector.shape_cast %78 : vector<16x128xf32> to vector<2x8x128xf32>
    %80 = arith.truncf %79 : vector<2x8x128xf32> to vector<2x8x128xbf16>
    %c0_64 = arith.constant 0 : index
    %c0_65 = arith.constant 0 : index
    %c0_66 = arith.constant 0 : index
    %81 = vector.load %arg8[%c0_64, %c0_65, %c0_66] : memref<2x8x128xbf16, #tpu.memory_space<vmem>>, vector<2x8x128xbf16>
    tpu.vector_store %arg8[%c0_64, %c0_65, %c0_66], %80 {strides = array<i32>} : memref<2x8x128xbf16, #tpu.memory_space<vmem>>, vector<2x8x128xbf16>,
    return
  }
}

module attributes {stable_mosaic.version = 11 : i64} {
  func.func @_fused_block_kernel(%arg0: memref<3x2x8x1xf32, #tpu.memory_space<vmem>>, %arg1: memref<2x8x128xbf16, #tpu.memory_space<vmem>>, %arg2: memref<384x128xbf16, #tpu.memory_space<vmem>>, %arg3: memref<1x384x128xbf16, #tpu.memory_space<vmem>>, %arg4: memref<2x1x128xf32, #tpu.memory_space<vmem>>, %arg5: memref<2x1x128xf32, #tpu.memory_space<vmem>>, %arg6: memref<2x8x128xbf16, #tpu.memory_space<vmem>>, %arg7: memref<2x8x128xbf16, #tpu.memory_space<vmem>>, %arg8: memref<384x128xbf16, #tpu.memory_space<vmem>>, %arg9: memref<1x128xf32, #tpu.memory_space<vmem>>, %arg10: memref<2x8x128xbf16, #tpu.memory_space<vmem>>, %arg11: memref<2x10x128xf32, #tpu.memory_space<vmem>>, %arg12: memref<2x10x128xf32, #tpu.memory_space<vmem>>) attributes {dimension_semantics = [], scalar_prefetch = 0 : i64, scratch_operands = 2 : i64, tpu.core_type = #tpu.core_type<tc>} {
    %cst = arith.constant 0.000000e+00 : f32
    %0 = vector.broadcast %cst : f32 to vector<2x1x128xf32>
    %c0 = arith.constant 0 : index
    %c0_0 = arith.constant 0 : index
    %c0_1 = arith.constant 0 : index
    %1 = vector.load %arg11[%c0, %c0_0, %c0_1] : memref<2x10x128xf32, #tpu.memory_space<vmem>>, vector<2x1x128xf32>
    tpu.vector_store %arg11[%c0, %c0_0, %c0_1], %0 {strides = array<i32>} : memref<2x10x128xf32, #tpu.memory_space<vmem>>, vector<2x1x128xf32>,
    %c0_2 = arith.constant 0 : index
    %c9 = arith.constant 9 : index
    %c0_3 = arith.constant 0 : index
    %2 = vector.load %arg11[%c0_2, %c9, %c0_3] : memref<2x10x128xf32, #tpu.memory_space<vmem>>, vector<2x1x128xf32>
    tpu.vector_store %arg11[%c0_2, %c9, %c0_3], %0 {strides = array<i32>} : memref<2x10x128xf32, #tpu.memory_space<vmem>>, vector<2x1x128xf32>,
    %c0_4 = arith.constant 0 : index
    %c0_5 = arith.constant 0 : index
    %c0_6 = arith.constant 0 : index
    %3 = vector.load %arg1[%c0_4, %c0_5, %c0_6] : memref<2x8x128xbf16, #tpu.memory_space<vmem>>, vector<2x8x128xbf16>
    %4 = arith.extf %3 : vector<2x8x128xbf16> to vector<2x8x128xf32>
    %c0_7 = arith.constant 0 : index
    %c0_8 = arith.constant 0 : index
    %c0_9 = arith.constant 0 : index
    %c0_10 = arith.constant 0 : index
    %5 = vector.load %arg0[%c0_7, %c0_8, %c0_9, %c0_10] : memref<3x2x8x1xf32, #tpu.memory_space<vmem>>, vector<1x2x8x1xf32>
    %6 = vector.shape_cast %5 : vector<1x2x8x1xf32> to vector<2x8x1xf32>
    %7 = vector.broadcast %6 : vector<2x8x1xf32> to vector<2x8x128xf32>
    %8 = arith.mulf %4, %7 : vector<2x8x128xf32>
    %c0_11 = arith.constant 0 : index
    %c1 = arith.constant 1 : index
    %c0_12 = arith.constant 0 : index
    %9 = vector.load %arg11[%c0_11, %c1, %c0_12] : memref<2x10x128xf32, #tpu.memory_space<vmem>>, vector<2x8x128xf32>
    tpu.vector_store %arg11[%c0_11, %c1, %c0_12], %8 {strides = array<i32>} : memref<2x10x128xf32, #tpu.memory_space<vmem>>, vector<2x8x128xf32>,
    %cst_13 = arith.constant 0.000000e+00 : f32
    %10 = vector.broadcast %cst_13 : f32 to vector<2x1x128xf32>
    %c0_14 = arith.constant 0 : index
    %c0_15 = arith.constant 0 : index
    %c0_16 = arith.constant 0 : index
    %11 = vector.load %arg12[%c0_14, %c0_15, %c0_16] : memref<2x10x128xf32, #tpu.memory_space<vmem>>, vector<2x1x128xf32>
    tpu.vector_store %arg12[%c0_14, %c0_15, %c0_16], %10 {strides = array<i32>} : memref<2x10x128xf32, #tpu.memory_space<vmem>>, vector<2x1x128xf32>,
    %c0_17 = arith.constant 0 : index
    %c9_18 = arith.constant 9 : index
    %c0_19 = arith.constant 0 : index
    %12 = vector.load %arg12[%c0_17, %c9_18, %c0_19] : memref<2x10x128xf32, #tpu.memory_space<vmem>>, vector<2x1x128xf32>
    tpu.vector_store %arg12[%c0_17, %c9_18, %c0_19], %10 {strides = array<i32>} : memref<2x10x128xf32, #tpu.memory_space<vmem>>, vector<2x1x128xf32>,
    %c0_20 = arith.constant 0 : index
    %c0_21 = arith.constant 0 : index
    %c0_22 = arith.constant 0 : index
    %13 = vector.load %arg11[%c0_20, %c0_21, %c0_22] : memref<2x10x128xf32, #tpu.memory_space<vmem>>, vector<2x10x128xf32>
    %c0_23 = arith.constant 0 : index
    %c0_24 = arith.constant 0 : index
    %14 = vector.load %arg2[%c0_23, %c0_24] : memref<384x128xbf16, #tpu.memory_space<vmem>>, vector<384x128xbf16>
    %15 = vector.extract_strided_slice %13 {offsets = [0, 0, 0], sizes = [2, 8, 128], strides = [1, 1, 1]} : vector<2x10x128xf32> to vector<2x8x128xf32>
    %16 = vector.extract_strided_slice %13 {offsets = [0, 1, 0], sizes = [2, 8, 128], strides = [1, 1, 1]} : vector<2x10x128xf32> to vector<2x8x128xf32>
    %17 = tpu.concatenate %15, %16 in 2 : vector<2x8x128xf32>, vector<2x8x128xf32> -> vector<2x8x256xf32>
    %18 = vector.shape_cast %17 : vector<2x8x256xf32> to vector<16x256xf32>
    %19 = arith.truncf %18 : vector<16x256xf32> to vector<16x256xbf16>
    %20 = vector.extract_strided_slice %14 {offsets = [0, 0], sizes = [256, 128], strides = [1, 1]} : vector<384x128xbf16> to vector<256x128xbf16>
    %cst_25 = arith.constant dense<0.000000e+00> : vector<16x128xf32>
    %21 = tpu.matmul %19, %20, %cst_25 {dimension_numbers = #tpu.dot_dimension_numbers<[1], [0], [0], [1], [0, 0, 1, 1], [], []>} : vector<16x256xbf16>, vector<256x128xbf16>, vector<16x128xf32> -> vector<16x128xf32>
    %22 = vector.extract_strided_slice %13 {offsets = [0, 2, 0], sizes = [2, 8, 128], strides = [1, 1, 1]} : vector<2x10x128xf32> to vector<2x8x128xf32>
    %23 = vector.shape_cast %22 : vector<2x8x128xf32> to vector<16x128xf32>
    %24 = arith.truncf %23 : vector<16x128xf32> to vector<16x128xbf16>
    %25 = vector.extract_strided_slice %14 {offsets = [256, 0], sizes = [128, 128], strides = [1, 1]} : vector<384x128xbf16> to vector<128x128xbf16>
    %cst_26 = arith.constant dense<0.000000e+00> : vector<16x128xf32>
    %26 = tpu.matmul %24, %25, %cst_26 {dimension_numbers = #tpu.dot_dimension_numbers<[1], [0], [0], [1], [0, 0, 1, 1], [], []>} : vector<16x128xbf16>, vector<128x128xbf16>, vector<16x128xf32> -> vector<16x128xf32>
    %27 = arith.addf %21, %26 : vector<16x128xf32>
    %c0_27 = arith.constant 0 : index
    %c0_28 = arith.constant 0 : index
    %c0_29 = arith.constant 0 : index
    %28 = vector.load %arg4[%c0_27, %c0_28, %c0_29] : memref<2x1x128xf32, #tpu.memory_space<vmem>>, vector<1x1x128xf32>
    %29 = vector.shape_cast %28 : vector<1x1x128xf32> to vector<1x128xf32>
    %30 = vector.broadcast %29 : vector<1x128xf32> to vector<16x128xf32>
    %31 = arith.mulf %27, %30 : vector<16x128xf32>
    %c0_30 = arith.constant 0 : index
    %c0_31 = arith.constant 0 : index
    %c0_32 = arith.constant 0 : index
    %32 = vector.load %arg5[%c0_30, %c0_31, %c0_32] : memref<2x1x128xf32, #tpu.memory_space<vmem>>, vector<1x1x128xf32>
    %33 = vector.shape_cast %32 : vector<1x1x128xf32> to vector<1x128xf32>
    %34 = vector.broadcast %33 : vector<1x128xf32> to vector<16x128xf32>
    %35 = arith.addf %31, %34 : vector<16x128xf32>
    %cst_33 = arith.constant 0.000000e+00 : f32
    %36 = vector.broadcast %cst_33 : f32 to vector<16x128xf32>
    %37 = arith.maximumf %35, %36 : vector<16x128xf32>
    %38 = vector.shape_cast %37 : vector<16x128xf32> to vector<2x8x128xf32>
    %c0_34 = arith.constant 0 : index
    %c0_35 = arith.constant 0 : index
    %c0_36 = arith.constant 0 : index
    %c0_37 = arith.constant 0 : index
    %39 = vector.load %arg0[%c0_34, %c0_35, %c0_36, %c0_37] : memref<3x2x8x1xf32, #tpu.memory_space<vmem>>, vector<1x2x8x1xf32>
    %40 = vector.shape_cast %39 : vector<1x2x8x1xf32> to vector<2x8x1xf32>
    %41 = vector.broadcast %40 : vector<2x8x1xf32> to vector<2x8x128xf32>
    %42 = arith.mulf %38, %41 : vector<2x8x128xf32>
    %c0_38 = arith.constant 0 : index
    %c1_39 = arith.constant 1 : index
    %c0_40 = arith.constant 0 : index
    %43 = vector.load %arg12[%c0_38, %c1_39, %c0_40] : memref<2x10x128xf32, #tpu.memory_space<vmem>>, vector<2x8x128xf32>
    tpu.vector_store %arg12[%c0_38, %c1_39, %c0_40], %42 {strides = array<i32>} : memref<2x10x128xf32, #tpu.memory_space<vmem>>, vector<2x8x128xf32>,
    %c0_41 = arith.constant 0 : index
    %c0_42 = arith.constant 0 : index
    %c0_43 = arith.constant 0 : index
    %44 = vector.load %arg12[%c0_41, %c0_42, %c0_43] : memref<2x10x128xf32, #tpu.memory_space<vmem>>, vector<2x10x128xf32>
    %c0_44 = arith.constant 0 : index
    %c0_45 = arith.constant 0 : index
    %c0_46 = arith.constant 0 : index
    %45 = vector.load %arg3[%c0_44, %c0_45, %c0_46] : memref<1x384x128xbf16, #tpu.memory_space<vmem>>, vector<1x384x128xbf16>
    %46 = vector.shape_cast %45 : vector<1x384x128xbf16> to vector<384x128xbf16>
    %47 = vector.extract_strided_slice %44 {offsets = [0, 0, 0], sizes = [2, 8, 128], strides = [1, 1, 1]} : vector<2x10x128xf32> to vector<2x8x128xf32>
    %48 = vector.extract_strided_slice %44 {offsets = [0, 1, 0], sizes = [2, 8, 128], strides = [1, 1, 1]} : vector<2x10x128xf32> to vector<2x8x128xf32>
    %49 = tpu.concatenate %47, %48 in 2 : vector<2x8x128xf32>, vector<2x8x128xf32> -> vector<2x8x256xf32>
    %50 = vector.shape_cast %49 : vector<2x8x256xf32> to vector<16x256xf32>
    %51 = arith.truncf %50 : vector<16x256xf32> to vector<16x256xbf16>
    %52 = vector.extract_strided_slice %46 {offsets = [0, 0], sizes = [256, 128], strides = [1, 1]} : vector<384x128xbf16> to vector<256x128xbf16>
    %cst_47 = arith.constant dense<0.000000e+00> : vector<16x128xf32>
    %53 = tpu.matmul %51, %52, %cst_47 {dimension_numbers = #tpu.dot_dimension_numbers<[1], [0], [0], [1], [0, 0, 1, 1], [], []>} : vector<16x256xbf16>, vector<256x128xbf16>, vector<16x128xf32> -> vector<16x128xf32>
    %54 = vector.extract_strided_slice %44 {offsets = [0, 2, 0], sizes = [2, 8, 128], strides = [1, 1, 1]} : vector<2x10x128xf32> to vector<2x8x128xf32>
    %55 = vector.shape_cast %54 : vector<2x8x128xf32> to vector<16x128xf32>
    %56 = arith.truncf %55 : vector<16x128xf32> to vector<16x128xbf16>
    %57 = vector.extract_strided_slice %46 {offsets = [256, 0], sizes = [128, 128], strides = [1, 1]} : vector<384x128xbf16> to vector<128x128xbf16>
    %cst_48 = arith.constant dense<0.000000e+00> : vector<16x128xf32>
    %58 = tpu.matmul %56, %57, %cst_48 {dimension_numbers = #tpu.dot_dimension_numbers<[1], [0], [0], [1], [0, 0, 1, 1], [], []>} : vector<16x128xbf16>, vector<128x128xbf16>, vector<16x128xf32> -> vector<16x128xf32>
    %59 = arith.addf %53, %58 : vector<16x128xf32>
    %c1_49 = arith.constant 1 : index
    %c0_50 = arith.constant 0 : index
    %c0_51 = arith.constant 0 : index
    %60 = vector.load %arg4[%c1_49, %c0_50, %c0_51] : memref<2x1x128xf32, #tpu.memory_space<vmem>>, vector<1x1x128xf32>
    %61 = vector.shape_cast %60 : vector<1x1x128xf32> to vector<1x128xf32>
    %62 = vector.broadcast %61 : vector<1x128xf32> to vector<16x128xf32>
    %63 = arith.mulf %59, %62 : vector<16x128xf32>
    %c1_52 = arith.constant 1 : index
    %c0_53 = arith.constant 0 : index
    %c0_54 = arith.constant 0 : index
    %64 = vector.load %arg5[%c1_52, %c0_53, %c0_54] : memref<2x1x128xf32, #tpu.memory_space<vmem>>, vector<1x1x128xf32>
    %65 = vector.shape_cast %64 : vector<1x1x128xf32> to vector<1x128xf32>
    %66 = vector.broadcast %65 : vector<1x128xf32> to vector<16x128xf32>
    %67 = arith.addf %63, %66 : vector<16x128xf32>
    %c0_55 = arith.constant 0 : index
    %c0_56 = arith.constant 0 : index
    %c0_57 = arith.constant 0 : index
    %68 = vector.load %arg6[%c0_55, %c0_56, %c0_57] : memref<2x8x128xbf16, #tpu.memory_space<vmem>>, vector<2x8x128xbf16>
    %69 = arith.extf %68 : vector<2x8x128xbf16> to vector<2x8x128xf32>
    %c1_58 = arith.constant 1 : index
    %c0_59 = arith.constant 0 : index
    %c0_60 = arith.constant 0 : index
    %c0_61 = arith.constant 0 : index
    %70 = vector.load %arg0[%c1_58, %c0_59, %c0_60, %c0_61] : memref<3x2x8x1xf32, #tpu.memory_space<vmem>>, vector<1x2x8x1xf32>
    %71 = vector.shape_cast %70 : vector<1x2x8x1xf32> to vector<2x8x1xf32>
    %72 = vector.broadcast %71 : vector<2x8x1xf32> to vector<2x8x128xf32>
    %73 = arith.mulf %69, %72 : vector<2x8x128xf32>
    %74 = vector.shape_cast %73 : vector<2x8x128xf32> to vector<16x128xf32>
    %75 = arith.truncf %74 : vector<16x128xf32> to vector<16x128xbf16>
    %c0_62 = arith.constant 0 : index
    %c0_63 = arith.constant 0 : index
    %c0_64 = arith.constant 0 : index
    %76 = vector.load %arg7[%c0_62, %c0_63, %c0_64] : memref<2x8x128xbf16, #tpu.memory_space<vmem>>, vector<2x8x128xbf16>
    %77 = arith.extf %76 : vector<2x8x128xbf16> to vector<2x8x128xf32>
    %c2 = arith.constant 2 : index
    %c0_65 = arith.constant 0 : index
    %c0_66 = arith.constant 0 : index
    %c0_67 = arith.constant 0 : index
    %78 = vector.load %arg0[%c2, %c0_65, %c0_66, %c0_67] : memref<3x2x8x1xf32, #tpu.memory_space<vmem>>, vector<1x2x8x1xf32>
    %79 = vector.shape_cast %78 : vector<1x2x8x1xf32> to vector<2x8x1xf32>
    %80 = vector.broadcast %79 : vector<2x8x1xf32> to vector<2x8x128xf32>
    %81 = arith.mulf %77, %80 : vector<2x8x128xf32>
    %82 = vector.shape_cast %81 : vector<2x8x128xf32> to vector<16x128xf32>
    %83 = arith.truncf %82 : vector<16x128xf32> to vector<16x128xbf16>
    %c0_68 = arith.constant 0 : index
    %c1_69 = arith.constant 1 : index
    %c0_70 = arith.constant 0 : index
    %84 = vector.load %arg11[%c0_68, %c1_69, %c0_70] : memref<2x10x128xf32, #tpu.memory_space<vmem>>, vector<2x8x128xf32>
    %85 = vector.shape_cast %84 : vector<2x8x128xf32> to vector<16x128xf32>
    %86 = arith.truncf %85 : vector<16x128xf32> to vector<16x128xbf16>
    %87 = tpu.concatenate %75, %83, %86 in 1 : vector<16x128xbf16>, vector<16x128xbf16>, vector<16x128xbf16> -> vector<16x384xbf16>
    %c0_71 = arith.constant 0 : index
    %c0_72 = arith.constant 0 : index
    %88 = vector.load %arg8[%c0_71, %c0_72] : memref<384x128xbf16, #tpu.memory_space<vmem>>, vector<384x128xbf16>
    %cst_73 = arith.constant dense<0.000000e+00> : vector<16x128xf32>
    %89 = tpu.matmul %87, %88, %cst_73 {dimension_numbers = #tpu.dot_dimension_numbers<[1], [0], [0], [1], [0, 0, 1, 1], [], []>} : vector<16x384xbf16>, vector<384x128xbf16>, vector<16x128xf32> -> vector<16x128xf32>
    %c0_74 = arith.constant 0 : index
    %c0_75 = arith.constant 0 : index
    %90 = vector.load %arg9[%c0_74, %c0_75] : memref<1x128xf32, #tpu.memory_space<vmem>>, vector<1x128xf32>
    %91 = vector.broadcast %90 : vector<1x128xf32> to vector<16x128xf32>
    %92 = arith.addf %89, %91 : vector<16x128xf32>
    %93 = arith.addf %67, %92 : vector<16x128xf32>
    %cst_76 = arith.constant 0.000000e+00 : f32
    %94 = vector.broadcast %cst_76 : f32 to vector<16x128xf32>
    %95 = arith.maximumf %93, %94 : vector<16x128xf32>
    %96 = vector.shape_cast %95 : vector<16x128xf32> to vector<2x8x128xf32>
    %97 = arith.truncf %96 : vector<2x8x128xf32> to vector<2x8x128xbf16>
    %c0_77 = arith.constant 0 : index
    %c0_78 = arith.constant 0 : index
    %c0_79 = arith.constant 0 : index
    %98 = vector.load %arg10[%c0_77, %c0_78, %c0_79] : memref<2x8x128xbf16, #tpu.memory_space<vmem>>, vector<2x8x128xbf16>
    tpu.vector_store %arg10[%c0_77, %c0_78, %c0_79], %97 {strides = array<i32>} : memref<2x8x128xbf16, #tpu.memory_space<vmem>>, vector<2x8x128xbf16>,
    return
  }
}

</mosaic_0001>

<llo_original>
// kernel: _lambda_.4
$region0: #{_lambda_.4}
  #allocation0 [shape = 'u32[]', space=smem, size = 0x4, offset = 0x4, fixed_abs, tag = 'smem constant byte address 0x4 - core index']
  #allocation1 [shape = 'u32[144,128]{1,0:T(1,128)}', space=vmem, size = 0x12000, scoped, tag = 'internal scratch']
  %s0 = inlined_call_operand.vmem [shape: f32[2,10,256], index: 0, kind: input, shape index: {}]
  %s1 = inlined_call_operand.vmem [shape: bf16[768,128], index: 1, kind: input, shape index: {}]
  %s2 = inlined_call_operand.vmem [shape: f32[1,1,128], index: 2, kind: input, shape index: {}]
  %s3 = inlined_call_operand.vmem [shape: f32[1,1,128], index: 3, kind: input, shape index: {}]
  %s4 = inlined_call_operand.vmem [shape: bf16[2,8,128], index: 4, kind: output, shape index: {}]
  %s5 = sld [smem:[#allocation0]]
  $region26: #{_lambda_.4} parent=0
    _
  %s7 = ssub.s32 1, %s5
  %s8 = scalar_select 0, %s7, %s5
  // Predicated region
  $region2: #{_lambda_.4} parent=0 // pred_check
    _
  $region3: #{_lambda_.4} parent=0 // pred_check_branch
    %10 = sbr.rel (0) target = $region5
  $region4: #{_lambda_.4} parent=0 // pred_region
    _
  $region5: #{_lambda_.4} parent=0 // pred_fallthru
    _
  // Predicated region
  $region6: #{_lambda_.4} parent=0 // pred_check
    _
  $region7: #{_lambda_.4} parent=0 // pred_check_branch
    %12 = sbr.rel (0) target = $region9
  $region8: #{_lambda_.4} parent=0 // pred_region
    _
  $region9: #{_lambda_.4} parent=0 // pred_fallthru
    _
  // Predicated region
  $region10: #{_lambda_.4} parent=0 // pred_check
    _
  $region11: #{_lambda_.4} parent=0 // pred_check_branch
    %14 = sbr.rel (0) target = $region13
  $region12: #{_lambda_.4} parent=0 // pred_region
    _
  $region13: #{_lambda_.4} parent=0 // pred_fallthru
    _
  // Predicated region
  $region14: #{_lambda_.4} parent=0 // pred_check
    _
  $region15: #{_lambda_.4} parent=0 // pred_check_branch
    %16 = sbr.rel (0) target = $region17
  $region16: #{_lambda_.4} parent=0 // pred_region
    _
  $region17: #{_lambda_.4} parent=0 // pred_fallthru
    _
  %v18 = vld [vmem:[%s0] sm:$0xff]
  %v19 = vld [vmem:[%s0 + $0x8] sm:$0xff]
  %v20 = vld [vmem:[%s0 + $0x10] sm:$0x3]
  %v21 = vld [vmem:[%s0 + $0x18] sm:$0x3]
  %v22 = vld [vmem:[%s0 + $0x20] sm:$0xff]
  %v23 = vld [vmem:[%s0 + $0x28] sm:$0xff]
  %v24 = vld [vmem:[%s0 + $0x30] sm:$0x3]
  %v25 = vld [vmem:[%s0 + $0x38] sm:$0x3]
  %v26 = vld [vmem:[%s1] sm:$0xf]
  %v27 = vld [vmem:[%s1 + $0x4] sm:$0xf]
  %v28 = vld [vmem:[%s1 + $0x8] sm:$0xf]
  %v29 = vld [vmem:[%s1 + $0xc] sm:$0xf]
  %v30 = vld [vmem:[%s1 + $0x10] sm:$0xf]
  %v31 = vld [vmem:[%s1 + $0x14] sm:$0xf]
  %v32 = vld [vmem:[%s1 + $0x18] sm:$0xf]
  %v33 = vld [vmem:[%s1 + $0x1c] sm:$0xf]
  %v34 = vld [vmem:[%s1 + $0x20] sm:$0xf]
  %v35 = vld [vmem:[%s1 + $0x24] sm:$0xf]
  %v36 = vld [vmem:[%s1 + $0x28] sm:$0xf]
  %v37 = vld [vmem:[%s1 + $0x2c] sm:$0xf]
  %v38 = vld [vmem:[%s1 + $0x30] sm:$0xf]
  %v39 = vld [vmem:[%s1 + $0x34] sm:$0xf]
  %v40 = vld [vmem:[%s1 + $0x38] sm:$0xf]
  %v41 = vld [vmem:[%s1 + $0x3c] sm:$0xf]
  %v42 = vld [vmem:[%s1 + $0x40] sm:$0xf]
  %v43 = vld [vmem:[%s1 + $0x44] sm:$0xf]
  %v44 = vld [vmem:[%s1 + $0x48] sm:$0xf]
  %v45 = vld [vmem:[%s1 + $0x4c] sm:$0xf]
  %v46 = vld [vmem:[%s1 + $0x50] sm:$0xf]
  %v47 = vld [vmem:[%s1 + $0x54] sm:$0xf]
  %v48 = vld [vmem:[%s1 + $0x58] sm:$0xf]
  %v49 = vld [vmem:[%s1 + $0x5c] sm:$0xf]
  %v50 = vld [vmem:[%s1 + $0x60] sm:$0xf]
  %v51 = vld [vmem:[%s1 + $0x64] sm:$0xf]
  %v52 = vld [vmem:[%s1 + $0x68] sm:$0xf]
  %v53 = vld [vmem:[%s1 + $0x6c] sm:$0xf]
  %v54 = vld [vmem:[%s1 + $0x70] sm:$0xf]
  %v55 = vld [vmem:[%s1 + $0x74] sm:$0xf]
  %v56 = vld [vmem:[%s1 + $0x78] sm:$0xf]
  %v57 = vld [vmem:[%s1 + $0x7c] sm:$0xf]
  %v58 = vld [vmem:[%s1 + $0x80] sm:$0xf]
  %v59 = vld [vmem:[%s1 + $0x84] sm:$0xf]
  %v60 = vld [vmem:[%s1 + $0x88] sm:$0xf]
  %v61 = vld [vmem:[%s1 + $0x8c] sm:$0xf]
  %v62 = vld [vmem:[%s1 + $0x90] sm:$0xf]
  %v63 = vld [vmem:[%s1 + $0x94] sm:$0xf]
  %v64 = vld [vmem:[%s1 + $0x98] sm:$0xf]
  %v65 = vld [vmem:[%s1 + $0x9c] sm:$0xf]
  %v66 = vld [vmem:[%s1 + $0xa0] sm:$0xf]
  %v67 = vld [vmem:[%s1 + $0xa4] sm:$0xf]
  %v68 = vld [vmem:[%s1 + $0xa8] sm:$0xf]
  %v69 = vld [vmem:[%s1 + $0xac] sm:$0xf]
  %v70 = vld [vmem:[%s1 + $0xb0] sm:$0xf]
  %v71 = vld [vmem:[%s1 + $0xb4] sm:$0xf]
  %v72 = vld [vmem:[%s1 + $0xb8] sm:$0xf]
  %v73 = vld [vmem:[%s1 + $0xbc] sm:$0xf]
  %v74 = vld [vmem:[%s1 + $0xc0] sm:$0xf]
  %v75 = vld [vmem:[%s1 + $0xc4] sm:$0xf]
  %v76 = vld [vmem:[%s1 + $0xc8] sm:$0xf]
  %v77 = vld [vmem:[%s1 + $0xcc] sm:$0xf]
  %v78 = vld [vmem:[%s1 + $0xd0] sm:$0xf]
  %v79 = vld [vmem:[%s1 + $0xd4] sm:$0xf]
  %v80 = vld [vmem:[%s1 + $0xd8] sm:$0xf]
  %v81 = vld [vmem:[%s1 + $0xdc] sm:$0xf]
  %v82 = vld [vmem:[%s1 + $0xe0] sm:$0xf]
  %v83 = vld [vmem:[%s1 + $0xe4] sm:$0xf]
  %v84 = vld [vmem:[%s1 + $0xe8] sm:$0xf]
  %v85 = vld [vmem:[%s1 + $0xec] sm:$0xf]
  %v86 = vld [vmem:[%s1 + $0xf0] sm:$0xf]
  %v87 = vld [vmem:[%s1 + $0xf4] sm:$0xf]
  %v88 = vld [vmem:[%s1 + $0xf8] sm:$0xf]
  %v89 = vld [vmem:[%s1 + $0xfc] sm:$0xf]
  %v90 = vld [vmem:[%s1 + $0x100] sm:$0xf]
  %v91 = vld [vmem:[%s1 + $0x104] sm:$0xf]
  %v92 = vld [vmem:[%s1 + $0x108] sm:$0xf]
  %v93 = vld [vmem:[%s1 + $0x10c] sm:$0xf]
  %v94 = vld [vmem:[%s1 + $0x110] sm:$0xf]
  %v95 = vld [vmem:[%s1 + $0x114] sm:$0xf]
  %v96 = vld [vmem:[%s1 + $0x118] sm:$0xf]
  %v97 = vld [vmem:[%s1 + $0x11c] sm:$0xf]
  %v98 = vld [vmem:[%s1 + $0x120] sm:$0xf]
  %v99 = vld [vmem:[%s1 + $0x124] sm:$0xf]
  %v100 = vld [vmem:[%s1 + $0x128] sm:$0xf]
  %v101 = vld [vmem:[%s1 + $0x12c] sm:$0xf]
  %v102 = vld [vmem:[%s1 + $0x130] sm:$0xf]
  %v103 = vld [vmem:[%s1 + $0x134] sm:$0xf]
  %v104 = vld [vmem:[%s1 + $0x138] sm:$0xf]
  %v105 = vld [vmem:[%s1 + $0x13c] sm:$0xf]
  %v106 = vld [vmem:[%s1 + $0x140] sm:$0xf]
  %v107 = vld [vmem:[%s1 + $0x144] sm:$0xf]
  %v108 = vld [vmem:[%s1 + $0x148] sm:$0xf]
  %v109 = vld [vmem:[%s1 + $0x14c] sm:$0xf]
  %v110 = vld [vmem:[%s1 + $0x150] sm:$0xf]
  %v111 = vld [vmem:[%s1 + $0x154] sm:$0xf]
  %v112 = vld [vmem:[%s1 + $0x158] sm:$0xf]
  %v113 = vld [vmem:[%s1 + $0x15c] sm:$0xf]
  %v114 = vld [vmem:[%s1 + $0x160] sm:$0xf]
  %v115 = vld [vmem:[%s1 + $0x164] sm:$0xf]
  %v116 = vld [vmem:[%s1 + $0x168] sm:$0xf]
  %v117 = vld [vmem:[%s1 + $0x16c] sm:$0xf]
  %v118 = vld [vmem:[%s1 + $0x170] sm:$0xf]
  %v119 = vld [vmem:[%s1 + $0x174] sm:$0xf]
  %v120 = vld [vmem:[%s1 + $0x178] sm:$0xf]
  %v121 = vld [vmem:[%s1 + $0x17c] sm:$0xf]
  %v122 = vpack.c.bf16 %v22, %v18
  %v123 = vpack.c.bf16 %v23, %v19
  %vm132 = vcmask 1046528
  %v133 = vrot.slane %v18, 1
  %v134 = vrot.slane %v20, 1
  %v135 = vsel %vm132, %v133, %v134
  %v136 = vrot.slane %v19, 1
  %v137 = vrot.slane %v21, 1
  %v138 = vsel %vm132, %v136, %v137
  %v139 = vrot.slane %v22, 1
  %v140 = vrot.slane %v24, 1
  %v141 = vsel %vm132, %v139, %v140
  %v142 = vrot.slane %v23, 1
  %v143 = vrot.slane %v25, 1
  %v144 = vsel %vm132, %v142, %v143
  %v149 = vpack.c.bf16 %v141, %v135
  %v150 = vpack.c.bf16 %v144, %v138
  %v183 = vunpack.c.l.b16 %v58
  %v184 = vunpack.c.l.b16 %v59
  %v185 = vunpack.c.l.b16 %v60
  %v186 = vunpack.c.l.b16 %v61
  %v187 = vunpack.c.l.b16 %v62
  %v188 = vunpack.c.l.b16 %v63
  %v189 = vunpack.c.l.b16 %v64
  %v190 = vunpack.c.l.b16 %v65
  %v191 = vunpack.c.l.b16 %v66
  %v192 = vunpack.c.l.b16 %v67
  %v193 = vunpack.c.l.b16 %v68
  %v194 = vunpack.c.l.b16 %v69
  %v195 = vunpack.c.l.b16 %v70
  %v196 = vunpack.c.l.b16 %v71
  %v197 = vunpack.c.l.b16 %v72
  %v198 = vunpack.c.l.b16 %v73
  %v199 = vunpack.c.l.b16 %v74
  %v200 = vunpack.c.l.b16 %v75
  %v201 = vunpack.c.l.b16 %v76
  %v202 = vunpack.c.l.b16 %v77
  %v203 = vunpack.c.l.b16 %v78
  %v204 = vunpack.c.l.b16 %v79
  %v205 = vunpack.c.l.b16 %v80
  %v206 = vunpack.c.l.b16 %v81
  %v207 = vunpack.c.l.b16 %v82
  %v208 = vunpack.c.l.b16 %v83
  %v209 = vunpack.c.l.b16 %v84
  %v210 = vunpack.c.l.b16 %v85
  %v211 = vunpack.c.l.b16 %v86
  %v212 = vunpack.c.l.b16 %v87
  %v213 = vunpack.c.l.b16 %v88
  %v214 = vunpack.c.l.b16 %v89
  %v215 = vpack.c.b16 %v184, %v183
  %v216 = vpack.c.b16 %v186, %v185
  %v217 = vpack.c.b16 %v188, %v187
  %v218 = vpack.c.b16 %v190, %v189
  %v219 = vpack.c.b16 %v192, %v191
  %v220 = vpack.c.b16 %v194, %v193
  %v221 = vpack.c.b16 %v196, %v195
  %v222 = vpack.c.b16 %v198, %v197
  %v223 = vpack.c.b16 %v200, %v199
  %v224 = vpack.c.b16 %v202, %v201
  %v225 = vpack.c.b16 %v204, %v203
  %v226 = vpack.c.b16 %v206, %v205
  %v227 = vpack.c.b16 %v208, %v207
  %v228 = vpack.c.b16 %v210, %v209
  %v229 = vpack.c.b16 %v212, %v211
  %v230 = vpack.c.b16 %v214, %v213
  %247 = vmatprep.subr.bf16.mxu0 0
  %248 = vmatpush1.bf16.msra.mxu0 %v222
  %249 = vmatprep.subr.bf16.mxu0 0
  %250 = vmatpush1.bf16.msra.mxu0 %v221
  %251 = vmatprep.subr.bf16.mxu0 0
  %252 = vmatpush1.bf16.msra.mxu0 %v220
  %253 = vmatprep.subr.bf16.mxu0 0
  %254 = vmatpush1.bf16.msra.mxu0 %v219
  %255 = vmatprep.subr.bf16.mxu0 0
  %256 = vmatpush1.bf16.msra.mxu0 %v218
  %257 = vmatprep.subr.bf16.mxu0 0
  %258 = vmatpush1.bf16.msra.mxu0 %v217
  %259 = vmatprep.subr.bf16.mxu0 0
  %260 = vmatpush1.bf16.msra.mxu0 %v216
  %261 = vmatprep.subr.bf16.mxu0 0
  %262 = vmatpush1.bf16.msra.mxu0 %v215
  %263 = vmatprep.subr.bf16.mxu0 0
  %264 = vmatpush2.bf16.msra.mxu0 %v230
  %265 = vmatprep.subr.bf16.mxu0 0
  %266 = vmatpush2.bf16.msra.mxu0 %v229
  %267 = vmatprep.subr.bf16.mxu0 0
  %268 = vmatpush2.bf16.msra.mxu0 %v228
  %269 = vmatprep.subr.bf16.mxu0 0
  %270 = vmatpush2.bf16.msra.mxu0 %v227
  %271 = vmatprep.subr.bf16.mxu0 0
  %272 = vmatpush2.bf16.msra.mxu0 %v226
  %273 = vmatprep.subr.bf16.mxu0 0
  %274 = vmatpush2.bf16.msra.mxu0 %v225
  %275 = vmatprep.subr.bf16.mxu0 0
  %276 = vmatpush2.bf16.msra.mxu0 %v224
  %277 = vmatprep.subr.bf16.mxu0 0
  %278 = vmatpush2.bf16.msra.mxu0 %v223
  %279 = vmatprep.mubr.bf16.mxu0 %v150
  %280 = vmatmul.mubr.bf16.gmra.mxu0 %v149
  %v281 = vpop.f32.mrf.mxu0
  %v282 = vadd.f32 0.0, %v281
  %v283 = vpop.f32.mrf.mxu0
  %v284 = vpop.f32.mrf.mxu0
  %v285 = vadd.f32 0.0, %v284
  %v286 = vpop.f32.mrf.mxu0
  %287 = vdwg.mxu0
  %v320 = vunpack.c.l.b16 %v26
  %v321 = vunpack.c.l.b16 %v27
  %v322 = vunpack.c.l.b16 %v28
  %v323 = vunpack.c.l.b16 %v29
  %v324 = vunpack.c.l.b16 %v30
  %v325 = vunpack.c.l.b16 %v31
  %v326 = vunpack.c.l.b16 %v32
  %v327 = vunpack.c.l.b16 %v33
  %v328 = vunpack.c.l.b16 %v34
  %v329 = vunpack.c.l.b16 %v35
  %v330 = vunpack.c.l.b16 %v36
  %v331 = vunpack.c.l.b16 %v37
  %v332 = vunpack.c.l.b16 %v38
  %v333 = vunpack.c.l.b16 %v39
  %v334 = vunpack.c.l.b16 %v40
  %v335 = vunpack.c.l.b16 %v41
  %v336 = vunpack.c.l.b16 %v42
  %v337 = vunpack.c.l.b16 %v43
  %v338 = vunpack.c.l.b16 %v44
  %v339 = vunpack.c.l.b16 %v45
  %v340 = vunpack.c.l.b16 %v46
  %v341 = vunpack.c.l.b16 %v47
  %v342 = vunpack.c.l.b16 %v48
  %v343 = vunpack.c.l.b16 %v49
  %v344 = vunpack.c.l.b16 %v50
  %v345 = vunpack.c.l.b16 %v51
  %v346 = vunpack.c.l.b16 %v52
  %v347 = vunpack.c.l.b16 %v53
  %v348 = vunpack.c.l.b16 %v54
  %v349 = vunpack.c.l.b16 %v55
  %v350 = vunpack.c.l.b16 %v56
  %v351 = vunpack.c.l.b16 %v57
  %v352 = vpack.c.b16 %v321, %v320
  %v353 = vpack.c.b16 %v323, %v322
  %v354 = vpack.c.b16 %v325, %v324
  %v355 = vpack.c.b16 %v327, %v326
  %v356 = vpack.c.b16 %v329, %v328
  %v357 = vpack.c.b16 %v331, %v330
  %v358 = vpack.c.b16 %v333, %v332
  %v359 = vpack.c.b16 %v335, %v334
  %v360 = vpack.c.b16 %v337, %v336
  %v361 = vpack.c.b16 %v339, %v338
  %v362 = vpack.c.b16 %v341, %v340
  %v363 = vpack.c.b16 %v343, %v342
  %v364 = vpack.c.b16 %v345, %v344
  %v365 = vpack.c.b16 %v347, %v346
  %v366 = vpack.c.b16 %v349, %v348
  %v367 = vpack.c.b16 %v351, %v350
  %384 = vmatprep.subr.bf16.mxu0 0
  %385 = vmatpush1.bf16.msra.mxu0 %v359
  %386 = vmatprep.subr.bf16.mxu0 0
  %387 = vmatpush1.bf16.msra.mxu0 %v358
  %388 = vmatprep.subr.bf16.mxu0 0
  %389 = vmatpush1.bf16.msra.mxu0 %v357
  %390 = vmatprep.subr.bf16.mxu0 0
  %391 = vmatpush1.bf16.msra.mxu0 %v356
  %392 = vmatprep.subr.bf16.mxu0 0
  %393 = vmatpush1.bf16.msra.mxu0 %v355
  %394 = vmatprep.subr.bf16.mxu0 0
  %395 = vmatpush1.bf16.msra.mxu0 %v354
  %396 = vmatprep.subr.bf16.mxu0 0
  %397 = vmatpush1.bf16.msra.mxu0 %v353
  %398 = vmatprep.subr.bf16.mxu0 0
  %399 = vmatpush1.bf16.msra.mxu0 %v352
  %400 = vmatprep.subr.bf16.mxu0 0
  %401 = vmatpush2.bf16.msra.mxu0 %v367
  %402 = vmatprep.subr.bf16.mxu0 0
  %403 = vmatpush2.bf16.msra.mxu0 %v366
  %404 = vmatprep.subr.bf16.mxu0 0
  %405 = vmatpush2.bf16.msra.mxu0 %v365
  %406 = vmatprep.subr.bf16.mxu0 0
  %407 = vmatpush2.bf16.msra.mxu0 %v364
  %408 = vmatprep.subr.bf16.mxu0 0
  %409 = vmatpush2.bf16.msra.mxu0 %v363
  %410 = vmatprep.subr.bf16.mxu0 0
  %411 = vmatpush2.bf16.msra.mxu0 %v362
  %412 = vmatprep.subr.bf16.mxu0 0
  %413 = vmatpush2.bf16.msra.mxu0 %v361
  %414 = vmatprep.subr.bf16.mxu0 0
  %415 = vmatpush2.bf16.msra.mxu0 %v360
  %416 = vmatprep.mubr.bf16.mxu0 %v123
  %417 = vmatmul.mubr.bf16.gmra.mxu0 %v122
  %v418 = vpop.f32.mrf.mxu0
  %v419 = vadd.f32 %v282, %v418
  %v420 = vpop.f32.mrf.mxu0
  %v421 = vpop.f32.mrf.mxu0
  %v422 = vadd.f32 %v285, %v421
  %v423 = vpop.f32.mrf.mxu0
  %424 = vdwg.mxu0
  %vm425 = vcmask 1045504
  %v426 = vrot.slane %v18, 2
  %v427 = vrot.slane %v20, 2
  %v428 = vsel %vm425, %v426, %v427
  %v429 = vrot.slane %v19, 2
  %v430 = vrot.slane %v21, 2
  %v431 = vsel %vm425, %v429, %v430
  %v432 = vrot.slane %v22, 2
  %v433 = vrot.slane %v24, 2
  %v434 = vsel %vm425, %v432, %v433
  %v435 = vrot.slane %v23, 2
  %v436 = vrot.slane %v25, 2
  %v437 = vsel %vm425, %v435, %v436
  %v442 = vpack.c.bf16 %v434, %v428
  %v443 = vpack.c.bf16 %v437, %v431
  %v476 = vunpack.c.l.b16 %v90
  %v477 = vunpack.c.l.b16 %v91
  %v478 = vunpack.c.l.b16 %v92
  %v479 = vunpack.c.l.b16 %v93
  %v480 = vunpack.c.l.b16 %v94
  %v481 = vunpack.c.l.b16 %v95
  %v482 = vunpack.c.l.b16 %v96
  %v483 = vunpack.c.l.b16 %v97
  %v484 = vunpack.c.l.b16 %v98
  %v485 = vunpack.c.l.b16 %v99
  %v486 = vunpack.c.l.b16 %v100
  %v487 = vunpack.c.l.b16 %v101
  %v488 = vunpack.c.l.b16 %v102
  %v489 = vunpack.c.l.b16 %v103
  %v490 = vunpack.c.l.b16 %v104
  %v491 = vunpack.c.l.b16 %v105
  %v492 = vunpack.c.l.b16 %v106
  %v493 = vunpack.c.l.b16 %v107
  %v494 = vunpack.c.l.b16 %v108
  %v495 = vunpack.c.l.b16 %v109
  %v496 = vunpack.c.l.b16 %v110
  %v497 = vunpack.c.l.b16 %v111
  %v498 = vunpack.c.l.b16 %v112
  %v499 = vunpack.c.l.b16 %v113
  %v500 = vunpack.c.l.b16 %v114
  %v501 = vunpack.c.l.b16 %v115
  %v502 = vunpack.c.l.b16 %v116
  %v503 = vunpack.c.l.b16 %v117
  %v504 = vunpack.c.l.b16 %v118
  %v505 = vunpack.c.l.b16 %v119
  %v506 = vunpack.c.l.b16 %v120
  %v507 = vunpack.c.l.b16 %v121
  %v508 = vpack.c.b16 %v477, %v476
  %v509 = vpack.c.b16 %v479, %v478
  %v510 = vpack.c.b16 %v481, %v480
  %v511 = vpack.c.b16 %v483, %v482
  %v512 = vpack.c.b16 %v485, %v484
  %v513 = vpack.c.b16 %v487, %v486
  %v514 = vpack.c.b16 %v489, %v488
  %v515 = vpack.c.b16 %v491, %v490
  %v516 = vpack.c.b16 %v493, %v492
  %v517 = vpack.c.b16 %v495, %v494
  %v518 = vpack.c.b16 %v497, %v496
  %v519 = vpack.c.b16 %v499, %v498
  %v520 = vpack.c.b16 %v501, %v500
  %v521 = vpack.c.b16 %v503, %v502
  %v522 = vpack.c.b16 %v505, %v504
  %v523 = vpack.c.b16 %v507, %v506
  %540 = vmatprep.subr.bf16.mxu0 0
  %541 = vmatpush1.bf16.msra.mxu0 %v515
  %542 = vmatprep.subr.bf16.mxu0 0
  %543 = vmatpush1.bf16.msra.mxu0 %v514
  %544 = vmatprep.subr.bf16.mxu0 0
  %545 = vmatpush1.bf16.msra.mxu0 %v513
  %546 = vmatprep.subr.bf16.mxu0 0
  %547 = vmatpush1.bf16.msra.mxu0 %v512
  %548 = vmatprep.subr.bf16.mxu0 0
  %549 = vmatpush1.bf16.msra.mxu0 %v511
  %550 = vmatprep.subr.bf16.mxu0 0
  %551 = vmatpush1.bf16.msra.mxu0 %v510
  %552 = vmatprep.subr.bf16.mxu0 0
  %553 = vmatpush1.bf16.msra.mxu0 %v509
  %554 = vmatprep.subr.bf16.mxu0 0
  %555 = vmatpush1.bf16.msra.mxu0 %v508
  %556 = vmatprep.subr.bf16.mxu0 0
  %557 = vmatpush2.bf16.msra.mxu0 %v523
  %558 = vmatprep.subr.bf16.mxu0 0
  %559 = vmatpush2.bf16.msra.mxu0 %v522
  %560 = vmatprep.subr.bf16.mxu0 0
  %561 = vmatpush2.bf16.msra.mxu0 %v521
  %562 = vmatprep.subr.bf16.mxu0 0
  %563 = vmatpush2.bf16.msra.mxu0 %v520
  %564 = vmatprep.subr.bf16.mxu0 0
  %565 = vmatpush2.bf16.msra.mxu0 %v519
  %566 = vmatprep.subr.bf16.mxu0 0
  %567 = vmatpush2.bf16.msra.mxu0 %v518
  %568 = vmatprep.subr.bf16.mxu0 0
  %569 = vmatpush2.bf16.msra.mxu0 %v517
  %570 = vmatprep.subr.bf16.mxu0 0
  %571 = vmatpush2.bf16.msra.mxu0 %v516
  %572 = vmatprep.mubr.bf16.mxu0 %v443
  %573 = vmatmul.mubr.bf16.gmra.mxu0 %v442
  %v574 = vpop.f32.mrf.mxu0
  %v575 = vadd.f32 0.0, %v574
  %v576 = vpop.f32.mrf.mxu0
  %v577 = vpop.f32.mrf.mxu0
  %v578 = vadd.f32 0.0, %v577
  %v579 = vpop.f32.mrf.mxu0
  %580 = vdwg.mxu0
  %v581 = vadd.f32 %v419, %v575
  %v582 = vadd.f32 %v422, %v578
  %v583 = vld [vmem:[%s2] sm:$0x1]
  %v585 = vlaneseq
  %v586 = vshrl.u32 %v585, 7
  %v587 = vsub.s32 0, %v586
  %v588 = vrot.slane %v583, %v587
  %v590 = vmul.f32 %v581, %v588
  %v591 = vmul.f32 %v582, %v588
  %v592 = vld [vmem:[%s3] sm:$0x1]
  %v594 = vlaneseq
  %v595 = vshrl.u32 %v594, 7
  %v596 = vsub.s32 0, %v595
  %v597 = vrot.slane %v592, %v596
  %v599 = vadd.f32 %v590, %v597
  %v600 = vadd.f32 %v591, %v597
  %v601 = vmax.f32 %v599, 0.0
  %v602 = vmax.f32 %v600, 0.0
  %v603 = vpack.c.bf16 %v601, %v601
  %v604 = vpack.c.bf16 %v602, %v602
  %605 = vst [vmem:[%s4] sm:$0xf] %v603
  %606 = vst [vmem:[%s4 + $0x4] sm:$0xf] %v604
  // Predicated region
  $region18: #{_lambda_.4} parent=0 // pred_check
    _
  $region19: #{_lambda_.4} parent=0 // pred_check_branch
    %608 = sbr.rel (0) target = $region21
  $region20: #{_lambda_.4} parent=0 // pred_region
    _
  $region21: #{_lambda_.4} parent=0 // pred_fallthru
    _
  // Predicated region
  $region22: #{_lambda_.4} parent=0 // pred_check
    _
  $region23: #{_lambda_.4} parent=0 // pred_check_branch
    %610 = sbr.rel (0) target = $region25
  $region24: #{_lambda_.4} parent=0 // pred_region
    _
  $region25: #{_lambda_.4} parent=0 // pred_fallthru
    _

// kernel: _lambda_.5
$region0: #{_lambda_.5}
  #allocation0 [shape = 'u32[]', space=smem, size = 0x4, offset = 0x4, fixed_abs, tag = 'smem constant byte address 0x4 - core index']
  #allocation1 [shape = 'u32[144,128]{1,0:T(1,128)}', space=vmem, size = 0x12000, scoped, tag = 'internal scratch']
  #allocation2 [shape = 'f32[2,10,128]{2,1,0:T(8,128)}', space=vmem, size = 0x4000, scoped, tag = 'scratch operand']
  #allocation3 [shape = 'f32[2,10,128]{2,1,0:T(8,128)}', space=vmem, size = 0x4000, scoped, tag = 'scratch operand']
  %s0 = inlined_call_operand.vmem [shape: f32[1,2,8,1], index: 0, kind: input, shape index: {}]
  %s1 = inlined_call_operand.vmem [shape: bf16[2,8,128], index: 1, kind: input, shape index: {}]
  %s2 = inlined_call_operand.vmem [shape: bf16[384,128], index: 2, kind: input, shape index: {}]
  %s3 = inlined_call_operand.vmem [shape: bf16[1,384,128], index: 3, kind: input, shape index: {}]
  %s4 = inlined_call_operand.vmem [shape: f32[2,1,128], index: 4, kind: input, shape index: {}]
  %s5 = inlined_call_operand.vmem [shape: f32[2,1,128], index: 5, kind: input, shape index: {}]
  %s6 = inlined_call_operand.vmem [shape: bf16[128,128], index: 6, kind: input, shape index: {}]
  %s7 = inlined_call_operand.vmem [shape: f32[1,128], index: 7, kind: input, shape index: {}]
  %s8 = inlined_call_operand.vmem [shape: bf16[2,8,128], index: 8, kind: output, shape index: {}]
  %s9 = sld [smem:[#allocation0]]
  $region42: #{_lambda_.5} parent=0
    _
  %s11 = ssub.s32 1, %s9
  %s12 = scalar_select 0, %s11, %s9
  // Predicated region
  $region2: #{_lambda_.5} parent=0 // pred_check
    _
  $region3: #{_lambda_.5} parent=0 // pred_check_branch
    %14 = sbr.rel (0) target = $region5
  $region4: #{_lambda_.5} parent=0 // pred_region
    _
  $region5: #{_lambda_.5} parent=0 // pred_fallthru
    _
  // Predicated region
  $region6: #{_lambda_.5} parent=0 // pred_check
    _
  $region7: #{_lambda_.5} parent=0 // pred_check_branch
    %16 = sbr.rel (0) target = $region9
  $region8: #{_lambda_.5} parent=0 // pred_region
    _
  $region9: #{_lambda_.5} parent=0 // pred_fallthru
    _
  // Predicated region
  $region10: #{_lambda_.5} parent=0 // pred_check
    _
  $region11: #{_lambda_.5} parent=0 // pred_check_branch
    %18 = sbr.rel (0) target = $region13
  $region12: #{_lambda_.5} parent=0 // pred_region
    _
  $region13: #{_lambda_.5} parent=0 // pred_fallthru
    _
  // Predicated region
  $region14: #{_lambda_.5} parent=0 // pred_check
    _
  $region15: #{_lambda_.5} parent=0 // pred_check_branch
    %20 = sbr.rel (0) target = $region17
  $region16: #{_lambda_.5} parent=0 // pred_region
    _
  $region17: #{_lambda_.5} parent=0 // pred_fallthru
    _
  // Predicated region
  $region18: #{_lambda_.5} parent=0 // pred_check
    _
  $region19: #{_lambda_.5} parent=0 // pred_check_branch
    %22 = sbr.rel (0) target = $region21
  $region20: #{_lambda_.5} parent=0 // pred_region
    _
  $region21: #{_lambda_.5} parent=0 // pred_fallthru
    _
  // Predicated region
  $region22: #{_lambda_.5} parent=0 // pred_check
    _
  $region23: #{_lambda_.5} parent=0 // pred_check_branch
    %24 = sbr.rel (0) target = $region25
  $region24: #{_lambda_.5} parent=0 // pred_region
    _
  $region25: #{_lambda_.5} parent=0 // pred_fallthru
    _
  // Predicated region
  $region26: #{_lambda_.5} parent=0 // pred_check
    _
  $region27: #{_lambda_.5} parent=0 // pred_check_branch
    %26 = sbr.rel (0) target = $region29
  $region28: #{_lambda_.5} parent=0 // pred_region
    _
  $region29: #{_lambda_.5} parent=0 // pred_fallthru
    _
  // Predicated region
  $region30: #{_lambda_.5} parent=0 // pred_check
    _
  $region31: #{_lambda_.5} parent=0 // pred_check_branch
    %28 = sbr.rel (0) target = $region33
  $region32: #{_lambda_.5} parent=0 // pred_region
    _
  $region33: #{_lambda_.5} parent=0 // pred_fallthru
    _
  %30 = vst [vmem:[#allocation2] sm:$0x1] 0.0
  %31 = vst [vmem:[#allocation2 + $0x10] sm:$0x1] 0.0
  %32 = vst [vmem:[#allocation2 + $0x9] sm:$0x1] 0.0
  %33 = vst [vmem:[#allocation2 + $0x19] sm:$0x1] 0.0
  %v34 = vld [vmem:[%s1] sm:$0xf]
  %v35 = vld [vmem:[%s1 + $0x4] sm:$0xf]
  %v36 = vunpack.c.l.bf16 %v34
  %v37 = vunpack.c.l.bf16 %v35
  %v38 = vld [vmem:[%s0] sm:$0xff]
  %v39 = vld [vmem:[%s0 + $0x8] sm:$0xff]
  %41 = vset.pattern.permute.xlu0 0
  %42 = vperm.xlu0 %41, %v38
  %v43 = vpop.permute.xlu0 %42
  %46 = vset.pattern.permute.xlu0 0
  %47 = vperm.xlu0 %46, %v39
  %v48 = vpop.permute.xlu0 %47
  %v50 = vmul.f32 %v36, %v43
  %v51 = vmul.f32 %v37, %v48
  %52 = vst [vmem:[#allocation2 + $0x1] sm:$0xff] %v50
  %53 = vst [vmem:[#allocation2 + $0x11] sm:$0xff] %v51
  %54 = vst [vmem:[#allocation3] sm:$0x1] 0.0
  %55 = vst [vmem:[#allocation3 + $0x10] sm:$0x1] 0.0
  %56 = vst [vmem:[#allocation3 + $0x9] sm:$0x1] 0.0
  %57 = vst [vmem:[#allocation3 + $0x19] sm:$0x1] 0.0
  %v58 = vld [vmem:[#allocation2] sm:$0xff]
  %v59 = vld [vmem:[#allocation2 + $0x8] sm:$0x3]
  %v60 = vld [vmem:[#allocation2 + $0x10] sm:$0xff]
  %v61 = vld [vmem:[#allocation2 + $0x18] sm:$0x3]
  %v62 = vld [vmem:[%s2] sm:$0xf]
  %v63 = vld [vmem:[%s2 + $0x4] sm:$0xf]
  %v64 = vld [vmem:[%s2 + $0x8] sm:$0xf]
  %v65 = vld [vmem:[%s2 + $0xc] sm:$0xf]
  %v66 = vld [vmem:[%s2 + $0x10] sm:$0xf]
  %v67 = vld [vmem:[%s2 + $0x14] sm:$0xf]
  %v68 = vld [vmem:[%s2 + $0x18] sm:$0xf]
  %v69 = vld [vmem:[%s2 + $0x1c] sm:$0xf]
  %v70 = vld [vmem:[%s2 + $0x20] sm:$0xf]
  %v71 = vld [vmem:[%s2 + $0x24] sm:$0xf]
  %v72 = vld [vmem:[%s2 + $0x28] sm:$0xf]
  %v73 = vld [vmem:[%s2 + $0x2c] sm:$0xf]
  %v74 = vld [vmem:[%s2 + $0x30] sm:$0xf]
  %v75 = vld [vmem:[%s2 + $0x34] sm:$0xf]
  %v76 = vld [vmem:[%s2 + $0x38] sm:$0xf]
  %v77 = vld [vmem:[%s2 + $0x3c] sm:$0xf]
  %v78 = vld [vmem:[%s2 + $0x40] sm:$0xf]
  %v79 = vld [vmem:[%s2 + $0x44] sm:$0xf]
  %v80 = vld [vmem:[%s2 + $0x48] sm:$0xf]
  %v81 = vld [vmem:[%s2 + $0x4c] sm:$0xf]
  %v82 = vld [vmem:[%s2 + $0x50] sm:$0xf]
  %v83 = vld [vmem:[%s2 + $0x54] sm:$0xf]
  %v84 = vld [vmem:[%s2 + $0x58] sm:$0xf]
  %v85 = vld [vmem:[%s2 + $0x5c] sm:$0xf]
  %v86 = vld [vmem:[%s2 + $0x60] sm:$0xf]
  %v87 = vld [vmem:[%s2 + $0x64] sm:$0xf]
  %v88 = vld [vmem:[%s2 + $0x68] sm:$0xf]
  %v89 = vld [vmem:[%s2 + $0x6c] sm:$0xf]
  %v90 = vld [vmem:[%s2 + $0x70] sm:$0xf]
  %v91 = vld [vmem:[%s2 + $0x74] sm:$0xf]
  %v92 = vld [vmem:[%s2 + $0x78] sm:$0xf]
  %v93 = vld [vmem:[%s2 + $0x7c] sm:$0xf]
  %v94 = vld [vmem:[%s2 + $0x80] sm:$0xf]
  %v95 = vld [vmem:[%s2 + $0x84] sm:$0xf]
  %v96 = vld [vmem:[%s2 + $0x88] sm:$0xf]
  %v97 = vld [vmem:[%s2 + $0x8c] sm:$0xf]
  %v98 = vld [vmem:[%s2 + $0x90] sm:$0xf]
  %v99 = vld [vmem:[%s2 + $0x94] sm:$0xf]
  %v100 = vld [vmem:[%s2 + $0x98] sm:$0xf]
  %v101 = vld [vmem:[%s2 + $0x9c] sm:$0xf]
  %v102 = vld [vmem:[%s2 + $0xa0] sm:$0xf]
  %v103 = vld [vmem:[%s2 + $0xa4] sm:$0xf]
  %v104 = vld [vmem:[%s2 + $0xa8] sm:$0xf]
  %v105 = vld [vmem:[%s2 + $0xac] sm:$0xf]
  %v106 = vld [vmem:[%s2 + $0xb0] sm:$0xf]
  %v107 = vld [vmem:[%s2 + $0xb4] sm:$0xf]
  %v108 = vld [vmem:[%s2 + $0xb8] sm:$0xf]
  %v109 = vld [vmem:[%s2 + $0xbc] sm:$0xf]
  %vm114 = vcmask 1046528
  %v115 = vrot.slane %v58, 1
  %v116 = vrot.slane %v59, 1
  %v117 = vsel %vm114, %v115, %v116
  %v118 = vrot.slane %v60, 1
  %v119 = vrot.slane %v61, 1
  %v120 = vsel %vm114, %v118, %v119
  %v123 = vpack.c.bf16 %v60, %v58
  %v124 = vpack.c.bf16 %v120, %v117
  %vm125 = vcmask 1045504
  %v126 = vrot.slane %v58, 2
  %v127 = vrot.slane %v59, 2
  %v128 = vsel %vm125, %v126, %v127
  %v129 = vrot.slane %v60, 2
  %v130 = vrot.slane %v61, 2
  %v131 = vsel %vm125, %v129, %v130
  %v134 = vpack.c.bf16 %v131, %v128
  %v151 = vunpack.c.l.b16 %v94
  %v152 = vunpack.c.l.b16 %v95
  %v153 = vunpack.c.l.b16 %v96
  %v154 = vunpack.c.l.b16 %v97
  %v155 = vunpack.c.l.b16 %v98
  %v156 = vunpack.c.l.b16 %v99
  %v157 = vunpack.c.l.b16 %v100
  %v158 = vunpack.c.l.b16 %v101
  %v159 = vunpack.c.l.b16 %v102
  %v160 = vunpack.c.l.b16 %v103
  %v161 = vunpack.c.l.b16 %v104
  %v162 = vunpack.c.l.b16 %v105
  %v163 = vunpack.c.l.b16 %v106
  %v164 = vunpack.c.l.b16 %v107
  %v165 = vunpack.c.l.b16 %v108
  %v166 = vunpack.c.l.b16 %v109
  %v167 = vpack.c.b16 %v152, %v151
  %v168 = vpack.c.b16 %v154, %v153
  %v169 = vpack.c.b16 %v156, %v155
  %v170 = vpack.c.b16 %v158, %v157
  %v171 = vpack.c.b16 %v160, %v159
  %v172 = vpack.c.b16 %v162, %v161
  %v173 = vpack.c.b16 %v164, %v163
  %v174 = vpack.c.b16 %v166, %v165
  %183 = vmatprep.subr.bf16.mxu0 0
  %184 = vmatpush1.bf16.msra.mxu0 %v174
  %185 = vmatprep.subr.bf16.mxu0 0
  %186 = vmatpush1.bf16.msra.mxu0 %v173
  %187 = vmatprep.subr.bf16.mxu0 0
  %188 = vmatpush1.bf16.msra.mxu0 %v172
  %189 = vmatprep.subr.bf16.mxu0 0
  %190 = vmatpush1.bf16.msra.mxu0 %v171
  %191 = vmatprep.subr.bf16.mxu0 0
  %192 = vmatpush1.bf16.msra.mxu0 %v170
  %193 = vmatprep.subr.bf16.mxu0 0
  %194 = vmatpush1.bf16.msra.mxu0 %v169
  %195 = vmatprep.subr.bf16.mxu0 0
  %196 = vmatpush1.bf16.msra.mxu0 %v168
  %197 = vmatprep.subr.bf16.mxu0 0
  %198 = vmatpush1.bf16.msra.mxu0 %v167
  %199 = vmatprep.subr.bf16.mxu0 0
  %200 = vmatpush2.bf16.msra.mxu0 0
  %201 = vmatprep.subr.bf16.mxu0 0
  %202 = vmatpush2.bf16.msra.mxu0 0
  %203 = vmatprep.subr.bf16.mxu0 0
  %204 = vmatpush2.bf16.msra.mxu0 0
  %205 = vmatprep.subr.bf16.mxu0 0
  %206 = vmatpush2.bf16.msra.mxu0 0
  %207 = vmatprep.subr.bf16.mxu0 0
  %208 = vmatpush2.bf16.msra.mxu0 0
  %209 = vmatprep.subr.bf16.mxu0 0
  %210 = vmatpush2.bf16.msra.mxu0 0
  %211 = vmatprep.subr.bf16.mxu0 0
  %212 = vmatpush2.bf16.msra.mxu0 0
  %213 = vmatprep.subr.bf16.mxu0 0
  %214 = vmatpush2.bf16.msra.mxu0 0
  %215 = vmatprep.mubr.bf16.mxu0 0
  %216 = vmatmul.mubr.bf16.gmra.mxu0 %v134
  %v217 = vpop.f32.mrf.mxu0
  %v218 = vadd.f32 0.0, %v217
  %v219 = vpop.f32.mrf.mxu0
  %v220 = vpop.f32.mrf.mxu0
  %v221 = vadd.f32 0.0, %v220
  %v222 = vpop.f32.mrf.mxu0
  %223 = vdwg.mxu0
  %v256 = vunpack.c.l.b16 %v62
  %v257 = vunpack.c.l.b16 %v63
  %v258 = vunpack.c.l.b16 %v64
  %v259 = vunpack.c.l.b16 %v65
  %v260 = vunpack.c.l.b16 %v66
  %v261 = vunpack.c.l.b16 %v67
  %v262 = vunpack.c.l.b16 %v68
  %v263 = vunpack.c.l.b16 %v69
  %v264 = vunpack.c.l.b16 %v70
  %v265 = vunpack.c.l.b16 %v71
  %v266 = vunpack.c.l.b16 %v72
  %v267 = vunpack.c.l.b16 %v73
  %v268 = vunpack.c.l.b16 %v74
  %v269 = vunpack.c.l.b16 %v75
  %v270 = vunpack.c.l.b16 %v76
  %v271 = vunpack.c.l.b16 %v77
  %v272 = vunpack.c.l.b16 %v78
  %v273 = vunpack.c.l.b16 %v79
  %v274 = vunpack.c.l.b16 %v80
  %v275 = vunpack.c.l.b16 %v81
  %v276 = vunpack.c.l.b16 %v82
  %v277 = vunpack.c.l.b16 %v83
  %v278 = vunpack.c.l.b16 %v84
  %v279 = vunpack.c.l.b16 %v85
  %v280 = vunpack.c.l.b16 %v86
  %v281 = vunpack.c.l.b16 %v87
  %v282 = vunpack.c.l.b16 %v88
  %v283 = vunpack.c.l.b16 %v89
  %v284 = vunpack.c.l.b16 %v90
  %v285 = vunpack.c.l.b16 %v91
  %v286 = vunpack.c.l.b16 %v92
  %v287 = vunpack.c.l.b16 %v93
  %v288 = vpack.c.b16 %v257, %v256
  %v289 = vpack.c.b16 %v259, %v258
  %v290 = vpack.c.b16 %v261, %v260
  %v291 = vpack.c.b16 %v263, %v262
  %v292 = vpack.c.b16 %v265, %v264
  %v293 = vpack.c.b16 %v267, %v266
  %v294 = vpack.c.b16 %v269, %v268
  %v295 = vpack.c.b16 %v271, %v270
  %v296 = vpack.c.b16 %v273, %v272
  %v297 = vpack.c.b16 %v275, %v274
  %v298 = vpack.c.b16 %v277, %v276
  %v299 = vpack.c.b16 %v279, %v278
  %v300 = vpack.c.b16 %v281, %v280
  %v301 = vpack.c.b16 %v283, %v282
  %v302 = vpack.c.b16 %v285, %v284
  %v303 = vpack.c.b16 %v287, %v286
  %320 = vmatprep.subr.bf16.mxu0 0
  %321 = vmatpush1.bf16.msra.mxu0 %v295
  %322 = vmatprep.subr.bf16.mxu0 0
  %323 = vmatpush1.bf16.msra.mxu0 %v294
  %324 = vmatprep.subr.bf16.mxu0 0
  %325 = vmatpush1.bf16.msra.mxu0 %v293
  %326 = vmatprep.subr.bf16.mxu0 0
  %327 = vmatpush1.bf16.msra.mxu0 %v292
  %328 = vmatprep.subr.bf16.mxu0 0
  %329 = vmatpush1.bf16.msra.mxu0 %v291
  %330 = vmatprep.subr.bf16.mxu0 0
  %331 = vmatpush1.bf16.msra.mxu0 %v290
  %332 = vmatprep.subr.bf16.mxu0 0
  %333 = vmatpush1.bf16.msra.mxu0 %v289
  %334 = vmatprep.subr.bf16.mxu0 0
  %335 = vmatpush1.bf16.msra.mxu0 %v288
  %336 = vmatprep.subr.bf16.mxu0 0
  %337 = vmatpush2.bf16.msra.mxu0 %v303
  %338 = vmatprep.subr.bf16.mxu0 0
  %339 = vmatpush2.bf16.msra.mxu0 %v302
  %340 = vmatprep.subr.bf16.mxu0 0
  %341 = vmatpush2.bf16.msra.mxu0 %v301
  %342 = vmatprep.subr.bf16.mxu0 0
  %343 = vmatpush2.bf16.msra.mxu0 %v300
  %344 = vmatprep.subr.bf16.mxu0 0
  %345 = vmatpush2.bf16.msra.mxu0 %v299
  %346 = vmatprep.subr.bf16.mxu0 0
  %347 = vmatpush2.bf16.msra.mxu0 %v298
  %348 = vmatprep.subr.bf16.mxu0 0
  %349 = vmatpush2.bf16.msra.mxu0 %v297
  %350 = vmatprep.subr.bf16.mxu0 0
  %351 = vmatpush2.bf16.msra.mxu0 %v296
  %352 = vmatprep.mubr.bf16.mxu0 %v124
  %353 = vmatmul.mubr.bf16.gmra.mxu0 %v123
  %v354 = vpop.f32.mrf.mxu0
  %v355 = vadd.f32 %v218, %v354
  %v356 = vpop.f32.mrf.mxu0
  %v357 = vpop.f32.mrf.mxu0
  %v358 = vadd.f32 %v221, %v357
  %v359 = vpop.f32.mrf.mxu0
  %360 = vdwg.mxu0
  %v361 = vld [vmem:[%s4] sm:$0x1]
  %v363 = vlaneseq
  %v364 = vshrl.u32 %v363, 7
  %v365 = vsub.s32 0, %v364
  %v366 = vrot.slane %v361, %v365
  %v368 = vmul.f32 %v355, %v366
  %v369 = vmul.f32 %v358, %v366
  %v370 = vld [vmem:[%s5] sm:$0x1]
  %v372 = vlaneseq
  %v373 = vshrl.u32 %v372, 7
  %v374 = vsub.s32 0, %v373
  %v375 = vrot.slane %v370, %v374
  %v377 = vadd.f32 %v368, %v375
  %v378 = vadd.f32 %v369, %v375
  %v379 = vmax.f32 %v377, 0.0
  %v380 = vmax.f32 %v378, 0.0
  %v381 = vld [vmem:[%s0] sm:$0xff]
  %v382 = vld [vmem:[%s0 + $0x8] sm:$0xff]
  %384 = vset.pattern.permute.xlu0 0
  %385 = vperm.xlu0 %384, %v381
  %v386 = vpop.permute.xlu0 %385
  %389 = vset.pattern.permute.xlu0 0
  %390 = vperm.xlu0 %389, %v382
  %v391 = vpop.permute.xlu0 %390
  %v393 = vmul.f32 %v379, %v386
  %v394 = vmul.f32 %v380, %v391
  %395 = vst [vmem:[#allocation3 + $0x1] sm:$0xff] %v393
  %396 = vst [vmem:[#allocation3 + $0x11] sm:$0xff] %v394
  %v397 = vld [vmem:[#allocation3] sm:$0xff]
  %v398 = vld [vmem:[#allocation3 + $0x8] sm:$0x3]
  %v399 = vld [vmem:[#allocation3 + $0x10] sm:$0xff]
  %v400 = vld [vmem:[#allocation3 + $0x18] sm:$0x3]
  %v401 = vld [vmem:[%s3] sm:$0xf]
  %v402 = vld [vmem:[%s3 + $0x4] sm:$0xf]
  %v403 = vld [vmem:[%s3 + $0x8] sm:$0xf]
  %v404 = vld [vmem:[%s3 + $0xc] sm:$0xf]
  %v405 = vld [vmem:[%s3 + $0x10] sm:$0xf]
  %v406 = vld [vmem:[%s3 + $0x14] sm:$0xf]
  %v407 = vld [vmem:[%s3 + $0x18] sm:$0xf]
  %v408 = vld [vmem:[%s3 + $0x1c] sm:$0xf]
  %v409 = vld [vmem:[%s3 + $0x20] sm:$0xf]
  %v410 = vld [vmem:[%s3 + $0x24] sm:$0xf]
  %v411 = vld [vmem:[%s3 + $0x28] sm:$0xf]
  %v412 = vld [vmem:[%s3 + $0x2c] sm:$0xf]
  %v413 = vld [vmem:[%s3 + $0x30] sm:$0xf]
  %v414 = vld [vmem:[%s3 + $0x34] sm:$0xf]
  %v415 = vld [vmem:[%s3 + $0x38] sm:$0xf]
  %v416 = vld [vmem:[%s3 + $0x3c] sm:$0xf]
  %v417 = vld [vmem:[%s3 + $0x40] sm:$0xf]
  %v418 = vld [vmem:[%s3 + $0x44] sm:$0xf]
  %v419 = vld [vmem:[%s3 + $0x48] sm:$0xf]
  %v420 = vld [vmem:[%s3 + $0x4c] sm:$0xf]
  %v421 = vld [vmem:[%s3 + $0x50] sm:$0xf]
  %v422 = vld [vmem:[%s3 + $0x54] sm:$0xf]
  %v423 = vld [vmem:[%s3 + $0x58] sm:$0xf]
  %v424 = vld [vmem:[%s3 + $0x5c] sm:$0xf]
  %v425 = vld [vmem:[%s3 + $0x60] sm:$0xf]
  %v426 = vld [vmem:[%s3 + $0x64] sm:$0xf]
  %v427 = vld [vmem:[%s3 + $0x68] sm:$0xf]
  %v428 = vld [vmem:[%s3 + $0x6c] sm:$0xf]
  %v429 = vld [vmem:[%s3 + $0x70] sm:$0xf]
  %v430 = vld [vmem:[%s3 + $0x74] sm:$0xf]
  %v431 = vld [vmem:[%s3 + $0x78] sm:$0xf]
  %v432 = vld [vmem:[%s3 + $0x7c] sm:$0xf]
  %v433 = vld [vmem:[%s3 + $0x80] sm:$0xf]
  %v434 = vld [vmem:[%s3 + $0x84] sm:$0xf]
  %v435 = vld [vmem:[%s3 + $0x88] sm:$0xf]
  %v436 = vld [vmem:[%s3 + $0x8c] sm:$0xf]
  %v437 = vld [vmem:[%s3 + $0x90] sm:$0xf]
  %v438 = vld [vmem:[%s3 + $0x94] sm:$0xf]
  %v439 = vld [vmem:[%s3 + $0x98] sm:$0xf]
  %v440 = vld [vmem:[%s3 + $0x9c] sm:$0xf]
  %v441 = vld [vmem:[%s3 + $0xa0] sm:$0xf]
  %v442 = vld [vmem:[%s3 + $0xa4] sm:$0xf]
  %v443 = vld [vmem:[%s3 + $0xa8] sm:$0xf]
  %v444 = vld [vmem:[%s3 + $0xac] sm:$0xf]
  %v445 = vld [vmem:[%s3 + $0xb0] sm:$0xf]
  %v446 = vld [vmem:[%s3 + $0xb4] sm:$0xf]
  %v447 = vld [vmem:[%s3 + $0xb8] sm:$0xf]
  %v448 = vld [vmem:[%s3 + $0xbc] sm:$0xf]
  %v453 = vrot.slane %v397, 1
  %v454 = vrot.slane %v398, 1
  %v455 = vsel %vm114, %v453, %v454
  %v456 = vrot.slane %v399, 1
  %v457 = vrot.slane %v400, 1
  %v458 = vsel %vm114, %v456, %v457
  %v461 = vpack.c.bf16 %v399, %v397
  %v462 = vpack.c.bf16 %v458, %v455
  %v463 = vrot.slane %v397, 2
  %v464 = vrot.slane %v398, 2
  %v465 = vsel %vm125, %v463, %v464
  %v466 = vrot.slane %v399, 2
  %v467 = vrot.slane %v400, 2
  %v468 = vsel %vm125, %v466, %v467
  %v471 = vpack.c.bf16 %v468, %v465
  %v488 = vunpack.c.l.b16 %v433
  %v489 = vunpack.c.l.b16 %v434
  %v490 = vunpack.c.l.b16 %v435
  %v491 = vunpack.c.l.b16 %v436
  %v492 = vunpack.c.l.b16 %v437
  %v493 = vunpack.c.l.b16 %v438
  %v494 = vunpack.c.l.b16 %v439
  %v495 = vunpack.c.l.b16 %v440
  %v496 = vunpack.c.l.b16 %v441
  %v497 = vunpack.c.l.b16 %v442
  %v498 = vunpack.c.l.b16 %v443
  %v499 = vunpack.c.l.b16 %v444
  %v500 = vunpack.c.l.b16 %v445
  %v501 = vunpack.c.l.b16 %v446
  %v502 = vunpack.c.l.b16 %v447
  %v503 = vunpack.c.l.b16 %v448
  %v504 = vpack.c.b16 %v489, %v488
  %v505 = vpack.c.b16 %v491, %v490
  %v506 = vpack.c.b16 %v493, %v492
  %v507 = vpack.c.b16 %v495, %v494
  %v508 = vpack.c.b16 %v497, %v496
  %v509 = vpack.c.b16 %v499, %v498
  %v510 = vpack.c.b16 %v501, %v500
  %v511 = vpack.c.b16 %v503, %v502
  %520 = vmatprep.subr.bf16.mxu0 0
  %521 = vmatpush1.bf16.msra.mxu0 %v511
  %522 = vmatprep.subr.bf16.mxu0 0
  %523 = vmatpush1.bf16.msra.mxu0 %v510
  %524 = vmatprep.subr.bf16.mxu0 0
  %525 = vmatpush1.bf16.msra.mxu0 %v509
  %526 = vmatprep.subr.bf16.mxu0 0
  %527 = vmatpush1.bf16.msra.mxu0 %v508
  %528 = vmatprep.subr.bf16.mxu0 0
  %529 = vmatpush1.bf16.msra.mxu0 %v507
  %530 = vmatprep.subr.bf16.mxu0 0
  %531 = vmatpush1.bf16.msra.mxu0 %v506
  %532 = vmatprep.subr.bf16.mxu0 0
  %533 = vmatpush1.bf16.msra.mxu0 %v505
  %534 = vmatprep.subr.bf16.mxu0 0
  %535 = vmatpush1.bf16.msra.mxu0 %v504
  %536 = vmatprep.subr.bf16.mxu0 0
  %537 = vmatpush2.bf16.msra.mxu0 0
  %538 = vmatprep.subr.bf16.mxu0 0
  %539 = vmatpush2.bf16.msra.mxu0 0
  %540 = vmatprep.subr.bf16.mxu0 0
  %541 = vmatpush2.bf16.msra.mxu0 0
  %542 = vmatprep.subr.bf16.mxu0 0
  %543 = vmatpush2.bf16.msra.mxu0 0
  %544 = vmatprep.subr.bf16.mxu0 0
  %545 = vmatpush2.bf16.msra.mxu0 0
  %546 = vmatprep.subr.bf16.mxu0 0
  %547 = vmatpush2.bf16.msra.mxu0 0
  %548 = vmatprep.subr.bf16.mxu0 0
  %549 = vmatpush2.bf16.msra.mxu0 0
  %550 = vmatprep.subr.bf16.mxu0 0
  %551 = vmatpush2.bf16.msra.mxu0 0
  %552 = vmatprep.mubr.bf16.mxu0 0
  %553 = vmatmul.mubr.bf16.gmra.mxu0 %v471
  %v554 = vpop.f32.mrf.mxu0
  %v555 = vadd.f32 0.0, %v554
  %v556 = vpop.f32.mrf.mxu0
  %v557 = vpop.f32.mrf.mxu0
  %v558 = vadd.f32 0.0, %v557
  %v559 = vpop.f32.mrf.mxu0
  %560 = vdwg.mxu0
  %v593 = vunpack.c.l.b16 %v401
  %v594 = vunpack.c.l.b16 %v402
  %v595 = vunpack.c.l.b16 %v403
  %v596 = vunpack.c.l.b16 %v404
  %v597 = vunpack.c.l.b16 %v405
  %v598 = vunpack.c.l.b16 %v406
  %v599 = vunpack.c.l.b16 %v407
  %v600 = vunpack.c.l.b16 %v408
  %v601 = vunpack.c.l.b16 %v409
  %v602 = vunpack.c.l.b16 %v410
  %v603 = vunpack.c.l.b16 %v411
  %v604 = vunpack.c.l.b16 %v412
  %v605 = vunpack.c.l.b16 %v413
  %v606 = vunpack.c.l.b16 %v414
  %v607 = vunpack.c.l.b16 %v415
  %v608 = vunpack.c.l.b16 %v416
  %v609 = vunpack.c.l.b16 %v417
  %v610 = vunpack.c.l.b16 %v418
  %v611 = vunpack.c.l.b16 %v419
  %v612 = vunpack.c.l.b16 %v420
  %v613 = vunpack.c.l.b16 %v421
  %v614 = vunpack.c.l.b16 %v422
  %v615 = vunpack.c.l.b16 %v423
  %v616 = vunpack.c.l.b16 %v424
  %v617 = vunpack.c.l.b16 %v425
  %v618 = vunpack.c.l.b16 %v426
  %v619 = vunpack.c.l.b16 %v427
  %v620 = vunpack.c.l.b16 %v428
  %v621 = vunpack.c.l.b16 %v429
  %v622 = vunpack.c.l.b16 %v430
  %v623 = vunpack.c.l.b16 %v431
  %v624 = vunpack.c.l.b16 %v432
  %v625 = vpack.c.b16 %v594, %v593
  %v626 = vpack.c.b16 %v596, %v595
  %v627 = vpack.c.b16 %v598, %v597
  %v628 = vpack.c.b16 %v600, %v599
  %v629 = vpack.c.b16 %v602, %v601
  %v630 = vpack.c.b16 %v604, %v603
  %v631 = vpack.c.b16 %v606, %v605
  %v632 = vpack.c.b16 %v608, %v607
  %v633 = vpack.c.b16 %v610, %v609
  %v634 = vpack.c.b16 %v612, %v611
  %v635 = vpack.c.b16 %v614, %v613
  %v636 = vpack.c.b16 %v616, %v615
  %v637 = vpack.c.b16 %v618, %v617
  %v638 = vpack.c.b16 %v620, %v619
  %v639 = vpack.c.b16 %v622, %v621
  %v640 = vpack.c.b16 %v624, %v623
  %657 = vmatprep.subr.bf16.mxu0 0
  %658 = vmatpush1.bf16.msra.mxu0 %v632
  %659 = vmatprep.subr.bf16.mxu0 0
  %660 = vmatpush1.bf16.msra.mxu0 %v631
  %661 = vmatprep.subr.bf16.mxu0 0
  %662 = vmatpush1.bf16.msra.mxu0 %v630
  %663 = vmatprep.subr.bf16.mxu0 0
  %664 = vmatpush1.bf16.msra.mxu0 %v629
  %665 = vmatprep.subr.bf16.mxu0 0
  %666 = vmatpush1.bf16.msra.mxu0 %v628
  %667 = vmatprep.subr.bf16.mxu0 0
  %668 = vmatpush1.bf16.msra.mxu0 %v627
  %669 = vmatprep.subr.bf16.mxu0 0
  %670 = vmatpush1.bf16.msra.mxu0 %v626
  %671 = vmatprep.subr.bf16.mxu0 0
  %672 = vmatpush1.bf16.msra.mxu0 %v625
  %673 = vmatprep.subr.bf16.mxu0 0
  %674 = vmatpush2.bf16.msra.mxu0 %v640
  %675 = vmatprep.subr.bf16.mxu0 0
  %676 = vmatpush2.bf16.msra.mxu0 %v639
  %677 = vmatprep.subr.bf16.mxu0 0
  %678 = vmatpush2.bf16.msra.mxu0 %v638
  %679 = vmatprep.subr.bf16.mxu0 0
  %680 = vmatpush2.bf16.msra.mxu0 %v637
  %681 = vmatprep.subr.bf16.mxu0 0
  %682 = vmatpush2.bf16.msra.mxu0 %v636
  %683 = vmatprep.subr.bf16.mxu0 0
  %684 = vmatpush2.bf16.msra.mxu0 %v635
  %685 = vmatprep.subr.bf16.mxu0 0
  %686 = vmatpush2.bf16.msra.mxu0 %v634
  %687 = vmatprep.subr.bf16.mxu0 0
  %688 = vmatpush2.bf16.msra.mxu0 %v633
  %689 = vmatprep.mubr.bf16.mxu0 %v462
  %690 = vmatmul.mubr.bf16.gmra.mxu0 %v461
  %v691 = vpop.f32.mrf.mxu0
  %v692 = vadd.f32 %v555, %v691
  %v693 = vpop.f32.mrf.mxu0
  %v694 = vpop.f32.mrf.mxu0
  %v695 = vadd.f32 %v558, %v694
  %v696 = vpop.f32.mrf.mxu0
  %697 = vdwg.mxu0
  %s698 = scalar_lea.vmem %s4, 1
  %v699 = vld [vmem:[%s698] sm:$0x1]
  %v701 = vlaneseq
  %v702 = vshrl.u32 %v701, 7
  %v703 = vsub.s32 0, %v702
  %v704 = vrot.slane %v699, %v703
  %v706 = vmul.f32 %v692, %v704
  %v707 = vmul.f32 %v695, %v704
  %s708 = scalar_lea.vmem %s5, 1
  %v709 = vld [vmem:[%s708] sm:$0x1]
  %v711 = vlaneseq
  %v712 = vshrl.u32 %v711, 7
  %v713 = vsub.s32 0, %v712
  %v714 = vrot.slane %v709, %v713
  %v716 = vadd.f32 %v706, %v714
  %v717 = vadd.f32 %v707, %v714
  %v718 = vld [vmem:[#allocation2 + $0x1] sm:$0xff]
  %v719 = vld [vmem:[#allocation2 + $0x11] sm:$0xff]
  %v720 = vpack.c.bf16 %v719, %v718
  %v721 = vld [vmem:[%s6] sm:$0xf]
  %v722 = vld [vmem:[%s6 + $0x4] sm:$0xf]
  %v723 = vld [vmem:[%s6 + $0x8] sm:$0xf]
  %v724 = vld [vmem:[%s6 + $0xc] sm:$0xf]
  %v725 = vld [vmem:[%s6 + $0x10] sm:$0xf]
  %v726 = vld [vmem:[%s6 + $0x14] sm:$0xf]
  %v727 = vld [vmem:[%s6 + $0x18] sm:$0xf]
  %v728 = vld [vmem:[%s6 + $0x1c] sm:$0xf]
  %v729 = vld [vmem:[%s6 + $0x20] sm:$0xf]
  %v730 = vld [vmem:[%s6 + $0x24] sm:$0xf]
  %v731 = vld [vmem:[%s6 + $0x28] sm:$0xf]
  %v732 = vld [vmem:[%s6 + $0x2c] sm:$0xf]
  %v733 = vld [vmem:[%s6 + $0x30] sm:$0xf]
  %v734 = vld [vmem:[%s6 + $0x34] sm:$0xf]
  %v735 = vld [vmem:[%s6 + $0x38] sm:$0xf]
  %v736 = vld [vmem:[%s6 + $0x3c] sm:$0xf]
  %v737 = vld [vmem:[%s7] sm:$0x1]
  %v739 = vlaneseq
  %v740 = vshrl.u32 %v739, 7
  %v741 = vsub.s32 0, %v740
  %v742 = vrot.slane %v737, %v741
  %v760 = vunpack.c.l.b16 %v721
  %v761 = vunpack.c.l.b16 %v722
  %v762 = vunpack.c.l.b16 %v723
  %v763 = vunpack.c.l.b16 %v724
  %v764 = vunpack.c.l.b16 %v725
  %v765 = vunpack.c.l.b16 %v726
  %v766 = vunpack.c.l.b16 %v727
  %v767 = vunpack.c.l.b16 %v728
  %v768 = vunpack.c.l.b16 %v729
  %v769 = vunpack.c.l.b16 %v730
  %v770 = vunpack.c.l.b16 %v731
  %v771 = vunpack.c.l.b16 %v732
  %v772 = vunpack.c.l.b16 %v733
  %v773 = vunpack.c.l.b16 %v734
  %v774 = vunpack.c.l.b16 %v735
  %v775 = vunpack.c.l.b16 %v736
  %v776 = vpack.c.b16 %v761, %v760
  %v777 = vpack.c.b16 %v763, %v762
  %v778 = vpack.c.b16 %v765, %v764
  %v779 = vpack.c.b16 %v767, %v766
  %v780 = vpack.c.b16 %v769, %v768
  %v781 = vpack.c.b16 %v771, %v770
  %v782 = vpack.c.b16 %v773, %v772
  %v783 = vpack.c.b16 %v775, %v774
  %792 = vmatprep.subr.bf16.mxu0 0
  %793 = vmatpush1.bf16.msra.mxu0 %v783
  %794 = vmatprep.subr.bf16.mxu0 0
  %795 = vmatpush1.bf16.msra.mxu0 %v782
  %796 = vmatprep.subr.bf16.mxu0 0
  %797 = vmatpush1.bf16.msra.mxu0 %v781
  %798 = vmatprep.subr.bf16.mxu0 0
  %799 = vmatpush1.bf16.msra.mxu0 %v780
  %800 = vmatprep.subr.bf16.mxu0 0
  %801 = vmatpush1.bf16.msra.mxu0 %v779
  %802 = vmatprep.subr.bf16.mxu0 0
  %803 = vmatpush1.bf16.msra.mxu0 %v778
  %804 = vmatprep.subr.bf16.mxu0 0
  %805 = vmatpush1.bf16.msra.mxu0 %v777
  %806 = vmatprep.subr.bf16.mxu0 0
  %807 = vmatpush1.bf16.msra.mxu0 %v776
  %808 = vmatprep.subr.bf16.mxu0 0
  %809 = vmatpush2.bf16.msra.mxu0 0
  %810 = vmatprep.subr.bf16.mxu0 0
  %811 = vmatpush2.bf16.msra.mxu0 0
  %812 = vmatprep.subr.bf16.mxu0 0
  %813 = vmatpush2.bf16.msra.mxu0 0
  %814 = vmatprep.subr.bf16.mxu0 0
  %815 = vmatpush2.bf16.msra.mxu0 0
  %816 = vmatprep.subr.bf16.mxu0 0
  %817 = vmatpush2.bf16.msra.mxu0 0
  %818 = vmatprep.subr.bf16.mxu0 0
  %819 = vmatpush2.bf16.msra.mxu0 0
  %820 = vmatprep.subr.bf16.mxu0 0
  %821 = vmatpush2.bf16.msra.mxu0 0
  %822 = vmatprep.subr.bf16.mxu0 0
  %823 = vmatpush2.bf16.msra.mxu0 0
  %824 = vmatprep.mubr.bf16.mxu0 0
  %825 = vmatmul.mubr.bf16.gmra.mxu0 %v720
  %v826 = vpop.f32.mrf.mxu0
  %v827 = vadd.f32 %v742, %v826
  %v828 = vpop.f32.mrf.mxu0
  %v829 = vpop.f32.mrf.mxu0
  %v830 = vadd.f32 %v742, %v829
  %v831 = vpop.f32.mrf.mxu0
  %832 = vdwg.mxu0
  %v833 = vadd.f32 %v716, %v827
  %v834 = vadd.f32 %v717, %v830
  %v835 = vmax.f32 %v833, 0.0
  %v836 = vmax.f32 %v834, 0.0
  %v837 = vpack.c.bf16 %v835, %v835
  %v838 = vpack.c.bf16 %v836, %v836
  %839 = vst [vmem:[%s8] sm:$0xf] %v837
  %840 = vst [vmem:[%s8 + $0x4] sm:$0xf] %v838
  // Predicated region
  $region34: #{_lambda_.5} parent=0 // pred_check
    _
  $region35: #{_lambda_.5} parent=0 // pred_check_branch
    %842 = sbr.rel (0) target = $region37
  $region36: #{_lambda_.5} parent=0 // pred_region
    _
  $region37: #{_lambda_.5} parent=0 // pred_fallthru
    _
  // Predicated region
  $region38: #{_lambda_.5} parent=0 // pred_check
    _
  $region39: #{_lambda_.5} parent=0 // pred_check_branch
    %844 = sbr.rel (0) target = $region41
  $region40: #{_lambda_.5} parent=0 // pred_region
    _
  $region41: #{_lambda_.5} parent=0 // pred_fallthru
    _

// kernel: _lambda_.6
$region0: #{_lambda_.6}
  #allocation0 [shape = 'u32[]', space=smem, size = 0x4, offset = 0x4, fixed_abs, tag = 'smem constant byte address 0x4 - core index']
  #allocation1 [shape = 'u32[144,128]{1,0:T(1,128)}', space=vmem, size = 0x12000, scoped, tag = 'internal scratch']
  #allocation2 [shape = 'f32[2,12,128]{2,1,0:T(8,128)}', space=vmem, size = 0x4000, scoped, tag = 'scratch operand']
  #allocation3 [shape = 'f32[2,12,128]{2,1,0:T(8,128)}', space=vmem, size = 0x4000, scoped, tag = 'scratch operand']
  %s0 = inlined_call_operand.vmem [shape: f32[2,2,8,1], index: 0, kind: input, shape index: {}]
  %s1 = inlined_call_operand.vmem [shape: bf16[2,8,128], index: 1, kind: input, shape index: {}]
  %s2 = inlined_call_operand.vmem [shape: bf16[640,128], index: 2, kind: input, shape index: {}]
  %s3 = inlined_call_operand.vmem [shape: bf16[1,640,128], index: 3, kind: input, shape index: {}]
  %s4 = inlined_call_operand.vmem [shape: f32[2,1,128], index: 4, kind: input, shape index: {}]
  %s5 = inlined_call_operand.vmem [shape: f32[2,1,128], index: 5, kind: input, shape index: {}]
  %s6 = inlined_call_operand.vmem [shape: bf16[2,8,128], index: 6, kind: input, shape index: {}]
  %s7 = inlined_call_operand.vmem [shape: bf16[256,128], index: 7, kind: input, shape index: {}]
  %s8 = inlined_call_operand.vmem [shape: f32[1,128], index: 8, kind: input, shape index: {}]
  %s9 = inlined_call_operand.vmem [shape: bf16[2,8,128], index: 9, kind: output, shape index: {}]
  %s10 = sld [smem:[#allocation0]]
  $region46: #{_lambda_.6} parent=0
    _
  %s12 = ssub.s32 1, %s10
  %s13 = scalar_select 0, %s12, %s10
  // Predicated region
  $region2: #{_lambda_.6} parent=0 // pred_check
    _
  $region3: #{_lambda_.6} parent=0 // pred_check_branch
    %15 = sbr.rel (0) target = $region5
  $region4: #{_lambda_.6} parent=0 // pred_region
    _
  $region5: #{_lambda_.6} parent=0 // pred_fallthru
    _
  // Predicated region
  $region6: #{_lambda_.6} parent=0 // pred_check
    _
  $region7: #{_lambda_.6} parent=0 // pred_check_branch
    %17 = sbr.rel (0) target = $region9
  $region8: #{_lambda_.6} parent=0 // pred_region
    _
  $region9: #{_lambda_.6} parent=0 // pred_fallthru
    _
  // Predicated region
  $region10: #{_lambda_.6} parent=0 // pred_check
    _
  $region11: #{_lambda_.6} parent=0 // pred_check_branch
    %19 = sbr.rel (0) target = $region13
  $region12: #{_lambda_.6} parent=0 // pred_region
    _
  $region13: #{_lambda_.6} parent=0 // pred_fallthru
    _
  // Predicated region
  $region14: #{_lambda_.6} parent=0 // pred_check
    _
  $region15: #{_lambda_.6} parent=0 // pred_check_branch
    %21 = sbr.rel (0) target = $region17
  $region16: #{_lambda_.6} parent=0 // pred_region
    _
  $region17: #{_lambda_.6} parent=0 // pred_fallthru
    _
  // Predicated region
  $region18: #{_lambda_.6} parent=0 // pred_check
    _
  $region19: #{_lambda_.6} parent=0 // pred_check_branch
    %23 = sbr.rel (0) target = $region21
  $region20: #{_lambda_.6} parent=0 // pred_region
    _
  $region21: #{_lambda_.6} parent=0 // pred_fallthru
    _
  // Predicated region
  $region22: #{_lambda_.6} parent=0 // pred_check
    _
  $region23: #{_lambda_.6} parent=0 // pred_check_branch
    %25 = sbr.rel (0) target = $region25
  $region24: #{_lambda_.6} parent=0 // pred_region
    _
  $region25: #{_lambda_.6} parent=0 // pred_fallthru
    _
  // Predicated region
  $region26: #{_lambda_.6} parent=0 // pred_check
    _
  $region27: #{_lambda_.6} parent=0 // pred_check_branch
    %27 = sbr.rel (0) target = $region29
  $region28: #{_lambda_.6} parent=0 // pred_region
    _
  $region29: #{_lambda_.6} parent=0 // pred_fallthru
    _
  // Predicated region
  $region30: #{_lambda_.6} parent=0 // pred_check
    _
  $region31: #{_lambda_.6} parent=0 // pred_check_branch
    %29 = sbr.rel (0) target = $region33
  $region32: #{_lambda_.6} parent=0 // pred_region
    _
  $region33: #{_lambda_.6} parent=0 // pred_fallthru
    _
  // Predicated region
  $region34: #{_lambda_.6} parent=0 // pred_check
    _
  $region35: #{_lambda_.6} parent=0 // pred_check_branch
    %31 = sbr.rel (0) target = $region37
  $region36: #{_lambda_.6} parent=0 // pred_region
    _
  $region37: #{_lambda_.6} parent=0 // pred_fallthru
    _
  %33 = vst [vmem:[#allocation2] sm:$0x3] 0.0
  %34 = vst [vmem:[#allocation2 + $0x10] sm:$0x3] 0.0
  %35 = vst [vmem:[#allocation2 + $0xa] sm:$0x3] 0.0
  %36 = vst [vmem:[#allocation2 + $0x1a] sm:$0x3] 0.0
  %v37 = vld [vmem:[%s1] sm:$0xf]
  %v38 = vld [vmem:[%s1 + $0x4] sm:$0xf]
  %v39 = vunpack.c.l.bf16 %v37
  %v40 = vunpack.c.l.bf16 %v38
  %v41 = vld [vmem:[%s0] sm:$0xff]
  %v42 = vld [vmem:[%s0 + $0x8] sm:$0xff]
  %44 = vset.pattern.permute.xlu0 0
  %45 = vperm.xlu0 %44, %v41
  %v46 = vpop.permute.xlu0 %45
  %49 = vset.pattern.permute.xlu0 0
  %50 = vperm.xlu0 %49, %v42
  %v51 = vpop.permute.xlu0 %50
  %v53 = vmul.f32 %v39, %v46
  %v54 = vmul.f32 %v40, %v51
  %55 = vst [vmem:[#allocation2 + $0x2] sm:$0xff] %v53
  %56 = vst [vmem:[#allocation2 + $0x12] sm:$0xff] %v54
  %57 = vst [vmem:[#allocation3] sm:$0x3] 0.0
  %58 = vst [vmem:[#allocation3 + $0x10] sm:$0x3] 0.0
  %59 = vst [vmem:[#allocation3 + $0xa] sm:$0x3] 0.0
  %60 = vst [vmem:[#allocation3 + $0x1a] sm:$0x3] 0.0
  %v61 = vld [vmem:[#allocation2] sm:$0xff]
  %v62 = vld [vmem:[#allocation2 + $0x8] sm:$0xf]
  %v63 = vld [vmem:[#allocation2 + $0x10] sm:$0xff]
  %v64 = vld [vmem:[#allocation2 + $0x18] sm:$0xf]
  %v65 = vld [vmem:[%s2] sm:$0xf]
  %v66 = vld [vmem:[%s2 + $0x4] sm:$0xf]
  %v67 = vld [vmem:[%s2 + $0x8] sm:$0xf]
  %v68 = vld [vmem:[%s2 + $0xc] sm:$0xf]
  %v69 = vld [vmem:[%s2 + $0x10] sm:$0xf]
  %v70 = vld [vmem:[%s2 + $0x14] sm:$0xf]
  %v71 = vld [vmem:[%s2 + $0x18] sm:$0xf]
  %v72 = vld [vmem:[%s2 + $0x1c] sm:$0xf]
  %v73 = vld [vmem:[%s2 + $0x20] sm:$0xf]
  %v74 = vld [vmem:[%s2 + $0x24] sm:$0xf]
  %v75 = vld [vmem:[%s2 + $0x28] sm:$0xf]
  %v76 = vld [vmem:[%s2 + $0x2c] sm:$0xf]
  %v77 = vld [vmem:[%s2 + $0x30] sm:$0xf]
  %v78 = vld [vmem:[%s2 + $0x34] sm:$0xf]
  %v79 = vld [vmem:[%s2 + $0x38] sm:$0xf]
  %v80 = vld [vmem:[%s2 + $0x3c] sm:$0xf]
  %v81 = vld [vmem:[%s2 + $0x40] sm:$0xf]
  %v82 = vld [vmem:[%s2 + $0x44] sm:$0xf]
  %v83 = vld [vmem:[%s2 + $0x48] sm:$0xf]
  %v84 = vld [vmem:[%s2 + $0x4c] sm:$0xf]
  %v85 = vld [vmem:[%s2 + $0x50] sm:$0xf]
  %v86 = vld [vmem:[%s2 + $0x54] sm:$0xf]
  %v87 = vld [vmem:[%s2 + $0x58] sm:$0xf]
  %v88 = vld [vmem:[%s2 + $0x5c] sm:$0xf]
  %v89 = vld [vmem:[%s2 + $0x60] sm:$0xf]
  %v90 = vld [vmem:[%s2 + $0x64] sm:$0xf]
  %v91 = vld [vmem:[%s2 + $0x68] sm:$0xf]
  %v92 = vld [vmem:[%s2 + $0x6c] sm:$0xf]
  %v93 = vld [vmem:[%s2 + $0x70] sm:$0xf]
  %v94 = vld [vmem:[%s2 + $0x74] sm:$0xf]
  %v95 = vld [vmem:[%s2 + $0x78] sm:$0xf]
  %v96 = vld [vmem:[%s2 + $0x7c] sm:$0xf]
  %v97 = vld [vmem:[%s2 + $0x80] sm:$0xf]
  %v98 = vld [vmem:[%s2 + $0x84] sm:$0xf]
  %v99 = vld [vmem:[%s2 + $0x88] sm:$0xf]
  %v100 = vld [vmem:[%s2 + $0x8c] sm:$0xf]
  %v101 = vld [vmem:[%s2 + $0x90] sm:$0xf]
  %v102 = vld [vmem:[%s2 + $0x94] sm:$0xf]
  %v103 = vld [vmem:[%s2 + $0x98] sm:$0xf]
  %v104 = vld [vmem:[%s2 + $0x9c] sm:$0xf]
  %v105 = vld [vmem:[%s2 + $0xa0] sm:$0xf]
  %v106 = vld [vmem:[%s2 + $0xa4] sm:$0xf]
  %v107 = vld [vmem:[%s2 + $0xa8] sm:$0xf]
  %v108 = vld [vmem:[%s2 + $0xac] sm:$0xf]
  %v109 = vld [vmem:[%s2 + $0xb0] sm:$0xf]
  %v110 = vld [vmem:[%s2 + $0xb4] sm:$0xf]
  %v111 = vld [vmem:[%s2 + $0xb8] sm:$0xf]
  %v112 = vld [vmem:[%s2 + $0xbc] sm:$0xf]
  %v113 = vld [vmem:[%s2 + $0xc0] sm:$0xf]
  %v114 = vld [vmem:[%s2 + $0xc4] sm:$0xf]
  %v115 = vld [vmem:[%s2 + $0xc8] sm:$0xf]
  %v116 = vld [vmem:[%s2 + $0xcc] sm:$0xf]
  %v117 = vld [vmem:[%s2 + $0xd0] sm:$0xf]
  %v118 = vld [vmem:[%s2 + $0xd4] sm:$0xf]
  %v119 = vld [vmem:[%s2 + $0xd8] sm:$0xf]
  %v120 = vld [vmem:[%s2 + $0xdc] sm:$0xf]
  %v121 = vld [vmem:[%s2 + $0xe0] sm:$0xf]
  %v122 = vld [vmem:[%s2 + $0xe4] sm:$0xf]
  %v123 = vld [vmem:[%s2 + $0xe8] sm:$0xf]
  %v124 = vld [vmem:[%s2 + $0xec] sm:$0xf]
  %v125 = vld [vmem:[%s2 + $0xf0] sm:$0xf]
  %v126 = vld [vmem:[%s2 + $0xf4] sm:$0xf]
  %v127 = vld [vmem:[%s2 + $0xf8] sm:$0xf]
  %v128 = vld [vmem:[%s2 + $0xfc] sm:$0xf]
  %v129 = vld [vmem:[%s2 + $0x100] sm:$0xf]
  %v130 = vld [vmem:[%s2 + $0x104] sm:$0xf]
  %v131 = vld [vmem:[%s2 + $0x108] sm:$0xf]
  %v132 = vld [vmem:[%s2 + $0x10c] sm:$0xf]
  %v133 = vld [vmem:[%s2 + $0x110] sm:$0xf]
  %v134 = vld [vmem:[%s2 + $0x114] sm:$0xf]
  %v135 = vld [vmem:[%s2 + $0x118] sm:$0xf]
  %v136 = vld [vmem:[%s2 + $0x11c] sm:$0xf]
  %v137 = vld [vmem:[%s2 + $0x120] sm:$0xf]
  %v138 = vld [vmem:[%s2 + $0x124] sm:$0xf]
  %v139 = vld [vmem:[%s2 + $0x128] sm:$0xf]
  %v140 = vld [vmem:[%s2 + $0x12c] sm:$0xf]
  %v141 = vld [vmem:[%s2 + $0x130] sm:$0xf]
  %v142 = vld [vmem:[%s2 + $0x134] sm:$0xf]
  %v143 = vld [vmem:[%s2 + $0x138] sm:$0xf]
  %v144 = vld [vmem:[%s2 + $0x13c] sm:$0xf]
  %vm149 = vcmask 1046528
  %v150 = vrot.slane %v61, 1
  %v151 = vrot.slane %v62, 1
  %v152 = vsel %vm149, %v150, %v151
  %v153 = vrot.slane %v63, 1
  %v154 = vrot.slane %v64, 1
  %v155 = vsel %vm149, %v153, %v154
  %v158 = vpack.c.bf16 %v63, %v61
  %v159 = vpack.c.bf16 %v155, %v152
  %vm160 = vcmask 1045504
  %v161 = vrot.slane %v61, 2
  %v162 = vrot.slane %v62, 2
  %v163 = vsel %vm160, %v161, %v162
  %v164 = vrot.slane %v152, 2
  %v165 = vrot.slane %v151, 2
  %v166 = vsel %vm160, %v164, %v165
  %v167 = vrot.slane %v63, 2
  %v168 = vrot.slane %v64, 2
  %v169 = vsel %vm160, %v167, %v168
  %v170 = vrot.slane %v155, 2
  %v171 = vrot.slane %v154, 2
  %v172 = vsel %vm160, %v170, %v171
  %v177 = vpack.c.bf16 %v169, %v163
  %v178 = vpack.c.bf16 %v172, %v166
  %v211 = vunpack.c.l.b16 %v97
  %v212 = vunpack.c.l.b16 %v98
  %v213 = vunpack.c.l.b16 %v99
  %v214 = vunpack.c.l.b16 %v100
  %v215 = vunpack.c.l.b16 %v101
  %v216 = vunpack.c.l.b16 %v102
  %v217 = vunpack.c.l.b16 %v103
  %v218 = vunpack.c.l.b16 %v104
  %v219 = vunpack.c.l.b16 %v105
  %v220 = vunpack.c.l.b16 %v106
  %v221 = vunpack.c.l.b16 %v107
  %v222 = vunpack.c.l.b16 %v108
  %v223 = vunpack.c.l.b16 %v109
  %v224 = vunpack.c.l.b16 %v110
  %v225 = vunpack.c.l.b16 %v111
  %v226 = vunpack.c.l.b16 %v112
  %v227 = vunpack.c.l.b16 %v113
  %v228 = vunpack.c.l.b16 %v114
  %v229 = vunpack.c.l.b16 %v115
  %v230 = vunpack.c.l.b16 %v116
  %v231 = vunpack.c.l.b16 %v117
  %v232 = vunpack.c.l.b16 %v118
  %v233 = vunpack.c.l.b16 %v119
  %v234 = vunpack.c.l.b16 %v120
  %v235 = vunpack.c.l.b16 %v121
  %v236 = vunpack.c.l.b16 %v122
  %v237 = vunpack.c.l.b16 %v123
  %v238 = vunpack.c.l.b16 %v124
  %v239 = vunpack.c.l.b16 %v125
  %v240 = vunpack.c.l.b16 %v126
  %v241 = vunpack.c.l.b16 %v127
  %v242 = vunpack.c.l.b16 %v128
  %v243 = vpack.c.b16 %v212, %v211
  %v244 = vpack.c.b16 %v214, %v213
  %v245 = vpack.c.b16 %v216, %v215
  %v246 = vpack.c.b16 %v218, %v217
  %v247 = vpack.c.b16 %v220, %v219
  %v248 = vpack.c.b16 %v222, %v221
  %v249 = vpack.c.b16 %v224, %v223
  %v250 = vpack.c.b16 %v226, %v225
  %v251 = vpack.c.b16 %v228, %v227
  %v252 = vpack.c.b16 %v230, %v229
  %v253 = vpack.c.b16 %v232, %v231
  %v254 = vpack.c.b16 %v234, %v233
  %v255 = vpack.c.b16 %v236, %v235
  %v256 = vpack.c.b16 %v238, %v237
  %v257 = vpack.c.b16 %v240, %v239
  %v258 = vpack.c.b16 %v242, %v241
  %275 = vmatprep.subr.bf16.mxu0 0
  %276 = vmatpush1.bf16.msra.mxu0 %v250
  %277 = vmatprep.subr.bf16.mxu0 0
  %278 = vmatpush1.bf16.msra.mxu0 %v249
  %279 = vmatprep.subr.bf16.mxu0 0
  %280 = vmatpush1.bf16.msra.mxu0 %v248
  %281 = vmatprep.subr.bf16.mxu0 0
  %282 = vmatpush1.bf16.msra.mxu0 %v247
  %283 = vmatprep.subr.bf16.mxu0 0
  %284 = vmatpush1.bf16.msra.mxu0 %v246
  %285 = vmatprep.subr.bf16.mxu0 0
  %286 = vmatpush1.bf16.msra.mxu0 %v245
  %287 = vmatprep.subr.bf16.mxu0 0
  %288 = vmatpush1.bf16.msra.mxu0 %v244
  %289 = vmatprep.subr.bf16.mxu0 0
  %290 = vmatpush1.bf16.msra.mxu0 %v243
  %291 = vmatprep.subr.bf16.mxu0 0
  %292 = vmatpush2.bf16.msra.mxu0 %v258
  %293 = vmatprep.subr.bf16.mxu0 0
  %294 = vmatpush2.bf16.msra.mxu0 %v257
  %295 = vmatprep.subr.bf16.mxu0 0
  %296 = vmatpush2.bf16.msra.mxu0 %v256
  %297 = vmatprep.subr.bf16.mxu0 0
  %298 = vmatpush2.bf16.msra.mxu0 %v255
  %299 = vmatprep.subr.bf16.mxu0 0
  %300 = vmatpush2.bf16.msra.mxu0 %v254
  %301 = vmatprep.subr.bf16.mxu0 0
  %302 = vmatpush2.bf16.msra.mxu0 %v253
  %303 = vmatprep.subr.bf16.mxu0 0
  %304 = vmatpush2.bf16.msra.mxu0 %v252
  %305 = vmatprep.subr.bf16.mxu0 0
  %306 = vmatpush2.bf16.msra.mxu0 %v251
  %307 = vmatprep.mubr.bf16.mxu0 %v178
  %308 = vmatmul.mubr.bf16.gmra.mxu0 %v177
  %v309 = vpop.f32.mrf.mxu0
  %v310 = vadd.f32 0.0, %v309
  %v311 = vpop.f32.mrf.mxu0
  %v312 = vpop.f32.mrf.mxu0
  %v313 = vadd.f32 0.0, %v312
  %v314 = vpop.f32.mrf.mxu0
  %315 = vdwg.mxu0
  %v348 = vunpack.c.l.b16 %v65
  %v349 = vunpack.c.l.b16 %v66
  %v350 = vunpack.c.l.b16 %v67
  %v351 = vunpack.c.l.b16 %v68
  %v352 = vunpack.c.l.b16 %v69
  %v353 = vunpack.c.l.b16 %v70
  %v354 = vunpack.c.l.b16 %v71
  %v355 = vunpack.c.l.b16 %v72
  %v356 = vunpack.c.l.b16 %v73
  %v357 = vunpack.c.l.b16 %v74
  %v358 = vunpack.c.l.b16 %v75
  %v359 = vunpack.c.l.b16 %v76
  %v360 = vunpack.c.l.b16 %v77
  %v361 = vunpack.c.l.b16 %v78
  %v362 = vunpack.c.l.b16 %v79
  %v363 = vunpack.c.l.b16 %v80
  %v364 = vunpack.c.l.b16 %v81
  %v365 = vunpack.c.l.b16 %v82
  %v366 = vunpack.c.l.b16 %v83
  %v367 = vunpack.c.l.b16 %v84
  %v368 = vunpack.c.l.b16 %v85
  %v369 = vunpack.c.l.b16 %v86
  %v370 = vunpack.c.l.b16 %v87
  %v371 = vunpack.c.l.b16 %v88
  %v372 = vunpack.c.l.b16 %v89
  %v373 = vunpack.c.l.b16 %v90
  %v374 = vunpack.c.l.b16 %v91
  %v375 = vunpack.c.l.b16 %v92
  %v376 = vunpack.c.l.b16 %v93
  %v377 = vunpack.c.l.b16 %v94
  %v378 = vunpack.c.l.b16 %v95
  %v379 = vunpack.c.l.b16 %v96
  %v380 = vpack.c.b16 %v349, %v348
  %v381 = vpack.c.b16 %v351, %v350
  %v382 = vpack.c.b16 %v353, %v352
  %v383 = vpack.c.b16 %v355, %v354
  %v384 = vpack.c.b16 %v357, %v356
  %v385 = vpack.c.b16 %v359, %v358
  %v386 = vpack.c.b16 %v361, %v360
  %v387 = vpack.c.b16 %v363, %v362
  %v388 = vpack.c.b16 %v365, %v364
  %v389 = vpack.c.b16 %v367, %v366
  %v390 = vpack.c.b16 %v369, %v368
  %v391 = vpack.c.b16 %v371, %v370
  %v392 = vpack.c.b16 %v373, %v372
  %v393 = vpack.c.b16 %v375, %v374
  %v394 = vpack.c.b16 %v377, %v376
  %v395 = vpack.c.b16 %v379, %v378
  %412 = vmatprep.subr.bf16.mxu0 0
  %413 = vmatpush1.bf16.msra.mxu0 %v387
  %414 = vmatprep.subr.bf16.mxu0 0
  %415 = vmatpush1.bf16.msra.mxu0 %v386
  %416 = vmatprep.subr.bf16.mxu0 0
  %417 = vmatpush1.bf16.msra.mxu0 %v385
  %418 = vmatprep.subr.bf16.mxu0 0
  %419 = vmatpush1.bf16.msra.mxu0 %v384
  %420 = vmatprep.subr.bf16.mxu0 0
  %421 = vmatpush1.bf16.msra.mxu0 %v383
  %422 = vmatprep.subr.bf16.mxu0 0
  %423 = vmatpush1.bf16.msra.mxu0 %v382
  %424 = vmatprep.subr.bf16.mxu0 0
  %425 = vmatpush1.bf16.msra.mxu0 %v381
  %426 = vmatprep.subr.bf16.mxu0 0
  %427 = vmatpush1.bf16.msra.mxu0 %v380
  %428 = vmatprep.subr.bf16.mxu0 0
  %429 = vmatpush2.bf16.msra.mxu0 %v395
  %430 = vmatprep.subr.bf16.mxu0 0
  %431 = vmatpush2.bf16.msra.mxu0 %v394
  %432 = vmatprep.subr.bf16.mxu0 0
  %433 = vmatpush2.bf16.msra.mxu0 %v393
  %434 = vmatprep.subr.bf16.mxu0 0
  %435 = vmatpush2.bf16.msra.mxu0 %v392
  %436 = vmatprep.subr.bf16.mxu0 0
  %437 = vmatpush2.bf16.msra.mxu0 %v391
  %438 = vmatprep.subr.bf16.mxu0 0
  %439 = vmatpush2.bf16.msra.mxu0 %v390
  %440 = vmatprep.subr.bf16.mxu0 0
  %441 = vmatpush2.bf16.msra.mxu0 %v389
  %442 = vmatprep.subr.bf16.mxu0 0
  %443 = vmatpush2.bf16.msra.mxu0 %v388
  %444 = vmatprep.mubr.bf16.mxu0 %v159
  %445 = vmatmul.mubr.bf16.gmra.mxu0 %v158
  %v446 = vpop.f32.mrf.mxu0
  %v447 = vadd.f32 %v310, %v446
  %v448 = vpop.f32.mrf.mxu0
  %v449 = vpop.f32.mrf.mxu0
  %v450 = vadd.f32 %v313, %v449
  %v451 = vpop.f32.mrf.mxu0
  %452 = vdwg.mxu0
  %vm453 = vcmask 1043456
  %v454 = vrot.slane %v61, 4
  %v455 = vrot.slane %v62, 4
  %v456 = vsel %vm453, %v454, %v455
  %v457 = vrot.slane %v63, 4
  %v458 = vrot.slane %v64, 4
  %v459 = vsel %vm453, %v457, %v458
  %v462 = vpack.c.bf16 %v459, %v456
  %v479 = vunpack.c.l.b16 %v129
  %v480 = vunpack.c.l.b16 %v130
  %v481 = vunpack.c.l.b16 %v131
  %v482 = vunpack.c.l.b16 %v132
  %v483 = vunpack.c.l.b16 %v133
  %v484 = vunpack.c.l.b16 %v134
  %v485 = vunpack.c.l.b16 %v135
  %v486 = vunpack.c.l.b16 %v136
  %v487 = vunpack.c.l.b16 %v137
  %v488 = vunpack.c.l.b16 %v138
  %v489 = vunpack.c.l.b16 %v139
  %v490 = vunpack.c.l.b16 %v140
  %v491 = vunpack.c.l.b16 %v141
  %v492 = vunpack.c.l.b16 %v142
  %v493 = vunpack.c.l.b16 %v143
  %v494 = vunpack.c.l.b16 %v144
  %v495 = vpack.c.b16 %v480, %v479
  %v496 = vpack.c.b16 %v482, %v481
  %v497 = vpack.c.b16 %v484, %v483
  %v498 = vpack.c.b16 %v486, %v485
  %v499 = vpack.c.b16 %v488, %v487
  %v500 = vpack.c.b16 %v490, %v489
  %v501 = vpack.c.b16 %v492, %v491
  %v502 = vpack.c.b16 %v494, %v493
  %511 = vmatprep.subr.bf16.mxu0 0
  %512 = vmatpush1.bf16.msra.mxu0 %v502
  %513 = vmatprep.subr.bf16.mxu0 0
  %514 = vmatpush1.bf16.msra.mxu0 %v501
  %515 = vmatprep.subr.bf16.mxu0 0
  %516 = vmatpush1.bf16.msra.mxu0 %v500
  %517 = vmatprep.subr.bf16.mxu0 0
  %518 = vmatpush1.bf16.msra.mxu0 %v499
  %519 = vmatprep.subr.bf16.mxu0 0
  %520 = vmatpush1.bf16.msra.mxu0 %v498
  %521 = vmatprep.subr.bf16.mxu0 0
  %522 = vmatpush1.bf16.msra.mxu0 %v497
  %523 = vmatprep.subr.bf16.mxu0 0
  %524 = vmatpush1.bf16.msra.mxu0 %v496
  %525 = vmatprep.subr.bf16.mxu0 0
  %526 = vmatpush1.bf16.msra.mxu0 %v495
  %527 = vmatprep.subr.bf16.mxu0 0
  %528 = vmatpush2.bf16.msra.mxu0 0
  %529 = vmatprep.subr.bf16.mxu0 0
  %530 = vmatpush2.bf16.msra.mxu0 0
  %531 = vmatprep.subr.bf16.mxu0 0
  %532 = vmatpush2.bf16.msra.mxu0 0
  %533 = vmatprep.subr.bf16.mxu0 0
  %534 = vmatpush2.bf16.msra.mxu0 0
  %535 = vmatprep.subr.bf16.mxu0 0
  %536 = vmatpush2.bf16.msra.mxu0 0
  %537 = vmatprep.subr.bf16.mxu0 0
  %538 = vmatpush2.bf16.msra.mxu0 0
  %539 = vmatprep.subr.bf16.mxu0 0
  %540 = vmatpush2.bf16.msra.mxu0 0
  %541 = vmatprep.subr.bf16.mxu0 0
  %542 = vmatpush2.bf16.msra.mxu0 0
  %543 = vmatprep.mubr.bf16.mxu0 0
  %544 = vmatmul.mubr.bf16.gmra.mxu0 %v462
  %v545 = vpop.f32.mrf.mxu0
  %v546 = vadd.f32 0.0, %v545
  %v547 = vpop.f32.mrf.mxu0
  %v548 = vpop.f32.mrf.mxu0
  %v549 = vadd.f32 0.0, %v548
  %v550 = vpop.f32.mrf.mxu0
  %551 = vdwg.mxu0
  %v552 = vadd.f32 %v447, %v546
  %v553 = vadd.f32 %v450, %v549
  %v554 = vld [vmem:[%s4] sm:$0x1]
  %v556 = vlaneseq
  %v557 = vshrl.u32 %v556, 7
  %v558 = vsub.s32 0, %v557
  %v559 = vrot.slane %v554, %v558
  %v561 = vmul.f32 %v552, %v559
  %v562 = vmul.f32 %v553, %v559
  %v563 = vld [vmem:[%s5] sm:$0x1]
  %v565 = vlaneseq
  %v566 = vshrl.u32 %v565, 7
  %v567 = vsub.s32 0, %v566
  %v568 = vrot.slane %v563, %v567
  %v570 = vadd.f32 %v561, %v568
  %v571 = vadd.f32 %v562, %v568
  %v572 = vmax.f32 %v570, 0.0
  %v573 = vmax.f32 %v571, 0.0
  %v574 = vld [vmem:[%s0] sm:$0xff]
  %v575 = vld [vmem:[%s0 + $0x8] sm:$0xff]
  %577 = vset.pattern.permute.xlu0 0
  %578 = vperm.xlu0 %577, %v574
  %v579 = vpop.permute.xlu0 %578
  %582 = vset.pattern.permute.xlu0 0
  %583 = vperm.xlu0 %582, %v575
  %v584 = vpop.permute.xlu0 %583
  %v586 = vmul.f32 %v572, %v579
  %v587 = vmul.f32 %v573, %v584
  %588 = vst [vmem:[#allocation3 + $0x2] sm:$0xff] %v586
  %589 = vst [vmem:[#allocation3 + $0x12] sm:$0xff] %v587
  %v590 = vld [vmem:[#allocation3] sm:$0xff]
  %v591 = vld [vmem:[#allocation3 + $0x8] sm:$0xf]
  %v592 = vld [vmem:[#allocation3 + $0x10] sm:$0xff]
  %v593 = vld [vmem:[#allocation3 + $0x18] sm:$0xf]
  %v594 = vld [vmem:[%s3] sm:$0xf]
  %v595 = vld [vmem:[%s3 + $0x4] sm:$0xf]
  %v596 = vld [vmem:[%s3 + $0x8] sm:$0xf]
  %v597 = vld [vmem:[%s3 + $0xc] sm:$0xf]
  %v598 = vld [vmem:[%s3 + $0x10] sm:$0xf]
  %v599 = vld [vmem:[%s3 + $0x14] sm:$0xf]
  %v600 = vld [vmem:[%s3 + $0x18] sm:$0xf]
  %v601 = vld [vmem:[%s3 + $0x1c] sm:$0xf]
  %v602 = vld [vmem:[%s3 + $0x20] sm:$0xf]
  %v603 = vld [vmem:[%s3 + $0x24] sm:$0xf]
  %v604 = vld [vmem:[%s3 + $0x28] sm:$0xf]
  %v605 = vld [vmem:[%s3 + $0x2c] sm:$0xf]
  %v606 = vld [vmem:[%s3 + $0x30] sm:$0xf]
  %v607 = vld [vmem:[%s3 + $0x34] sm:$0xf]
  %v608 = vld [vmem:[%s3 + $0x38] sm:$0xf]
  %v609 = vld [vmem:[%s3 + $0x3c] sm:$0xf]
  %v610 = vld [vmem:[%s3 + $0x40] sm:$0xf]
  %v611 = vld [vmem:[%s3 + $0x44] sm:$0xf]
  %v612 = vld [vmem:[%s3 + $0x48] sm:$0xf]
  %v613 = vld [vmem:[%s3 + $0x4c] sm:$0xf]
  %v614 = vld [vmem:[%s3 + $0x50] sm:$0xf]
  %v615 = vld [vmem:[%s3 + $0x54] sm:$0xf]
  %v616 = vld [vmem:[%s3 + $0x58] sm:$0xf]
  %v617 = vld [vmem:[%s3 + $0x5c] sm:$0xf]
  %v618 = vld [vmem:[%s3 + $0x60] sm:$0xf]
  %v619 = vld [vmem:[%s3 + $0x64] sm:$0xf]
  %v620 = vld [vmem:[%s3 + $0x68] sm:$0xf]
  %v621 = vld [vmem:[%s3 + $0x6c] sm:$0xf]
  %v622 = vld [vmem:[%s3 + $0x70] sm:$0xf]
  %v623 = vld [vmem:[%s3 + $0x74] sm:$0xf]
  %v624 = vld [vmem:[%s3 + $0x78] sm:$0xf]
  %v625 = vld [vmem:[%s3 + $0x7c] sm:$0xf]
  %v626 = vld [vmem:[%s3 + $0x80] sm:$0xf]
  %v627 = vld [vmem:[%s3 + $0x84] sm:$0xf]
  %v628 = vld [vmem:[%s3 + $0x88] sm:$0xf]
  %v629 = vld [vmem:[%s3 + $0x8c] sm:$0xf]
  %v630 = vld [vmem:[%s3 + $0x90] sm:$0xf]
  %v631 = vld [vmem:[%s3 + $0x94] sm:$0xf]
  %v632 = vld [vmem:[%s3 + $0x98] sm:$0xf]
  %v633 = vld [vmem:[%s3 + $0x9c] sm:$0xf]
  %v634 = vld [vmem:[%s3 + $0xa0] sm:$0xf]
  %v635 = vld [vmem:[%s3 + $0xa4] sm:$0xf]
  %v636 = vld [vmem:[%s3 + $0xa8] sm:$0xf]
  %v637 = vld [vmem:[%s3 + $0xac] sm:$0xf]
  %v638 = vld [vmem:[%s3 + $0xb0] sm:$0xf]
  %v639 = vld [vmem:[%s3 + $0xb4] sm:$0xf]
  %v640 = vld [vmem:[%s3 + $0xb8] sm:$0xf]
  %v641 = vld [vmem:[%s3 + $0xbc] sm:$0xf]
  %v642 = vld [vmem:[%s3 + $0xc0] sm:$0xf]
  %v643 = vld [vmem:[%s3 + $0xc4] sm:$0xf]
  %v644 = vld [vmem:[%s3 + $0xc8] sm:$0xf]
  %v645 = vld [vmem:[%s3 + $0xcc] sm:$0xf]
  %v646 = vld [vmem:[%s3 + $0xd0] sm:$0xf]
  %v647 = vld [vmem:[%s3 + $0xd4] sm:$0xf]
  %v648 = vld [vmem:[%s3 + $0xd8] sm:$0xf]
  %v649 = vld [vmem:[%s3 + $0xdc] sm:$0xf]
  %v650 = vld [vmem:[%s3 + $0xe0] sm:$0xf]
  %v651 = vld [vmem:[%s3 + $0xe4] sm:$0xf]
  %v652 = vld [vmem:[%s3 + $0xe8] sm:$0xf]
  %v653 = vld [vmem:[%s3 + $0xec] sm:$0xf]
  %v654 = vld [vmem:[%s3 + $0xf0] sm:$0xf]
  %v655 = vld [vmem:[%s3 + $0xf4] sm:$0xf]
  %v656 = vld [vmem:[%s3 + $0xf8] sm:$0xf]
  %v657 = vld [vmem:[%s3 + $0xfc] sm:$0xf]
  %v658 = vld [vmem:[%s3 + $0x100] sm:$0xf]
  %v659 = vld [vmem:[%s3 + $0x104] sm:$0xf]
  %v660 = vld [vmem:[%s3 + $0x108] sm:$0xf]
  %v661 = vld [vmem:[%s3 + $0x10c] sm:$0xf]
  %v662 = vld [vmem:[%s3 + $0x110] sm:$0xf]
  %v663 = vld [vmem:[%s3 + $0x114] sm:$0xf]
  %v664 = vld [vmem:[%s3 + $0x118] sm:$0xf]
  %v665 = vld [vmem:[%s3 + $0x11c] sm:$0xf]
  %v666 = vld [vmem:[%s3 + $0x120] sm:$0xf]
  %v667 = vld [vmem:[%s3 + $0x124] sm:$0xf]
  %v668 = vld [vmem:[%s3 + $0x128] sm:$0xf]
  %v669 = vld [vmem:[%s3 + $0x12c] sm:$0xf]
  %v670 = vld [vmem:[%s3 + $0x130] sm:$0xf]
  %v671 = vld [vmem:[%s3 + $0x134] sm:$0xf]
  %v672 = vld [vmem:[%s3 + $0x138] sm:$0xf]
  %v673 = vld [vmem:[%s3 + $0x13c] sm:$0xf]
  %v678 = vrot.slane %v590, 1
  %v679 = vrot.slane %v591, 1
  %v680 = vsel %vm149, %v678, %v679
  %v681 = vrot.slane %v592, 1
  %v682 = vrot.slane %v593, 1
  %v683 = vsel %vm149, %v681, %v682
  %v686 = vpack.c.bf16 %v592, %v590
  %v687 = vpack.c.bf16 %v683, %v680
  %v688 = vrot.slane %v590, 2
  %v689 = vrot.slane %v591, 2
  %v690 = vsel %vm160, %v688, %v689
  %v691 = vrot.slane %v680, 2
  %v692 = vrot.slane %v679, 2
  %v693 = vsel %vm160, %v691, %v692
  %v694 = vrot.slane %v592, 2
  %v695 = vrot.slane %v593, 2
  %v696 = vsel %vm160, %v694, %v695
  %v697 = vrot.slane %v683, 2
  %v698 = vrot.slane %v682, 2
  %v699 = vsel %vm160, %v697, %v698
  %v704 = vpack.c.bf16 %v696, %v690
  %v705 = vpack.c.bf16 %v699, %v693
  %v738 = vunpack.c.l.b16 %v626
  %v739 = vunpack.c.l.b16 %v627
  %v740 = vunpack.c.l.b16 %v628
  %v741 = vunpack.c.l.b16 %v629
  %v742 = vunpack.c.l.b16 %v630
  %v743 = vunpack.c.l.b16 %v631
  %v744 = vunpack.c.l.b16 %v632
  %v745 = vunpack.c.l.b16 %v633
  %v746 = vunpack.c.l.b16 %v634
  %v747 = vunpack.c.l.b16 %v635
  %v748 = vunpack.c.l.b16 %v636
  %v749 = vunpack.c.l.b16 %v637
  %v750 = vunpack.c.l.b16 %v638
  %v751 = vunpack.c.l.b16 %v639
  %v752 = vunpack.c.l.b16 %v640
  %v753 = vunpack.c.l.b16 %v641
  %v754 = vunpack.c.l.b16 %v642
  %v755 = vunpack.c.l.b16 %v643
  %v756 = vunpack.c.l.b16 %v644
  %v757 = vunpack.c.l.b16 %v645
  %v758 = vunpack.c.l.b16 %v646
  %v759 = vunpack.c.l.b16 %v647
  %v760 = vunpack.c.l.b16 %v648
  %v761 = vunpack.c.l.b16 %v649
  %v762 = vunpack.c.l.b16 %v650
  %v763 = vunpack.c.l.b16 %v651
  %v764 = vunpack.c.l.b16 %v652
  %v765 = vunpack.c.l.b16 %v653
  %v766 = vunpack.c.l.b16 %v654
  %v767 = vunpack.c.l.b16 %v655
  %v768 = vunpack.c.l.b16 %v656
  %v769 = vunpack.c.l.b16 %v657
  %v770 = vpack.c.b16 %v739, %v738
  %v771 = vpack.c.b16 %v741, %v740
  %v772 = vpack.c.b16 %v743, %v742
  %v773 = vpack.c.b16 %v745, %v744
  %v774 = vpack.c.b16 %v747, %v746
  %v775 = vpack.c.b16 %v749, %v748
  %v776 = vpack.c.b16 %v751, %v750
  %v777 = vpack.c.b16 %v753, %v752
  %v778 = vpack.c.b16 %v755, %v754
  %v779 = vpack.c.b16 %v757, %v756
  %v780 = vpack.c.b16 %v759, %v758
  %v781 = vpack.c.b16 %v761, %v760
  %v782 = vpack.c.b16 %v763, %v762
  %v783 = vpack.c.b16 %v765, %v764
  %v784 = vpack.c.b16 %v767, %v766
  %v785 = vpack.c.b16 %v769, %v768
  %802 = vmatprep.subr.bf16.mxu0 0
  %803 = vmatpush1.bf16.msra.mxu0 %v777
  %804 = vmatprep.subr.bf16.mxu0 0
  %805 = vmatpush1.bf16.msra.mxu0 %v776
  %806 = vmatprep.subr.bf16.mxu0 0
  %807 = vmatpush1.bf16.msra.mxu0 %v775
  %808 = vmatprep.subr.bf16.mxu0 0
  %809 = vmatpush1.bf16.msra.mxu0 %v774
  %810 = vmatprep.subr.bf16.mxu0 0
  %811 = vmatpush1.bf16.msra.mxu0 %v773
  %812 = vmatprep.subr.bf16.mxu0 0
  %813 = vmatpush1.bf16.msra.mxu0 %v772
  %814 = vmatprep.subr.bf16.mxu0 0
  %815 = vmatpush1.bf16.msra.mxu0 %v771
  %816 = vmatprep.subr.bf16.mxu0 0
  %817 = vmatpush1.bf16.msra.mxu0 %v770
  %818 = vmatprep.subr.bf16.mxu0 0
  %819 = vmatpush2.bf16.msra.mxu0 %v785
  %820 = vmatprep.subr.bf16.mxu0 0
  %821 = vmatpush2.bf16.msra.mxu0 %v784
  %822 = vmatprep.subr.bf16.mxu0 0
  %823 = vmatpush2.bf16.msra.mxu0 %v783
  %824 = vmatprep.subr.bf16.mxu0 0
  %825 = vmatpush2.bf16.msra.mxu0 %v782
  %826 = vmatprep.subr.bf16.mxu0 0
  %827 = vmatpush2.bf16.msra.mxu0 %v781
  %828 = vmatprep.subr.bf16.mxu0 0
  %829 = vmatpush2.bf16.msra.mxu0 %v780
  %830 = vmatprep.subr.bf16.mxu0 0
  %831 = vmatpush2.bf16.msra.mxu0 %v779
  %832 = vmatprep.subr.bf16.mxu0 0
  %833 = vmatpush2.bf16.msra.mxu0 %v778
  %834 = vmatprep.mubr.bf16.mxu0 %v705
  %835 = vmatmul.mubr.bf16.gmra.mxu0 %v704
  %v836 = vpop.f32.mrf.mxu0
  %v837 = vadd.f32 0.0, %v836
  %v838 = vpop.f32.mrf.mxu0
  %v839 = vpop.f32.mrf.mxu0
  %v840 = vadd.f32 0.0, %v839
  %v841 = vpop.f32.mrf.mxu0
  %842 = vdwg.mxu0
  %v875 = vunpack.c.l.b16 %v594
  %v876 = vunpack.c.l.b16 %v595
  %v877 = vunpack.c.l.b16 %v596
  %v878 = vunpack.c.l.b16 %v597
  %v879 = vunpack.c.l.b16 %v598
  %v880 = vunpack.c.l.b16 %v599
  %v881 = vunpack.c.l.b16 %v600
  %v882 = vunpack.c.l.b16 %v601
  %v883 = vunpack.c.l.b16 %v602
  %v884 = vunpack.c.l.b16 %v603
  %v885 = vunpack.c.l.b16 %v604
  %v886 = vunpack.c.l.b16 %v605
  %v887 = vunpack.c.l.b16 %v606
  %v888 = vunpack.c.l.b16 %v607
  %v889 = vunpack.c.l.b16 %v608
  %v890 = vunpack.c.l.b16 %v609
  %v891 = vunpack.c.l.b16 %v610
  %v892 = vunpack.c.l.b16 %v611
  %v893 = vunpack.c.l.b16 %v612
  %v894 = vunpack.c.l.b16 %v613
  %v895 = vunpack.c.l.b16 %v614
  %v896 = vunpack.c.l.b16 %v615
  %v897 = vunpack.c.l.b16 %v616
  %v898 = vunpack.c.l.b16 %v617
  %v899 = vunpack.c.l.b16 %v618
  %v900 = vunpack.c.l.b16 %v619
  %v901 = vunpack.c.l.b16 %v620
  %v902 = vunpack.c.l.b16 %v621
  %v903 = vunpack.c.l.b16 %v622
  %v904 = vunpack.c.l.b16 %v623
  %v905 = vunpack.c.l.b16 %v624
  %v906 = vunpack.c.l.b16 %v625
  %v907 = vpack.c.b16 %v876, %v875
  %v908 = vpack.c.b16 %v878, %v877
  %v909 = vpack.c.b16 %v880, %v879
  %v910 = vpack.c.b16 %v882, %v881
  %v911 = vpack.c.b16 %v884, %v883
  %v912 = vpack.c.b16 %v886, %v885
  %v913 = vpack.c.b16 %v888, %v887
  %v914 = vpack.c.b16 %v890, %v889
  %v915 = vpack.c.b16 %v892, %v891
  %v916 = vpack.c.b16 %v894, %v893
  %v917 = vpack.c.b16 %v896, %v895
  %v918 = vpack.c.b16 %v898, %v897
  %v919 = vpack.c.b16 %v900, %v899
  %v920 = vpack.c.b16 %v902, %v901
  %v921 = vpack.c.b16 %v904, %v903
  %v922 = vpack.c.b16 %v906, %v905
  %939 = vmatprep.subr.bf16.mxu0 0
  %940 = vmatpush1.bf16.msra.mxu0 %v914
  %941 = vmatprep.subr.bf16.mxu0 0
  %942 = vmatpush1.bf16.msra.mxu0 %v913
  %943 = vmatprep.subr.bf16.mxu0 0
  %944 = vmatpush1.bf16.msra.mxu0 %v912
  %945 = vmatprep.subr.bf16.mxu0 0
  %946 = vmatpush1.bf16.msra.mxu0 %v911
  %947 = vmatprep.subr.bf16.mxu0 0
  %948 = vmatpush1.bf16.msra.mxu0 %v910
  %949 = vmatprep.subr.bf16.mxu0 0
  %950 = vmatpush1.bf16.msra.mxu0 %v909
  %951 = vmatprep.subr.bf16.mxu0 0
  %952 = vmatpush1.bf16.msra.mxu0 %v908
  %953 = vmatprep.subr.bf16.mxu0 0
  %954 = vmatpush1.bf16.msra.mxu0 %v907
  %955 = vmatprep.subr.bf16.mxu0 0
  %956 = vmatpush2.bf16.msra.mxu0 %v922
  %957 = vmatprep.subr.bf16.mxu0 0
  %958 = vmatpush2.bf16.msra.mxu0 %v921
  %959 = vmatprep.subr.bf16.mxu0 0
  %960 = vmatpush2.bf16.msra.mxu0 %v920
  %961 = vmatprep.subr.bf16.mxu0 0
  %962 = vmatpush2.bf16.msra.mxu0 %v919
  %963 = vmatprep.subr.bf16.mxu0 0
  %964 = vmatpush2.bf16.msra.mxu0 %v918
  %965 = vmatprep.subr.bf16.mxu0 0
  %966 = vmatpush2.bf16.msra.mxu0 %v917
  %967 = vmatprep.subr.bf16.mxu0 0
  %968 = vmatpush2.bf16.msra.mxu0 %v916
  %969 = vmatprep.subr.bf16.mxu0 0
  %970 = vmatpush2.bf16.msra.mxu0 %v915
  %971 = vmatprep.mubr.bf16.mxu0 %v687
  %972 = vmatmul.mubr.bf16.gmra.mxu0 %v686
  %v973 = vpop.f32.mrf.mxu0
  %v974 = vadd.f32 %v837, %v973
  %v975 = vpop.f32.mrf.mxu0
  %v976 = vpop.f32.mrf.mxu0
  %v977 = vadd.f32 %v840, %v976
  %v978 = vpop.f32.mrf.mxu0
  %979 = vdwg.mxu0
  %v980 = vrot.slane %v590, 4
  %v981 = vrot.slane %v591, 4
  %v982 = vsel %vm453, %v980, %v981
  %v983 = vrot.slane %v592, 4
  %v984 = vrot.slane %v593, 4
  %v985 = vsel %vm453, %v983, %v984
  %v988 = vpack.c.bf16 %v985, %v982
  %v1005 = vunpack.c.l.b16 %v658
  %v1006 = vunpack.c.l.b16 %v659
  %v1007 = vunpack.c.l.b16 %v660
  %v1008 = vunpack.c.l.b16 %v661
  %v1009 = vunpack.c.l.b16 %v662
  %v1010 = vunpack.c.l.b16 %v663
  %v1011 = vunpack.c.l.b16 %v664
  %v1012 = vunpack.c.l.b16 %v665
  %v1013 = vunpack.c.l.b16 %v666
  %v1014 = vunpack.c.l.b16 %v667
  %v1015 = vunpack.c.l.b16 %v668
  %v1016 = vunpack.c.l.b16 %v669
  %v1017 = vunpack.c.l.b16 %v670
  %v1018 = vunpack.c.l.b16 %v671
  %v1019 = vunpack.c.l.b16 %v672
  %v1020 = vunpack.c.l.b16 %v673
  %v1021 = vpack.c.b16 %v1006, %v1005
  %v1022 = vpack.c.b16 %v1008, %v1007
  %v1023 = vpack.c.b16 %v1010, %v1009
  %v1024 = vpack.c.b16 %v1012, %v1011
  %v1025 = vpack.c.b16 %v1014, %v1013
  %v1026 = vpack.c.b16 %v1016, %v1015
  %v1027 = vpack.c.b16 %v1018, %v1017
  %v1028 = vpack.c.b16 %v1020, %v1019
  %1037 = vmatprep.subr.bf16.mxu0 0
  %1038 = vmatpush1.bf16.msra.mxu0 %v1028
  %1039 = vmatprep.subr.bf16.mxu0 0
  %1040 = vmatpush1.bf16.msra.mxu0 %v1027
  %1041 = vmatprep.subr.bf16.mxu0 0
  %1042 = vmatpush1.bf16.msra.mxu0 %v1026
  %1043 = vmatprep.subr.bf16.mxu0 0
  %1044 = vmatpush1.bf16.msra.mxu0 %v1025
  %1045 = vmatprep.subr.bf16.mxu0 0
  %1046 = vmatpush1.bf16.msra.mxu0 %v1024
  %1047 = vmatprep.subr.bf16.mxu0 0
  %1048 = vmatpush1.bf16.msra.mxu0 %v1023
  %1049 = vmatprep.subr.bf16.mxu0 0
  %1050 = vmatpush1.bf16.msra.mxu0 %v1022
  %1051 = vmatprep.subr.bf16.mxu0 0
  %1052 = vmatpush1.bf16.msra.mxu0 %v1021
  %1053 = vmatprep.subr.bf16.mxu0 0
  %1054 = vmatpush2.bf16.msra.mxu0 0
  %1055 = vmatprep.subr.bf16.mxu0 0
  %1056 = vmatpush2.bf16.msra.mxu0 0
  %1057 = vmatprep.subr.bf16.mxu0 0
  %1058 = vmatpush2.bf16.msra.mxu0 0
  %1059 = vmatprep.subr.bf16.mxu0 0
  %1060 = vmatpush2.bf16.msra.mxu0 0
  %1061 = vmatprep.subr.bf16.mxu0 0
  %1062 = vmatpush2.bf16.msra.mxu0 0
  %1063 = vmatprep.subr.bf16.mxu0 0
  %1064 = vmatpush2.bf16.msra.mxu0 0
  %1065 = vmatprep.subr.bf16.mxu0 0
  %1066 = vmatpush2.bf16.msra.mxu0 0
  %1067 = vmatprep.subr.bf16.mxu0 0
  %1068 = vmatpush2.bf16.msra.mxu0 0
  %1069 = vmatprep.mubr.bf16.mxu0 0
  %1070 = vmatmul.mubr.bf16.gmra.mxu0 %v988
  %v1071 = vpop.f32.mrf.mxu0
  %v1072 = vadd.f32 0.0, %v1071
  %v1073 = vpop.f32.mrf.mxu0
  %v1074 = vpop.f32.mrf.mxu0
  %v1075 = vadd.f32 0.0, %v1074
  %v1076 = vpop.f32.mrf.mxu0
  %1077 = vdwg.mxu0
  %v1078 = vadd.f32 %v974, %v1072
  %v1079 = vadd.f32 %v977, %v1075
  %s1080 = scalar_lea.vmem %s4, 1
  %v1081 = vld [vmem:[%s1080] sm:$0x1]
  %v1083 = vlaneseq
  %v1084 = vshrl.u32 %v1083, 7
  %v1085 = vsub.s32 0, %v1084
  %v1086 = vrot.slane %v1081, %v1085
  %v1088 = vmul.f32 %v1078, %v1086
  %v1089 = vmul.f32 %v1079, %v1086
  %s1090 = scalar_lea.vmem %s5, 1
  %v1091 = vld [vmem:[%s1090] sm:$0x1]
  %v1093 = vlaneseq
  %v1094 = vshrl.u32 %v1093, 7
  %v1095 = vsub.s32 0, %v1094
  %v1096 = vrot.slane %v1091, %v1095
  %v1098 = vadd.f32 %v1088, %v1096
  %v1099 = vadd.f32 %v1089, %v1096
  %v1100 = vld [vmem:[%s6] sm:$0xf]
  %v1101 = vld [vmem:[%s6 + $0x4] sm:$0xf]
  %v1102 = vunpack.c.l.bf16 %v1100
  %v1103 = vunpack.c.l.bf16 %v1101
  %s1104 = scalar_lea.vmem %s0, 16
  %v1105 = vld [vmem:[%s1104] sm:$0xff]
  %v1106 = vld [vmem:[%s1104 + $0x8] sm:$0xff]
  %1108 = vset.pattern.permute.xlu0 0
  %1109 = vperm.xlu0 %1108, %v1105
  %v1110 = vpop.permute.xlu0 %1109
  %1113 = vset.pattern.permute.xlu0 0
  %1114 = vperm.xlu0 %1113, %v1106
  %v1115 = vpop.permute.xlu0 %1114
  %v1117 = vmul.f32 %v1102, %v1110
  %v1118 = vmul.f32 %v1103, %v1115
  %v1119 = vpack.c.bf16 %v1118, %v1117
  %v1120 = vld [vmem:[#allocation2 + $0x2] sm:$0xff]
  %v1121 = vld [vmem:[#allocation2 + $0x12] sm:$0xff]
  %v1122 = vpack.c.bf16 %v1121, %v1120
  %v1123 = vld [vmem:[%s7] sm:$0xf]
  %v1124 = vld [vmem:[%s7 + $0x4] sm:$0xf]
  %v1125 = vld [vmem:[%s7 + $0x8] sm:$0xf]
  %v1126 = vld [vmem:[%s7 + $0xc] sm:$0xf]
  %v1127 = vld [vmem:[%s7 + $0x10] sm:$0xf]
  %v1128 = vld [vmem:[%s7 + $0x14] sm:$0xf]
  %v1129 = vld [vmem:[%s7 + $0x18] sm:$0xf]
  %v1130 = vld [vmem:[%s7 + $0x1c] sm:$0xf]
  %v1131 = vld [vmem:[%s7 + $0x20] sm:$0xf]
  %v1132 = vld [vmem:[%s7 + $0x24] sm:$0xf]
  %v1133 = vld [vmem:[%s7 + $0x28] sm:$0xf]
  %v1134 = vld [vmem:[%s7 + $0x2c] sm:$0xf]
  %v1135 = vld [vmem:[%s7 + $0x30] sm:$0xf]
  %v1136 = vld [vmem:[%s7 + $0x34] sm:$0xf]
  %v1137 = vld [vmem:[%s7 + $0x38] sm:$0xf]
  %v1138 = vld [vmem:[%s7 + $0x3c] sm:$0xf]
  %v1139 = vld [vmem:[%s7 + $0x40] sm:$0xf]
  %v1140 = vld [vmem:[%s7 + $0x44] sm:$0xf]
  %v1141 = vld [vmem:[%s7 + $0x48] sm:$0xf]
  %v1142 = vld [vmem:[%s7 + $0x4c] sm:$0xf]
  %v1143 = vld [vmem:[%s7 + $0x50] sm:$0xf]
  %v1144 = vld [vmem:[%s7 + $0x54] sm:$0xf]
  %v1145 = vld [vmem:[%s7 + $0x58] sm:$0xf]
  %v1146 = vld [vmem:[%s7 + $0x5c] sm:$0xf]
  %v1147 = vld [vmem:[%s7 + $0x60] sm:$0xf]
  %v1148 = vld [vmem:[%s7 + $0x64] sm:$0xf]
  %v1149 = vld [vmem:[%s7 + $0x68] sm:$0xf]
  %v1150 = vld [vmem:[%s7 + $0x6c] sm:$0xf]
  %v1151 = vld [vmem:[%s7 + $0x70] sm:$0xf]
  %v1152 = vld [vmem:[%s7 + $0x74] sm:$0xf]
  %v1153 = vld [vmem:[%s7 + $0x78] sm:$0xf]
  %v1154 = vld [vmem:[%s7 + $0x7c] sm:$0xf]
  %v1155 = vld [vmem:[%s8] sm:$0x1]
  %v1157 = vlaneseq
  %v1158 = vshrl.u32 %v1157, 7
  %v1159 = vsub.s32 0, %v1158
  %v1160 = vrot.slane %v1155, %v1159
  %v1194 = vunpack.c.l.b16 %v1123
  %v1195 = vunpack.c.l.b16 %v1124
  %v1196 = vunpack.c.l.b16 %v1125
  %v1197 = vunpack.c.l.b16 %v1126
  %v1198 = vunpack.c.l.b16 %v1127
  %v1199 = vunpack.c.l.b16 %v1128
  %v1200 = vunpack.c.l.b16 %v1129
  %v1201 = vunpack.c.l.b16 %v1130
  %v1202 = vunpack.c.l.b16 %v1131
  %v1203 = vunpack.c.l.b16 %v1132
  %v1204 = vunpack.c.l.b16 %v1133
  %v1205 = vunpack.c.l.b16 %v1134
  %v1206 = vunpack.c.l.b16 %v1135
  %v1207 = vunpack.c.l.b16 %v1136
  %v1208 = vunpack.c.l.b16 %v1137
  %v1209 = vunpack.c.l.b16 %v1138
  %v1210 = vunpack.c.l.b16 %v1139
  %v1211 = vunpack.c.l.b16 %v1140
  %v1212 = vunpack.c.l.b16 %v1141
  %v1213 = vunpack.c.l.b16 %v1142
  %v1214 = vunpack.c.l.b16 %v1143
  %v1215 = vunpack.c.l.b16 %v1144
  %v1216 = vunpack.c.l.b16 %v1145
  %v1217 = vunpack.c.l.b16 %v1146
  %v1218 = vunpack.c.l.b16 %v1147
  %v1219 = vunpack.c.l.b16 %v1148
  %v1220 = vunpack.c.l.b16 %v1149
  %v1221 = vunpack.c.l.b16 %v1150
  %v1222 = vunpack.c.l.b16 %v1151
  %v1223 = vunpack.c.l.b16 %v1152
  %v1224 = vunpack.c.l.b16 %v1153
  %v1225 = vunpack.c.l.b16 %v1154
  %v1226 = vpack.c.b16 %v1195, %v1194
  %v1227 = vpack.c.b16 %v1197, %v1196
  %v1228 = vpack.c.b16 %v1199, %v1198
  %v1229 = vpack.c.b16 %v1201, %v1200
  %v1230 = vpack.c.b16 %v1203, %v1202
  %v1231 = vpack.c.b16 %v1205, %v1204
  %v1232 = vpack.c.b16 %v1207, %v1206
  %v1233 = vpack.c.b16 %v1209, %v1208
  %v1234 = vpack.c.b16 %v1211, %v1210
  %v1235 = vpack.c.b16 %v1213, %v1212
  %v1236 = vpack.c.b16 %v1215, %v1214
  %v1237 = vpack.c.b16 %v1217, %v1216
  %v1238 = vpack.c.b16 %v1219, %v1218
  %v1239 = vpack.c.b16 %v1221, %v1220
  %v1240 = vpack.c.b16 %v1223, %v1222
  %v1241 = vpack.c.b16 %v1225, %v1224
  %1258 = vmatprep.subr.bf16.mxu0 0
  %1259 = vmatpush1.bf16.msra.mxu0 %v1233
  %1260 = vmatprep.subr.bf16.mxu0 0
  %1261 = vmatpush1.bf16.msra.mxu0 %v1232
  %1262 = vmatprep.subr.bf16.mxu0 0
  %1263 = vmatpush1.bf16.msra.mxu0 %v1231
  %1264 = vmatprep.subr.bf16.mxu0 0
  %1265 = vmatpush1.bf16.msra.mxu0 %v1230
  %1266 = vmatprep.subr.bf16.mxu0 0
  %1267 = vmatpush1.bf16.msra.mxu0 %v1229
  %1268 = vmatprep.subr.bf16.mxu0 0
  %1269 = vmatpush1.bf16.msra.mxu0 %v1228
  %1270 = vmatprep.subr.bf16.mxu0 0
  %1271 = vmatpush1.bf16.msra.mxu0 %v1227
  %1272 = vmatprep.subr.bf16.mxu0 0
  %1273 = vmatpush1.bf16.msra.mxu0 %v1226
  %1274 = vmatprep.subr.bf16.mxu0 0
  %1275 = vmatpush2.bf16.msra.mxu0 %v1241
  %1276 = vmatprep.subr.bf16.mxu0 0
  %1277 = vmatpush2.bf16.msra.mxu0 %v1240
  %1278 = vmatprep.subr.bf16.mxu0 0
  %1279 = vmatpush2.bf16.msra.mxu0 %v1239
  %1280 = vmatprep.subr.bf16.mxu0 0
  %1281 = vmatpush2.bf16.msra.mxu0 %v1238
  %1282 = vmatprep.subr.bf16.mxu0 0
  %1283 = vmatpush2.bf16.msra.mxu0 %v1237
  %1284 = vmatprep.subr.bf16.mxu0 0
  %1285 = vmatpush2.bf16.msra.mxu0 %v1236
  %1286 = vmatprep.subr.bf16.mxu0 0
  %1287 = vmatpush2.bf16.msra.mxu0 %v1235
  %1288 = vmatprep.subr.bf16.mxu0 0
  %1289 = vmatpush2.bf16.msra.mxu0 %v1234
  %1290 = vmatprep.mubr.bf16.mxu0 %v1122
  %1291 = vmatmul.mubr.bf16.gmra.mxu0 %v1119
  %v1292 = vpop.f32.mrf.mxu0
  %v1293 = vadd.f32 %v1160, %v1292
  %v1294 = vpop.f32.mrf.mxu0
  %v1295 = vpop.f32.mrf.mxu0
  %v1296 = vadd.f32 %v1160, %v1295
  %v1297 = vpop.f32.mrf.mxu0
  %1298 = vdwg.mxu0
  %v1299 = vadd.f32 %v1098, %v1293
  %v1300 = vadd.f32 %v1099, %v1296
  %v1301 = vmax.f32 %v1299, 0.0
  %v1302 = vmax.f32 %v1300, 0.0
  %v1303 = vpack.c.bf16 %v1301, %v1301
  %v1304 = vpack.c.bf16 %v1302, %v1302
  %1305 = vst [vmem:[%s9] sm:$0xf] %v1303
  %1306 = vst [vmem:[%s9 + $0x4] sm:$0xf] %v1304
  // Predicated region
  $region38: #{_lambda_.6} parent=0 // pred_check
    _
  $region39: #{_lambda_.6} parent=0 // pred_check_branch
    %1308 = sbr.rel (0) target = $region41
  $region40: #{_lambda_.6} parent=0 // pred_region
    _
  $region41: #{_lambda_.6} parent=0 // pred_fallthru
    _
  // Predicated region
  $region42: #{_lambda_.6} parent=0 // pred_check
    _
  $region43: #{_lambda_.6} parent=0 // pred_check_branch
    %1310 = sbr.rel (0) target = $region45
  $region44: #{_lambda_.6} parent=0 // pred_region
    _
  $region45: #{_lambda_.6} parent=0 // pred_fallthru
    _

// kernel: _lambda_.7
$region0: #{_lambda_.7}
  #allocation0 [shape = 'u32[]', space=smem, size = 0x4, offset = 0x4, fixed_abs, tag = 'smem constant byte address 0x4 - core index']
  #allocation1 [shape = 'u32[144,128]{1,0:T(1,128)}', space=vmem, size = 0x12000, scoped, tag = 'internal scratch']
  #allocation2 [shape = 'f32[2,10,128]{2,1,0:T(8,128)}', space=vmem, size = 0x4000, scoped, tag = 'scratch operand']
  #allocation3 [shape = 'f32[2,10,128]{2,1,0:T(8,128)}', space=vmem, size = 0x4000, scoped, tag = 'scratch operand']
  %s0 = inlined_call_operand.vmem [shape: f32[3,2,8,1], index: 0, kind: input, shape index: {}]
  %s1 = inlined_call_operand.vmem [shape: bf16[2,8,128], index: 1, kind: input, shape index: {}]
  %s2 = inlined_call_operand.vmem [shape: bf16[384,128], index: 2, kind: input, shape index: {}]
  %s3 = inlined_call_operand.vmem [shape: bf16[1,384,128], index: 3, kind: input, shape index: {}]
  %s4 = inlined_call_operand.vmem [shape: f32[2,1,128], index: 4, kind: input, shape index: {}]
  %s5 = inlined_call_operand.vmem [shape: f32[2,1,128], index: 5, kind: input, shape index: {}]
  %s6 = inlined_call_operand.vmem [shape: bf16[2,8,128], index: 6, kind: input, shape index: {}]
  %s7 = inlined_call_operand.vmem [shape: bf16[2,8,128], index: 7, kind: input, shape index: {}]
  %s8 = inlined_call_operand.vmem [shape: bf16[384,128], index: 8, kind: input, shape index: {}]
  %s9 = inlined_call_operand.vmem [shape: f32[1,128], index: 9, kind: input, shape index: {}]
  %s10 = inlined_call_operand.vmem [shape: bf16[2,8,128], index: 10, kind: output, shape index: {}]
  %s11 = sld [smem:[#allocation0]]
  $region50: #{_lambda_.7} parent=0
    _
  %s13 = ssub.s32 1, %s11
  %s14 = scalar_select 0, %s13, %s11
  // Predicated region
  $region2: #{_lambda_.7} parent=0 // pred_check
    _
  $region3: #{_lambda_.7} parent=0 // pred_check_branch
    %16 = sbr.rel (0) target = $region5
  $region4: #{_lambda_.7} parent=0 // pred_region
    _
  $region5: #{_lambda_.7} parent=0 // pred_fallthru
    _
  // Predicated region
  $region6: #{_lambda_.7} parent=0 // pred_check
    _
  $region7: #{_lambda_.7} parent=0 // pred_check_branch
    %18 = sbr.rel (0) target = $region9
  $region8: #{_lambda_.7} parent=0 // pred_region
    _
  $region9: #{_lambda_.7} parent=0 // pred_fallthru
    _
  // Predicated region
  $region10: #{_lambda_.7} parent=0 // pred_check
    _
  $region11: #{_lambda_.7} parent=0 // pred_check_branch
    %20 = sbr.rel (0) target = $region13
  $region12: #{_lambda_.7} parent=0 // pred_region
    _
  $region13: #{_lambda_.7} parent=0 // pred_fallthru
    _
  // Predicated region
  $region14: #{_lambda_.7} parent=0 // pred_check
    _
  $region15: #{_lambda_.7} parent=0 // pred_check_branch
    %22 = sbr.rel (0) target = $region17
  $region16: #{_lambda_.7} parent=0 // pred_region
    _
  $region17: #{_lambda_.7} parent=0 // pred_fallthru
    _
  // Predicated region
  $region18: #{_lambda_.7} parent=0 // pred_check
    _
  $region19: #{_lambda_.7} parent=0 // pred_check_branch
    %24 = sbr.rel (0) target = $region21
  $region20: #{_lambda_.7} parent=0 // pred_region
    _
  $region21: #{_lambda_.7} parent=0 // pred_fallthru
    _
  // Predicated region
  $region22: #{_lambda_.7} parent=0 // pred_check
    _
  $region23: #{_lambda_.7} parent=0 // pred_check_branch
    %26 = sbr.rel (0) target = $region25
  $region24: #{_lambda_.7} parent=0 // pred_region
    _
  $region25: #{_lambda_.7} parent=0 // pred_fallthru
    _
  // Predicated region
  $region26: #{_lambda_.7} parent=0 // pred_check
    _
  $region27: #{_lambda_.7} parent=0 // pred_check_branch
    %28 = sbr.rel (0) target = $region29
  $region28: #{_lambda_.7} parent=0 // pred_region
    _
  $region29: #{_lambda_.7} parent=0 // pred_fallthru
    _
  // Predicated region
  $region30: #{_lambda_.7} parent=0 // pred_check
    _
  $region31: #{_lambda_.7} parent=0 // pred_check_branch
    %30 = sbr.rel (0) target = $region33
  $region32: #{_lambda_.7} parent=0 // pred_region
    _
  $region33: #{_lambda_.7} parent=0 // pred_fallthru
    _
  // Predicated region
  $region34: #{_lambda_.7} parent=0 // pred_check
    _
  $region35: #{_lambda_.7} parent=0 // pred_check_branch
    %32 = sbr.rel (0) target = $region37
  $region36: #{_lambda_.7} parent=0 // pred_region
    _
  $region37: #{_lambda_.7} parent=0 // pred_fallthru
    _
  // Predicated region
  $region38: #{_lambda_.7} parent=0 // pred_check
    _
  $region39: #{_lambda_.7} parent=0 // pred_check_branch
    %34 = sbr.rel (0) target = $region41
  $region40: #{_lambda_.7} parent=0 // pred_region
    _
  $region41: #{_lambda_.7} parent=0 // pred_fallthru
    _
  %36 = vst [vmem:[#allocation2] sm:$0x1] 0.0
  %37 = vst [vmem:[#allocation2 + $0x10] sm:$0x1] 0.0
  %38 = vst [vmem:[#allocation2 + $0x9] sm:$0x1] 0.0
  %39 = vst [vmem:[#allocation2 + $0x19] sm:$0x1] 0.0
  %v40 = vld [vmem:[%s1] sm:$0xf]
  %v41 = vld [vmem:[%s1 + $0x4] sm:$0xf]
  %v42 = vunpack.c.l.bf16 %v40
  %v43 = vunpack.c.l.bf16 %v41
  %v44 = vld [vmem:[%s0] sm:$0xff]
  %v45 = vld [vmem:[%s0 + $0x8] sm:$0xff]
  %47 = vset.pattern.permute.xlu0 0
  %48 = vperm.xlu0 %47, %v44
  %v49 = vpop.permute.xlu0 %48
  %52 = vset.pattern.permute.xlu0 0
  %53 = vperm.xlu0 %52, %v45
  %v54 = vpop.permute.xlu0 %53
  %v56 = vmul.f32 %v42, %v49
  %v57 = vmul.f32 %v43, %v54
  %58 = vst [vmem:[#allocation2 + $0x1] sm:$0xff] %v56
  %59 = vst [vmem:[#allocation2 + $0x11] sm:$0xff] %v57
  %60 = vst [vmem:[#allocation3] sm:$0x1] 0.0
  %61 = vst [vmem:[#allocation3 + $0x10] sm:$0x1] 0.0
  %62 = vst [vmem:[#allocation3 + $0x9] sm:$0x1] 0.0
  %63 = vst [vmem:[#allocation3 + $0x19] sm:$0x1] 0.0
  %v64 = vld [vmem:[#allocation2] sm:$0xff]
  %v65 = vld [vmem:[#allocation2 + $0x8] sm:$0x3]
  %v66 = vld [vmem:[#allocation2 + $0x10] sm:$0xff]
  %v67 = vld [vmem:[#allocation2 + $0x18] sm:$0x3]
  %v68 = vld [vmem:[%s2] sm:$0xf]
  %v69 = vld [vmem:[%s2 + $0x4] sm:$0xf]
  %v70 = vld [vmem:[%s2 + $0x8] sm:$0xf]
  %v71 = vld [vmem:[%s2 + $0xc] sm:$0xf]
  %v72 = vld [vmem:[%s2 + $0x10] sm:$0xf]
  %v73 = vld [vmem:[%s2 + $0x14] sm:$0xf]
  %v74 = vld [vmem:[%s2 + $0x18] sm:$0xf]
  %v75 = vld [vmem:[%s2 + $0x1c] sm:$0xf]
  %v76 = vld [vmem:[%s2 + $0x20] sm:$0xf]
  %v77 = vld [vmem:[%s2 + $0x24] sm:$0xf]
  %v78 = vld [vmem:[%s2 + $0x28] sm:$0xf]
  %v79 = vld [vmem:[%s2 + $0x2c] sm:$0xf]
  %v80 = vld [vmem:[%s2 + $0x30] sm:$0xf]
  %v81 = vld [vmem:[%s2 + $0x34] sm:$0xf]
  %v82 = vld [vmem:[%s2 + $0x38] sm:$0xf]
  %v83 = vld [vmem:[%s2 + $0x3c] sm:$0xf]
  %v84 = vld [vmem:[%s2 + $0x40] sm:$0xf]
  %v85 = vld [vmem:[%s2 + $0x44] sm:$0xf]
  %v86 = vld [vmem:[%s2 + $0x48] sm:$0xf]
  %v87 = vld [vmem:[%s2 + $0x4c] sm:$0xf]
  %v88 = vld [vmem:[%s2 + $0x50] sm:$0xf]
  %v89 = vld [vmem:[%s2 + $0x54] sm:$0xf]
  %v90 = vld [vmem:[%s2 + $0x58] sm:$0xf]
  %v91 = vld [vmem:[%s2 + $0x5c] sm:$0xf]
  %v92 = vld [vmem:[%s2 + $0x60] sm:$0xf]
  %v93 = vld [vmem:[%s2 + $0x64] sm:$0xf]
  %v94 = vld [vmem:[%s2 + $0x68] sm:$0xf]
  %v95 = vld [vmem:[%s2 + $0x6c] sm:$0xf]
  %v96 = vld [vmem:[%s2 + $0x70] sm:$0xf]
  %v97 = vld [vmem:[%s2 + $0x74] sm:$0xf]
  %v98 = vld [vmem:[%s2 + $0x78] sm:$0xf]
  %v99 = vld [vmem:[%s2 + $0x7c] sm:$0xf]
  %v100 = vld [vmem:[%s2 + $0x80] sm:$0xf]
  %v101 = vld [vmem:[%s2 + $0x84] sm:$0xf]
  %v102 = vld [vmem:[%s2 + $0x88] sm:$0xf]
  %v103 = vld [vmem:[%s2 + $0x8c] sm:$0xf]
  %v104 = vld [vmem:[%s2 + $0x90] sm:$0xf]
  %v105 = vld [vmem:[%s2 + $0x94] sm:$0xf]
  %v106 = vld [vmem:[%s2 + $0x98] sm:$0xf]
  %v107 = vld [vmem:[%s2 + $0x9c] sm:$0xf]
  %v108 = vld [vmem:[%s2 + $0xa0] sm:$0xf]
  %v109 = vld [vmem:[%s2 + $0xa4] sm:$0xf]
  %v110 = vld [vmem:[%s2 + $0xa8] sm:$0xf]
  %v111 = vld [vmem:[%s2 + $0xac] sm:$0xf]
  %v112 = vld [vmem:[%s2 + $0xb0] sm:$0xf]
  %v113 = vld [vmem:[%s2 + $0xb4] sm:$0xf]
  %v114 = vld [vmem:[%s2 + $0xb8] sm:$0xf]
  %v115 = vld [vmem:[%s2 + $0xbc] sm:$0xf]
  %vm120 = vcmask 1046528
  %v121 = vrot.slane %v64, 1
  %v122 = vrot.slane %v65, 1
  %v123 = vsel %vm120, %v121, %v122
  %v124 = vrot.slane %v66, 1
  %v125 = vrot.slane %v67, 1
  %v126 = vsel %vm120, %v124, %v125
  %v129 = vpack.c.bf16 %v66, %v64
  %v130 = vpack.c.bf16 %v126, %v123
  %vm131 = vcmask 1045504
  %v132 = vrot.slane %v64, 2
  %v133 = vrot.slane %v65, 2
  %v134 = vsel %vm131, %v132, %v133
  %v135 = vrot.slane %v66, 2
  %v136 = vrot.slane %v67, 2
  %v137 = vsel %vm131, %v135, %v136
  %v140 = vpack.c.bf16 %v137, %v134
  %v157 = vunpack.c.l.b16 %v100
  %v158 = vunpack.c.l.b16 %v101
  %v159 = vunpack.c.l.b16 %v102
  %v160 = vunpack.c.l.b16 %v103
  %v161 = vunpack.c.l.b16 %v104
  %v162 = vunpack.c.l.b16 %v105
  %v163 = vunpack.c.l.b16 %v106
  %v164 = vunpack.c.l.b16 %v107
  %v165 = vunpack.c.l.b16 %v108
  %v166 = vunpack.c.l.b16 %v109
  %v167 = vunpack.c.l.b16 %v110
  %v168 = vunpack.c.l.b16 %v111
  %v169 = vunpack.c.l.b16 %v112
  %v170 = vunpack.c.l.b16 %v113
  %v171 = vunpack.c.l.b16 %v114
  %v172 = vunpack.c.l.b16 %v115
  %v173 = vpack.c.b16 %v158, %v157
  %v174 = vpack.c.b16 %v160, %v159
  %v175 = vpack.c.b16 %v162, %v161
  %v176 = vpack.c.b16 %v164, %v163
  %v177 = vpack.c.b16 %v166, %v165
  %v178 = vpack.c.b16 %v168, %v167
  %v179 = vpack.c.b16 %v170, %v169
  %v180 = vpack.c.b16 %v172, %v171
  %189 = vmatprep.subr.bf16.mxu0 0
  %190 = vmatpush1.bf16.msra.mxu0 %v180
  %191 = vmatprep.subr.bf16.mxu0 0
  %192 = vmatpush1.bf16.msra.mxu0 %v179
  %193 = vmatprep.subr.bf16.mxu0 0
  %194 = vmatpush1.bf16.msra.mxu0 %v178
  %195 = vmatprep.subr.bf16.mxu0 0
  %196 = vmatpush1.bf16.msra.mxu0 %v177
  %197 = vmatprep.subr.bf16.mxu0 0
  %198 = vmatpush1.bf16.msra.mxu0 %v176
  %199 = vmatprep.subr.bf16.mxu0 0
  %200 = vmatpush1.bf16.msra.mxu0 %v175
  %201 = vmatprep.subr.bf16.mxu0 0
  %202 = vmatpush1.bf16.msra.mxu0 %v174
  %203 = vmatprep.subr.bf16.mxu0 0
  %204 = vmatpush1.bf16.msra.mxu0 %v173
  %205 = vmatprep.subr.bf16.mxu0 0
  %206 = vmatpush2.bf16.msra.mxu0 0
  %207 = vmatprep.subr.bf16.mxu0 0
  %208 = vmatpush2.bf16.msra.mxu0 0
  %209 = vmatprep.subr.bf16.mxu0 0
  %210 = vmatpush2.bf16.msra.mxu0 0
  %211 = vmatprep.subr.bf16.mxu0 0
  %212 = vmatpush2.bf16.msra.mxu0 0
  %213 = vmatprep.subr.bf16.mxu0 0
  %214 = vmatpush2.bf16.msra.mxu0 0
  %215 = vmatprep.subr.bf16.mxu0 0
  %216 = vmatpush2.bf16.msra.mxu0 0
  %217 = vmatprep.subr.bf16.mxu0 0
  %218 = vmatpush2.bf16.msra.mxu0 0
  %219 = vmatprep.subr.bf16.mxu0 0
  %220 = vmatpush2.bf16.msra.mxu0 0
  %221 = vmatprep.mubr.bf16.mxu0 0
  %222 = vmatmul.mubr.bf16.gmra.mxu0 %v140
  %v223 = vpop.f32.mrf.mxu0
  %v224 = vadd.f32 0.0, %v223
  %v225 = vpop.f32.mrf.mxu0
  %v226 = vpop.f32.mrf.mxu0
  %v227 = vadd.f32 0.0, %v226
  %v228 = vpop.f32.mrf.mxu0
  %229 = vdwg.mxu0
  %v262 = vunpack.c.l.b16 %v68
  %v263 = vunpack.c.l.b16 %v69
  %v264 = vunpack.c.l.b16 %v70
  %v265 = vunpack.c.l.b16 %v71
  %v266 = vunpack.c.l.b16 %v72
  %v267 = vunpack.c.l.b16 %v73
  %v268 = vunpack.c.l.b16 %v74
  %v269 = vunpack.c.l.b16 %v75
  %v270 = vunpack.c.l.b16 %v76
  %v271 = vunpack.c.l.b16 %v77
  %v272 = vunpack.c.l.b16 %v78
  %v273 = vunpack.c.l.b16 %v79
  %v274 = vunpack.c.l.b16 %v80
  %v275 = vunpack.c.l.b16 %v81
  %v276 = vunpack.c.l.b16 %v82
  %v277 = vunpack.c.l.b16 %v83
  %v278 = vunpack.c.l.b16 %v84
  %v279 = vunpack.c.l.b16 %v85
  %v280 = vunpack.c.l.b16 %v86
  %v281 = vunpack.c.l.b16 %v87
  %v282 = vunpack.c.l.b16 %v88
  %v283 = vunpack.c.l.b16 %v89
  %v284 = vunpack.c.l.b16 %v90
  %v285 = vunpack.c.l.b16 %v91
  %v286 = vunpack.c.l.b16 %v92
  %v287 = vunpack.c.l.b16 %v93
  %v288 = vunpack.c.l.b16 %v94
  %v289 = vunpack.c.l.b16 %v95
  %v290 = vunpack.c.l.b16 %v96
  %v291 = vunpack.c.l.b16 %v97
  %v292 = vunpack.c.l.b16 %v98
  %v293 = vunpack.c.l.b16 %v99
  %v294 = vpack.c.b16 %v263, %v262
  %v295 = vpack.c.b16 %v265, %v264
  %v296 = vpack.c.b16 %v267, %v266
  %v297 = vpack.c.b16 %v269, %v268
  %v298 = vpack.c.b16 %v271, %v270
  %v299 = vpack.c.b16 %v273, %v272
  %v300 = vpack.c.b16 %v275, %v274
  %v301 = vpack.c.b16 %v277, %v276
  %v302 = vpack.c.b16 %v279, %v278
  %v303 = vpack.c.b16 %v281, %v280
  %v304 = vpack.c.b16 %v283, %v282
  %v305 = vpack.c.b16 %v285, %v284
  %v306 = vpack.c.b16 %v287, %v286
  %v307 = vpack.c.b16 %v289, %v288
  %v308 = vpack.c.b16 %v291, %v290
  %v309 = vpack.c.b16 %v293, %v292
  %326 = vmatprep.subr.bf16.mxu0 0
  %327 = vmatpush1.bf16.msra.mxu0 %v301
  %328 = vmatprep.subr.bf16.mxu0 0
  %329 = vmatpush1.bf16.msra.mxu0 %v300
  %330 = vmatprep.subr.bf16.mxu0 0
  %331 = vmatpush1.bf16.msra.mxu0 %v299
  %332 = vmatprep.subr.bf16.mxu0 0
  %333 = vmatpush1.bf16.msra.mxu0 %v298
  %334 = vmatprep.subr.bf16.mxu0 0
  %335 = vmatpush1.bf16.msra.mxu0 %v297
  %336 = vmatprep.subr.bf16.mxu0 0
  %337 = vmatpush1.bf16.msra.mxu0 %v296
  %338 = vmatprep.subr.bf16.mxu0 0
  %339 = vmatpush1.bf16.msra.mxu0 %v295
  %340 = vmatprep.subr.bf16.mxu0 0
  %341 = vmatpush1.bf16.msra.mxu0 %v294
  %342 = vmatprep.subr.bf16.mxu0 0
  %343 = vmatpush2.bf16.msra.mxu0 %v309
  %344 = vmatprep.subr.bf16.mxu0 0
  %345 = vmatpush2.bf16.msra.mxu0 %v308
  %346 = vmatprep.subr.bf16.mxu0 0
  %347 = vmatpush2.bf16.msra.mxu0 %v307
  %348 = vmatprep.subr.bf16.mxu0 0
  %349 = vmatpush2.bf16.msra.mxu0 %v306
  %350 = vmatprep.subr.bf16.mxu0 0
  %351 = vmatpush2.bf16.msra.mxu0 %v305
  %352 = vmatprep.subr.bf16.mxu0 0
  %353 = vmatpush2.bf16.msra.mxu0 %v304
  %354 = vmatprep.subr.bf16.mxu0 0
  %355 = vmatpush2.bf16.msra.mxu0 %v303
  %356 = vmatprep.subr.bf16.mxu0 0
  %357 = vmatpush2.bf16.msra.mxu0 %v302
  %358 = vmatprep.mubr.bf16.mxu0 %v130
  %359 = vmatmul.mubr.bf16.gmra.mxu0 %v129
  %v360 = vpop.f32.mrf.mxu0
  %v361 = vadd.f32 %v224, %v360
  %v362 = vpop.f32.mrf.mxu0
  %v363 = vpop.f32.mrf.mxu0
  %v364 = vadd.f32 %v227, %v363
  %v365 = vpop.f32.mrf.mxu0
  %366 = vdwg.mxu0
  %v367 = vld [vmem:[%s4] sm:$0x1]
  %v369 = vlaneseq
  %v370 = vshrl.u32 %v369, 7
  %v371 = vsub.s32 0, %v370
  %v372 = vrot.slane %v367, %v371
  %v374 = vmul.f32 %v361, %v372
  %v375 = vmul.f32 %v364, %v372
  %v376 = vld [vmem:[%s5] sm:$0x1]
  %v378 = vlaneseq
  %v379 = vshrl.u32 %v378, 7
  %v380 = vsub.s32 0, %v379
  %v381 = vrot.slane %v376, %v380
  %v383 = vadd.f32 %v374, %v381
  %v384 = vadd.f32 %v375, %v381
  %v385 = vmax.f32 %v383, 0.0
  %v386 = vmax.f32 %v384, 0.0
  %v387 = vld [vmem:[%s0] sm:$0xff]
  %v388 = vld [vmem:[%s0 + $0x8] sm:$0xff]
  %390 = vset.pattern.permute.xlu0 0
  %391 = vperm.xlu0 %390, %v387
  %v392 = vpop.permute.xlu0 %391
  %395 = vset.pattern.permute.xlu0 0
  %396 = vperm.xlu0 %395, %v388
  %v397 = vpop.permute.xlu0 %396
  %v399 = vmul.f32 %v385, %v392
  %v400 = vmul.f32 %v386, %v397
  %401 = vst [vmem:[#allocation3 + $0x1] sm:$0xff] %v399
  %402 = vst [vmem:[#allocation3 + $0x11] sm:$0xff] %v400
  %v403 = vld [vmem:[#allocation3] sm:$0xff]
  %v404 = vld [vmem:[#allocation3 + $0x8] sm:$0x3]
  %v405 = vld [vmem:[#allocation3 + $0x10] sm:$0xff]
  %v406 = vld [vmem:[#allocation3 + $0x18] sm:$0x3]
  %v407 = vld [vmem:[%s3] sm:$0xf]
  %v408 = vld [vmem:[%s3 + $0x4] sm:$0xf]
  %v409 = vld [vmem:[%s3 + $0x8] sm:$0xf]
  %v410 = vld [vmem:[%s3 + $0xc] sm:$0xf]
  %v411 = vld [vmem:[%s3 + $0x10] sm:$0xf]
  %v412 = vld [vmem:[%s3 + $0x14] sm:$0xf]
  %v413 = vld [vmem:[%s3 + $0x18] sm:$0xf]
  %v414 = vld [vmem:[%s3 + $0x1c] sm:$0xf]
  %v415 = vld [vmem:[%s3 + $0x20] sm:$0xf]
  %v416 = vld [vmem:[%s3 + $0x24] sm:$0xf]
  %v417 = vld [vmem:[%s3 + $0x28] sm:$0xf]
  %v418 = vld [vmem:[%s3 + $0x2c] sm:$0xf]
  %v419 = vld [vmem:[%s3 + $0x30] sm:$0xf]
  %v420 = vld [vmem:[%s3 + $0x34] sm:$0xf]
  %v421 = vld [vmem:[%s3 + $0x38] sm:$0xf]
  %v422 = vld [vmem:[%s3 + $0x3c] sm:$0xf]
  %v423 = vld [vmem:[%s3 + $0x40] sm:$0xf]
  %v424 = vld [vmem:[%s3 + $0x44] sm:$0xf]
  %v425 = vld [vmem:[%s3 + $0x48] sm:$0xf]
  %v426 = vld [vmem:[%s3 + $0x4c] sm:$0xf]
  %v427 = vld [vmem:[%s3 + $0x50] sm:$0xf]
  %v428 = vld [vmem:[%s3 + $0x54] sm:$0xf]
  %v429 = vld [vmem:[%s3 + $0x58] sm:$0xf]
  %v430 = vld [vmem:[%s3 + $0x5c] sm:$0xf]
  %v431 = vld [vmem:[%s3 + $0x60] sm:$0xf]
  %v432 = vld [vmem:[%s3 + $0x64] sm:$0xf]
  %v433 = vld [vmem:[%s3 + $0x68] sm:$0xf]
  %v434 = vld [vmem:[%s3 + $0x6c] sm:$0xf]
  %v435 = vld [vmem:[%s3 + $0x70] sm:$0xf]
  %v436 = vld [vmem:[%s3 + $0x74] sm:$0xf]
  %v437 = vld [vmem:[%s3 + $0x78] sm:$0xf]
  %v438 = vld [vmem:[%s3 + $0x7c] sm:$0xf]
  %v439 = vld [vmem:[%s3 + $0x80] sm:$0xf]
  %v440 = vld [vmem:[%s3 + $0x84] sm:$0xf]
  %v441 = vld [vmem:[%s3 + $0x88] sm:$0xf]
  %v442 = vld [vmem:[%s3 + $0x8c] sm:$0xf]
  %v443 = vld [vmem:[%s3 + $0x90] sm:$0xf]
  %v444 = vld [vmem:[%s3 + $0x94] sm:$0xf]
  %v445 = vld [vmem:[%s3 + $0x98] sm:$0xf]
  %v446 = vld [vmem:[%s3 + $0x9c] sm:$0xf]
  %v447 = vld [vmem:[%s3 + $0xa0] sm:$0xf]
  %v448 = vld [vmem:[%s3 + $0xa4] sm:$0xf]
  %v449 = vld [vmem:[%s3 + $0xa8] sm:$0xf]
  %v450 = vld [vmem:[%s3 + $0xac] sm:$0xf]
  %v451 = vld [vmem:[%s3 + $0xb0] sm:$0xf]
  %v452 = vld [vmem:[%s3 + $0xb4] sm:$0xf]
  %v453 = vld [vmem:[%s3 + $0xb8] sm:$0xf]
  %v454 = vld [vmem:[%s3 + $0xbc] sm:$0xf]
  %v459 = vrot.slane %v403, 1
  %v460 = vrot.slane %v404, 1
  %v461 = vsel %vm120, %v459, %v460
  %v462 = vrot.slane %v405, 1
  %v463 = vrot.slane %v406, 1
  %v464 = vsel %vm120, %v462, %v463
  %v467 = vpack.c.bf16 %v405, %v403
  %v468 = vpack.c.bf16 %v464, %v461
  %v469 = vrot.slane %v403, 2
  %v470 = vrot.slane %v404, 2
  %v471 = vsel %vm131, %v469, %v470
  %v472 = vrot.slane %v405, 2
  %v473 = vrot.slane %v406, 2
  %v474 = vsel %vm131, %v472, %v473
  %v477 = vpack.c.bf16 %v474, %v471
  %v494 = vunpack.c.l.b16 %v439
  %v495 = vunpack.c.l.b16 %v440
  %v496 = vunpack.c.l.b16 %v441
  %v497 = vunpack.c.l.b16 %v442
  %v498 = vunpack.c.l.b16 %v443
  %v499 = vunpack.c.l.b16 %v444
  %v500 = vunpack.c.l.b16 %v445
  %v501 = vunpack.c.l.b16 %v446
  %v502 = vunpack.c.l.b16 %v447
  %v503 = vunpack.c.l.b16 %v448
  %v504 = vunpack.c.l.b16 %v449
  %v505 = vunpack.c.l.b16 %v450
  %v506 = vunpack.c.l.b16 %v451
  %v507 = vunpack.c.l.b16 %v452
  %v508 = vunpack.c.l.b16 %v453
  %v509 = vunpack.c.l.b16 %v454
  %v510 = vpack.c.b16 %v495, %v494
  %v511 = vpack.c.b16 %v497, %v496
  %v512 = vpack.c.b16 %v499, %v498
  %v513 = vpack.c.b16 %v501, %v500
  %v514 = vpack.c.b16 %v503, %v502
  %v515 = vpack.c.b16 %v505, %v504
  %v516 = vpack.c.b16 %v507, %v506
  %v517 = vpack.c.b16 %v509, %v508
  %526 = vmatprep.subr.bf16.mxu0 0
  %527 = vmatpush1.bf16.msra.mxu0 %v517
  %528 = vmatprep.subr.bf16.mxu0 0
  %529 = vmatpush1.bf16.msra.mxu0 %v516
  %530 = vmatprep.subr.bf16.mxu0 0
  %531 = vmatpush1.bf16.msra.mxu0 %v515
  %532 = vmatprep.subr.bf16.mxu0 0
  %533 = vmatpush1.bf16.msra.mxu0 %v514
  %534 = vmatprep.subr.bf16.mxu0 0
  %535 = vmatpush1.bf16.msra.mxu0 %v513
  %536 = vmatprep.subr.bf16.mxu0 0
  %537 = vmatpush1.bf16.msra.mxu0 %v512
  %538 = vmatprep.subr.bf16.mxu0 0
  %539 = vmatpush1.bf16.msra.mxu0 %v511
  %540 = vmatprep.subr.bf16.mxu0 0
  %541 = vmatpush1.bf16.msra.mxu0 %v510
  %542 = vmatprep.subr.bf16.mxu0 0
  %543 = vmatpush2.bf16.msra.mxu0 0
  %544 = vmatprep.subr.bf16.mxu0 0
  %545 = vmatpush2.bf16.msra.mxu0 0
  %546 = vmatprep.subr.bf16.mxu0 0
  %547 = vmatpush2.bf16.msra.mxu0 0
  %548 = vmatprep.subr.bf16.mxu0 0
  %549 = vmatpush2.bf16.msra.mxu0 0
  %550 = vmatprep.subr.bf16.mxu0 0
  %551 = vmatpush2.bf16.msra.mxu0 0
  %552 = vmatprep.subr.bf16.mxu0 0
  %553 = vmatpush2.bf16.msra.mxu0 0
  %554 = vmatprep.subr.bf16.mxu0 0
  %555 = vmatpush2.bf16.msra.mxu0 0
  %556 = vmatprep.subr.bf16.mxu0 0
  %557 = vmatpush2.bf16.msra.mxu0 0
  %558 = vmatprep.mubr.bf16.mxu0 0
  %559 = vmatmul.mubr.bf16.gmra.mxu0 %v477
  %v560 = vpop.f32.mrf.mxu0
  %v561 = vadd.f32 0.0, %v560
  %v562 = vpop.f32.mrf.mxu0
  %v563 = vpop.f32.mrf.mxu0
  %v564 = vadd.f32 0.0, %v563
  %v565 = vpop.f32.mrf.mxu0
  %566 = vdwg.mxu0
  %v599 = vunpack.c.l.b16 %v407
  %v600 = vunpack.c.l.b16 %v408
  %v601 = vunpack.c.l.b16 %v409
  %v602 = vunpack.c.l.b16 %v410
  %v603 = vunpack.c.l.b16 %v411
  %v604 = vunpack.c.l.b16 %v412
  %v605 = vunpack.c.l.b16 %v413
  %v606 = vunpack.c.l.b16 %v414
  %v607 = vunpack.c.l.b16 %v415
  %v608 = vunpack.c.l.b16 %v416
  %v609 = vunpack.c.l.b16 %v417
  %v610 = vunpack.c.l.b16 %v418
  %v611 = vunpack.c.l.b16 %v419
  %v612 = vunpack.c.l.b16 %v420
  %v613 = vunpack.c.l.b16 %v421
  %v614 = vunpack.c.l.b16 %v422
  %v615 = vunpack.c.l.b16 %v423
  %v616 = vunpack.c.l.b16 %v424
  %v617 = vunpack.c.l.b16 %v425
  %v618 = vunpack.c.l.b16 %v426
  %v619 = vunpack.c.l.b16 %v427
  %v620 = vunpack.c.l.b16 %v428
  %v621 = vunpack.c.l.b16 %v429
  %v622 = vunpack.c.l.b16 %v430
  %v623 = vunpack.c.l.b16 %v431
  %v624 = vunpack.c.l.b16 %v432
  %v625 = vunpack.c.l.b16 %v433
  %v626 = vunpack.c.l.b16 %v434
  %v627 = vunpack.c.l.b16 %v435
  %v628 = vunpack.c.l.b16 %v436
  %v629 = vunpack.c.l.b16 %v437
  %v630 = vunpack.c.l.b16 %v438
  %v631 = vpack.c.b16 %v600, %v599
  %v632 = vpack.c.b16 %v602, %v601
  %v633 = vpack.c.b16 %v604, %v603
  %v634 = vpack.c.b16 %v606, %v605
  %v635 = vpack.c.b16 %v608, %v607
  %v636 = vpack.c.b16 %v610, %v609
  %v637 = vpack.c.b16 %v612, %v611
  %v638 = vpack.c.b16 %v614, %v613
  %v639 = vpack.c.b16 %v616, %v615
  %v640 = vpack.c.b16 %v618, %v617
  %v641 = vpack.c.b16 %v620, %v619
  %v642 = vpack.c.b16 %v622, %v621
  %v643 = vpack.c.b16 %v624, %v623
  %v644 = vpack.c.b16 %v626, %v625
  %v645 = vpack.c.b16 %v628, %v627
  %v646 = vpack.c.b16 %v630, %v629
  %663 = vmatprep.subr.bf16.mxu0 0
  %664 = vmatpush1.bf16.msra.mxu0 %v638
  %665 = vmatprep.subr.bf16.mxu0 0
  %666 = vmatpush1.bf16.msra.mxu0 %v637
  %667 = vmatprep.subr.bf16.mxu0 0
  %668 = vmatpush1.bf16.msra.mxu0 %v636
  %669 = vmatprep.subr.bf16.mxu0 0
  %670 = vmatpush1.bf16.msra.mxu0 %v635
  %671 = vmatprep.subr.bf16.mxu0 0
  %672 = vmatpush1.bf16.msra.mxu0 %v634
  %673 = vmatprep.subr.bf16.mxu0 0
  %674 = vmatpush1.bf16.msra.mxu0 %v633
  %675 = vmatprep.subr.bf16.mxu0 0
  %676 = vmatpush1.bf16.msra.mxu0 %v632
  %677 = vmatprep.subr.bf16.mxu0 0
  %678 = vmatpush1.bf16.msra.mxu0 %v631
  %679 = vmatprep.subr.bf16.mxu0 0
  %680 = vmatpush2.bf16.msra.mxu0 %v646
  %681 = vmatprep.subr.bf16.mxu0 0
  %682 = vmatpush2.bf16.msra.mxu0 %v645
  %683 = vmatprep.subr.bf16.mxu0 0
  %684 = vmatpush2.bf16.msra.mxu0 %v644
  %685 = vmatprep.subr.bf16.mxu0 0
  %686 = vmatpush2.bf16.msra.mxu0 %v643
  %687 = vmatprep.subr.bf16.mxu0 0
  %688 = vmatpush2.bf16.msra.mxu0 %v642
  %689 = vmatprep.subr.bf16.mxu0 0
  %690 = vmatpush2.bf16.msra.mxu0 %v641
  %691 = vmatprep.subr.bf16.mxu0 0
  %692 = vmatpush2.bf16.msra.mxu0 %v640
  %693 = vmatprep.subr.bf16.mxu0 0
  %694 = vmatpush2.bf16.msra.mxu0 %v639
  %695 = vmatprep.mubr.bf16.mxu0 %v468
  %696 = vmatmul.mubr.bf16.gmra.mxu0 %v467
  %v697 = vpop.f32.mrf.mxu0
  %v698 = vadd.f32 %v561, %v697
  %v699 = vpop.f32.mrf.mxu0
  %v700 = vpop.f32.mrf.mxu0
  %v701 = vadd.f32 %v564, %v700
  %v702 = vpop.f32.mrf.mxu0
  %703 = vdwg.mxu0
  %s704 = scalar_lea.vmem %s4, 1
  %v705 = vld [vmem:[%s704] sm:$0x1]
  %v707 = vlaneseq
  %v708 = vshrl.u32 %v707, 7
  %v709 = vsub.s32 0, %v708
  %v710 = vrot.slane %v705, %v709
  %v712 = vmul.f32 %v698, %v710
  %v713 = vmul.f32 %v701, %v710
  %s714 = scalar_lea.vmem %s5, 1
  %v715 = vld [vmem:[%s714] sm:$0x1]
  %v717 = vlaneseq
  %v718 = vshrl.u32 %v717, 7
  %v719 = vsub.s32 0, %v718
  %v720 = vrot.slane %v715, %v719
  %v722 = vadd.f32 %v712, %v720
  %v723 = vadd.f32 %v713, %v720
  %v724 = vld [vmem:[%s6] sm:$0xf]
  %v725 = vld [vmem:[%s6 + $0x4] sm:$0xf]
  %v726 = vunpack.c.l.bf16 %v724
  %v727 = vunpack.c.l.bf16 %v725
  %s728 = scalar_lea.vmem %s0, 16
  %v729 = vld [vmem:[%s728] sm:$0xff]
  %v730 = vld [vmem:[%s728 + $0x8] sm:$0xff]
  %732 = vset.pattern.permute.xlu0 0
  %733 = vperm.xlu0 %732, %v729
  %v734 = vpop.permute.xlu0 %733
  %737 = vset.pattern.permute.xlu0 0
  %738 = vperm.xlu0 %737, %v730
  %v739 = vpop.permute.xlu0 %738
  %v741 = vmul.f32 %v726, %v734
  %v742 = vmul.f32 %v727, %v739
  %v743 = vpack.c.bf16 %v742, %v741
  %v744 = vld [vmem:[%s7] sm:$0xf]
  %v745 = vld [vmem:[%s7 + $0x4] sm:$0xf]
  %v746 = vunpack.c.l.bf16 %v744
  %v747 = vunpack.c.l.bf16 %v745
  %s748 = scalar_lea.vmem %s0, 32
  %v749 = vld [vmem:[%s748] sm:$0xff]
  %v750 = vld [vmem:[%s748 + $0x8] sm:$0xff]
  %752 = vset.pattern.permute.xlu0 0
  %753 = vperm.xlu0 %752, %v749
  %v754 = vpop.permute.xlu0 %753
  %757 = vset.pattern.permute.xlu0 0
  %758 = vperm.xlu0 %757, %v750
  %v759 = vpop.permute.xlu0 %758
  %v761 = vmul.f32 %v746, %v754
  %v762 = vmul.f32 %v747, %v759
  %v763 = vpack.c.bf16 %v762, %v761
  %v764 = vld [vmem:[#allocation2 + $0x1] sm:$0xff]
  %v765 = vld [vmem:[#allocation2 + $0x11] sm:$0xff]
  %v766 = vpack.c.bf16 %v765, %v764
  %v767 = vld [vmem:[%s8] sm:$0xf]
  %v768 = vld [vmem:[%s8 + $0x4] sm:$0xf]
  %v769 = vld [vmem:[%s8 + $0x8] sm:$0xf]
  %v770 = vld [vmem:[%s8 + $0xc] sm:$0xf]
  %v771 = vld [vmem:[%s8 + $0x10] sm:$0xf]
  %v772 = vld [vmem:[%s8 + $0x14] sm:$0xf]
  %v773 = vld [vmem:[%s8 + $0x18] sm:$0xf]
  %v774 = vld [vmem:[%s8 + $0x1c] sm:$0xf]
  %v775 = vld [vmem:[%s8 + $0x20] sm:$0xf]
  %v776 = vld [vmem:[%s8 + $0x24] sm:$0xf]
  %v777 = vld [vmem:[%s8 + $0x28] sm:$0xf]
  %v778 = vld [vmem:[%s8 + $0x2c] sm:$0xf]
  %v779 = vld [vmem:[%s8 + $0x30] sm:$0xf]
  %v780 = vld [vmem:[%s8 + $0x34] sm:$0xf]
  %v781 = vld [vmem:[%s8 + $0x38] sm:$0xf]
  %v782 = vld [vmem:[%s8 + $0x3c] sm:$0xf]
  %v783 = vld [vmem:[%s8 + $0x40] sm:$0xf]
  %v784 = vld [vmem:[%s8 + $0x44] sm:$0xf]
  %v785 = vld [vmem:[%s8 + $0x48] sm:$0xf]
  %v786 = vld [vmem:[%s8 + $0x4c] sm:$0xf]
  %v787 = vld [vmem:[%s8 + $0x50] sm:$0xf]
  %v788 = vld [vmem:[%s8 + $0x54] sm:$0xf]
  %v789 = vld [vmem:[%s8 + $0x58] sm:$0xf]
  %v790 = vld [vmem:[%s8 + $0x5c] sm:$0xf]
  %v791 = vld [vmem:[%s8 + $0x60] sm:$0xf]
  %v792 = vld [vmem:[%s8 + $0x64] sm:$0xf]
  %v793 = vld [vmem:[%s8 + $0x68] sm:$0xf]
  %v794 = vld [vmem:[%s8 + $0x6c] sm:$0xf]
  %v795 = vld [vmem:[%s8 + $0x70] sm:$0xf]
  %v796 = vld [vmem:[%s8 + $0x74] sm:$0xf]
  %v797 = vld [vmem:[%s8 + $0x78] sm:$0xf]
  %v798 = vld [vmem:[%s8 + $0x7c] sm:$0xf]
  %v799 = vld [vmem:[%s8 + $0x80] sm:$0xf]
  %v800 = vld [vmem:[%s8 + $0x84] sm:$0xf]
  %v801 = vld [vmem:[%s8 + $0x88] sm:$0xf]
  %v802 = vld [vmem:[%s8 + $0x8c] sm:$0xf]
  %v803 = vld [vmem:[%s8 + $0x90] sm:$0xf]
  %v804 = vld [vmem:[%s8 + $0x94] sm:$0xf]
  %v805 = vld [vmem:[%s8 + $0x98] sm:$0xf]
  %v806 = vld [vmem:[%s8 + $0x9c] sm:$0xf]
  %v807 = vld [vmem:[%s8 + $0xa0] sm:$0xf]
  %v808 = vld [vmem:[%s8 + $0xa4] sm:$0xf]
  %v809 = vld [vmem:[%s8 + $0xa8] sm:$0xf]
  %v810 = vld [vmem:[%s8 + $0xac] sm:$0xf]
  %v811 = vld [vmem:[%s8 + $0xb0] sm:$0xf]
  %v812 = vld [vmem:[%s8 + $0xb4] sm:$0xf]
  %v813 = vld [vmem:[%s8 + $0xb8] sm:$0xf]
  %v814 = vld [vmem:[%s8 + $0xbc] sm:$0xf]
  %v815 = vld [vmem:[%s9] sm:$0x1]
  %v817 = vlaneseq
  %v818 = vshrl.u32 %v817, 7
  %v819 = vsub.s32 0, %v818
  %v820 = vrot.slane %v815, %v819
  %v870 = vunpack.c.l.b16 %v767
  %v871 = vunpack.c.l.b16 %v768
  %v872 = vunpack.c.l.b16 %v769
  %v873 = vunpack.c.l.b16 %v770
  %v874 = vunpack.c.l.b16 %v771
  %v875 = vunpack.c.l.b16 %v772
  %v876 = vunpack.c.l.b16 %v773
  %v877 = vunpack.c.l.b16 %v774
  %v878 = vunpack.c.l.b16 %v775
  %v879 = vunpack.c.l.b16 %v776
  %v880 = vunpack.c.l.b16 %v777
  %v881 = vunpack.c.l.b16 %v778
  %v882 = vunpack.c.l.b16 %v779
  %v883 = vunpack.c.l.b16 %v780
  %v884 = vunpack.c.l.b16 %v781
  %v885 = vunpack.c.l.b16 %v782
  %v886 = vunpack.c.l.b16 %v783
  %v887 = vunpack.c.l.b16 %v784
  %v888 = vunpack.c.l.b16 %v785
  %v889 = vunpack.c.l.b16 %v786
  %v890 = vunpack.c.l.b16 %v787
  %v891 = vunpack.c.l.b16 %v788
  %v892 = vunpack.c.l.b16 %v789
  %v893 = vunpack.c.l.b16 %v790
  %v894 = vunpack.c.l.b16 %v791
  %v895 = vunpack.c.l.b16 %v792
  %v896 = vunpack.c.l.b16 %v793
  %v897 = vunpack.c.l.b16 %v794
  %v898 = vunpack.c.l.b16 %v795
  %v899 = vunpack.c.l.b16 %v796
  %v900 = vunpack.c.l.b16 %v797
  %v901 = vunpack.c.l.b16 %v798
  %v902 = vunpack.c.l.b16 %v799
  %v903 = vunpack.c.l.b16 %v800
  %v904 = vunpack.c.l.b16 %v801
  %v905 = vunpack.c.l.b16 %v802
  %v906 = vunpack.c.l.b16 %v803
  %v907 = vunpack.c.l.b16 %v804
  %v908 = vunpack.c.l.b16 %v805
  %v909 = vunpack.c.l.b16 %v806
  %v910 = vunpack.c.l.b16 %v807
  %v911 = vunpack.c.l.b16 %v808
  %v912 = vunpack.c.l.b16 %v809
  %v913 = vunpack.c.l.b16 %v810
  %v914 = vunpack.c.l.b16 %v811
  %v915 = vunpack.c.l.b16 %v812
  %v916 = vunpack.c.l.b16 %v813
  %v917 = vunpack.c.l.b16 %v814
  %v918 = vpack.c.b16 %v871, %v870
  %v919 = vpack.c.b16 %v873, %v872
  %v920 = vpack.c.b16 %v875, %v874
  %v921 = vpack.c.b16 %v877, %v876
  %v922 = vpack.c.b16 %v879, %v878
  %v923 = vpack.c.b16 %v881, %v880
  %v924 = vpack.c.b16 %v883, %v882
  %v925 = vpack.c.b16 %v885, %v884
  %v926 = vpack.c.b16 %v887, %v886
  %v927 = vpack.c.b16 %v889, %v888
  %v928 = vpack.c.b16 %v891, %v890
  %v929 = vpack.c.b16 %v893, %v892
  %v930 = vpack.c.b16 %v895, %v894
  %v931 = vpack.c.b16 %v897, %v896
  %v932 = vpack.c.b16 %v899, %v898
  %v933 = vpack.c.b16 %v901, %v900
  %v934 = vpack.c.b16 %v903, %v902
  %v935 = vpack.c.b16 %v905, %v904
  %v936 = vpack.c.b16 %v907, %v906
  %v937 = vpack.c.b16 %v909, %v908
  %v938 = vpack.c.b16 %v911, %v910
  %v939 = vpack.c.b16 %v913, %v912
  %v940 = vpack.c.b16 %v915, %v914
  %v941 = vpack.c.b16 %v917, %v916
  %966 = vmatprep.subr.bf16.mxu0 0
  %967 = vmatpush1.bf16.msra.mxu0 %v925
  %968 = vmatprep.subr.bf16.mxu0 0
  %969 = vmatpush1.bf16.msra.mxu0 %v924
  %970 = vmatprep.subr.bf16.mxu0 0
  %971 = vmatpush1.bf16.msra.mxu0 %v923
  %972 = vmatprep.subr.bf16.mxu0 0
  %973 = vmatpush1.bf16.msra.mxu0 %v922
  %974 = vmatprep.subr.bf16.mxu0 0
  %975 = vmatpush1.bf16.msra.mxu0 %v921
  %976 = vmatprep.subr.bf16.mxu0 0
  %977 = vmatpush1.bf16.msra.mxu0 %v920
  %978 = vmatprep.subr.bf16.mxu0 0
  %979 = vmatpush1.bf16.msra.mxu0 %v919
  %980 = vmatprep.subr.bf16.mxu0 0
  %981 = vmatpush1.bf16.msra.mxu0 %v918
  %982 = vmatprep.subr.bf16.mxu0 0
  %983 = vmatpush2.bf16.msra.mxu0 %v933
  %984 = vmatprep.subr.bf16.mxu0 0
  %985 = vmatpush2.bf16.msra.mxu0 %v932
  %986 = vmatprep.subr.bf16.mxu0 0
  %987 = vmatpush2.bf16.msra.mxu0 %v931
  %988 = vmatprep.subr.bf16.mxu0 0
  %989 = vmatpush2.bf16.msra.mxu0 %v930
  %990 = vmatprep.subr.bf16.mxu0 0
  %991 = vmatpush2.bf16.msra.mxu0 %v929
  %992 = vmatprep.subr.bf16.mxu0 0
  %993 = vmatpush2.bf16.msra.mxu0 %v928
  %994 = vmatprep.subr.bf16.mxu0 0
  %995 = vmatpush2.bf16.msra.mxu0 %v927
  %996 = vmatprep.subr.bf16.mxu0 0
  %997 = vmatpush2.bf16.msra.mxu0 %v926
  %998 = vmatprep.mubr.bf16.mxu0 %v763
  %999 = vmatmul.mubr.bf16.gmra.mxu0 %v743
  %v1000 = vpop.f32.mrf.mxu0
  %v1001 = vadd.f32 %v820, %v1000
  %v1002 = vpop.f32.mrf.mxu0
  %v1003 = vpop.f32.mrf.mxu0
  %v1004 = vadd.f32 %v820, %v1003
  %v1005 = vpop.f32.mrf.mxu0
  %1006 = vdwg.mxu0
  %1007 = vmatprep.subr.bf16.mxu0 0
  %1008 = vmatpush1.bf16.msra.mxu0 %v941
  %1009 = vmatprep.subr.bf16.mxu0 0
  %1010 = vmatpush1.bf16.msra.mxu0 %v940
  %1011 = vmatprep.subr.bf16.mxu0 0
  %1012 = vmatpush1.bf16.msra.mxu0 %v939
  %1013 = vmatprep.subr.bf16.mxu0 0
  %1014 = vmatpush1.bf16.msra.mxu0 %v938
  %1015 = vmatprep.subr.bf16.mxu0 0
  %1016 = vmatpush1.bf16.msra.mxu0 %v937
  %1017 = vmatprep.subr.bf16.mxu0 0
  %1018 = vmatpush1.bf16.msra.mxu0 %v936
  %1019 = vmatprep.subr.bf16.mxu0 0
  %1020 = vmatpush1.bf16.msra.mxu0 %v935
  %1021 = vmatprep.subr.bf16.mxu0 0
  %1022 = vmatpush1.bf16.msra.mxu0 %v934
  %1023 = vmatprep.subr.bf16.mxu0 0
  %1024 = vmatpush2.bf16.msra.mxu0 0
  %1025 = vmatprep.subr.bf16.mxu0 0
  %1026 = vmatpush2.bf16.msra.mxu0 0
  %1027 = vmatprep.subr.bf16.mxu0 0
  %1028 = vmatpush2.bf16.msra.mxu0 0
  %1029 = vmatprep.subr.bf16.mxu0 0
  %1030 = vmatpush2.bf16.msra.mxu0 0
  %1031 = vmatprep.subr.bf16.mxu0 0
  %1032 = vmatpush2.bf16.msra.mxu0 0
  %1033 = vmatprep.subr.bf16.mxu0 0
  %1034 = vmatpush2.bf16.msra.mxu0 0
  %1035 = vmatprep.subr.bf16.mxu0 0
  %1036 = vmatpush2.bf16.msra.mxu0 0
  %1037 = vmatprep.subr.bf16.mxu0 0
  %1038 = vmatpush2.bf16.msra.mxu0 0
  %1039 = vmatprep.mubr.bf16.mxu0 0
  %1040 = vmatmul.mubr.bf16.gmra.mxu0 %v766
  %v1041 = vpop.f32.mrf.mxu0
  %v1042 = vadd.f32 %v1001, %v1041
  %v1043 = vpop.f32.mrf.mxu0
  %v1044 = vpop.f32.mrf.mxu0
  %v1045 = vadd.f32 %v1004, %v1044
  %v1046 = vpop.f32.mrf.mxu0
  %1047 = vdwg.mxu0
  %v1048 = vadd.f32 %v722, %v1042
  %v1049 = vadd.f32 %v723, %v1045
  %v1050 = vmax.f32 %v1048, 0.0
  %v1051 = vmax.f32 %v1049, 0.0
  %v1052 = vpack.c.bf16 %v1050, %v1050
  %v1053 = vpack.c.bf16 %v1051, %v1051
  %1054 = vst [vmem:[%s10] sm:$0xf] %v1052
  %1055 = vst [vmem:[%s10 + $0x4] sm:$0xf] %v1053
  // Predicated region
  $region42: #{_lambda_.7} parent=0 // pred_check
    _
  $region43: #{_lambda_.7} parent=0 // pred_check_branch
    %1057 = sbr.rel (0) target = $region45
  $region44: #{_lambda_.7} parent=0 // pred_region
    _
  $region45: #{_lambda_.7} parent=0 // pred_fallthru
    _
  // Predicated region
  $region46: #{_lambda_.7} parent=0 // pred_check
    _
  $region47: #{_lambda_.7} parent=0 // pred_check_branch
    %1059 = sbr.rel (0) target = $region49
  $region48: #{_lambda_.7} parent=0 // pred_region
    _
  $region49: #{_lambda_.7} parent=0 // pred_fallthru
    _

</llo_original>
